<compile_context>
chip_gen: v7x
topology: tpu7x:2x2x1
jax: 0.10.0
libtpu: 0.0.40
codegen_flags: <defaults>
</compile_context>

<pallas_src>
import functools

import jax
import jax.numpy as jnp
from jax import lax
from jax.experimental import pallas as pl
from jax.experimental.pallas import tpu as pltpu

KSIZE = 4
STRIDE = 2
BN_EPS = 1e-5


# ------------------------------ Pallas kernels ------------------------------
def _convt_bn_relu_kernel(a_ref, w_ref, g_ref, b_ref, o_ref, *, eps, inv_count, cout):
    """Row-major fused ConvTranspose(parity-concat matmul) + BN(batch stats) + ReLU.

    a_ref : (M, 4*Cin)        bf16  im2col'ed input (shared by all parities)
    w_ref : (4*Cin, 4*Cout)   bf16  parity-concatenated weights, cols = (ph,pw,c)
    g/b   : (1, Cout)         f32   BN gamma / beta
    o_ref : (M, 4*Cout)       bf16  normalized activations, cols = (ph,pw,c)
    """
    y = jnp.dot(a_ref[...], w_ref[...], preferred_element_type=jnp.float32)
    # One-pass batch statistics over all 4 parity column-groups (count = 4*M).
    col_sum = jnp.sum(y, axis=0, keepdims=True)          # (1, 4C)
    col_sq = jnp.sum(y * y, axis=0, keepdims=True)       # (1, 4C)
    s = (col_sum[:, 0:cout] + col_sum[:, cout:2 * cout]
         + col_sum[:, 2 * cout:3 * cout] + col_sum[:, 3 * cout:4 * cout])
    sq = (col_sq[:, 0:cout] + col_sq[:, cout:2 * cout]
          + col_sq[:, 2 * cout:3 * cout] + col_sq[:, 3 * cout:4 * cout])
    mean = s * inv_count
    var = sq * inv_count - mean * mean                   # biased var (BN train mode)
    scale = g_ref[...] * lax.rsqrt(var + eps)            # (1, C)
    shift = b_ref[...] - mean * scale                    # (1, C)
    scale4 = jnp.concatenate([scale, scale, scale, scale], axis=1)   # (1, 4C)
    shift4 = jnp.concatenate([shift, shift, shift, shift], axis=1)
    o_ref[...] = jnp.maximum(y * scale4 + shift4, 0.0).astype(o_ref.dtype)


def convt_bn_relu(a, w_cat, gamma, beta, eps=BN_EPS):
    m = a.shape[0]
    c4 = w_cat.shape[1]
    kernel = functools.partial(_convt_bn_relu_kernel, eps=eps,
                               inv_count=1.0 / float(4 * m), cout=c4 // 4)
    return pl.pallas_call(
        kernel,
        out_shape=jax.ShapeDtypeStruct((m, c4), jnp.bfloat16),
    )(a, w_cat, gamma, beta)


def _convt_bn_relu_t_kernel(a_ref, w_ref, g_ref, b_ref, o_ref, *, eps, inv_count, cout):
    """Transposed variant (M on the lane axis) for small-Cout layers.

    a_ref : (4*Cin, M)        bf16  transposed im2col input
    w_ref : (4*Cout, 4*Cin)   bf16  rows = (ph,pw,c)
    g/b   : (Cout, 1)         f32
    o_ref : (4*Cout, M)       bf16  rows = (ph,pw,c), lane-dense in M
    """
    y = jnp.dot(w_ref[...], a_ref[...], preferred_element_type=jnp.float32)
    row_sum = jnp.sum(y, axis=1, keepdims=True)          # (4C, 1)
    row_sq = jnp.sum(y * y, axis=1, keepdims=True)       # (4C, 1)
    s = (row_sum[0:cout] + row_sum[cout:2 * cout]
         + row_sum[2 * cout:3 * cout] + row_sum[3 * cout:4 * cout])
    sq = (row_sq[0:cout] + row_sq[cout:2 * cout]
          + row_sq[2 * cout:3 * cout] + row_sq[3 * cout:4 * cout])
    mean = s * inv_count
    var = sq * inv_count - mean * mean
    scale = g_ref[...] * lax.rsqrt(var + eps)            # (C, 1)
    shift = b_ref[...] - mean * scale                    # (C, 1)
    scale4 = jnp.concatenate([scale, scale, scale, scale], axis=0)   # (4C, 1)
    shift4 = jnp.concatenate([shift, shift, shift, shift], axis=0)
    o_ref[...] = jnp.maximum(y * scale4 + shift4, 0.0).astype(o_ref.dtype)


def convt_bn_relu_t(a_t, w_catT, gamma, beta, eps=BN_EPS):
    m = a_t.shape[1]
    c4 = w_catT.shape[0]
    kernel = functools.partial(_convt_bn_relu_t_kernel, eps=eps,
                               inv_count=1.0 / float(4 * m), cout=c4 // 4)
    return pl.pallas_call(
        kernel,
        out_shape=jax.ShapeDtypeStruct((c4, m), jnp.bfloat16),
    )(a_t, w_catT, gamma, beta)


def _convt_tanh_t_kernel(a_ref, w_ref, b_ref, o_ref):
    """Final ConvTranspose + bias + tanh, transposed (M on lanes), single dot.

    a_ref : (4*Cin, M)         bf16
    w_ref : (4*Cout, 4*Cin)    bf16
    b_ref : (4*Cout, 1)        f32   conv bias replicated per parity row
    o_ref : (4*Cout, M)        f32
    """
    y = jnp.dot(w_ref[...], a_ref[...], preferred_element_type=jnp.float32)
    o_ref[...] = jnp.tanh(y + b_ref[...])


def convt_bias_tanh_t(a_t, w_catT, bias4):
    m = a_t.shape[1]
    c4 = w_catT.shape[0]
    return pl.pallas_call(
        _convt_tanh_t_kernel,
        out_shape=jax.ShapeDtypeStruct((c4, m), jnp.float32),
    )(a_t, w_catT, bias4)


# --------------------------- XLA glue (layout only) ---------------------------
def _im2col_nhwc(x):
    """x: (N, H, W, C) -> A: (N*(H+1)*(W+1), 4*C); feature order (dh, dw, c)."""
    n, h, w, c = x.shape
    xp = jnp.pad(x, ((0, 0), (1, 1), (1, 1), (0, 0)))
    cols = [xp[:, 1 - dh:1 - dh + h + 1, 1 - dw:1 - dw + w + 1, :]
            for dh in (0, 1) for dw in (0, 1)]
    s = jnp.stack(cols, axis=3)                      # (N, H+1, W+1, 4, C)
    return s.reshape(n * (h + 1) * (w + 1), 4 * c)


def _im2col_cmajor(x_cm):
    """x_cm: (C, N, H, W) -> A^T: (4*C, N*(H+1)*(W+1)); row order (dh, dw, c)."""
    c, n, h, w = x_cm.shape
    xp = jnp.pad(x_cm, ((0, 0), (0, 0), (1, 1), (1, 1)))
    cols = [xp[:, :, 1 - dh:1 - dh + h + 1, 1 - dw:1 - dw + w + 1]
            for dh in (0, 1) for dw in (0, 1)]
    s = jnp.stack(cols, axis=0)                      # (4, C, N, H+1, W+1)
    return s.reshape(4 * c, n * (h + 1) * (w + 1))


def _interleave_nhwc(y, n, hp1, wp1, c):
    """y: (M, 4C), rows (n,i,j), cols (ph,pw,c) -> (N, 2*hp1, 2*wp1, C)."""
    y = y.reshape(n, hp1, wp1, 2, 2, c)
    y = jnp.transpose(y, (0, 1, 3, 2, 4, 5))         # (n, i, ph, j, pw, c)
    return y.reshape(n, 2 * hp1, 2 * wp1, c)


def _interleave_cmajor_cols(y, n, hp1, wp1, c):
    """y: (M, 4C), rows (n,i,j), cols (ph,pw,c) -> channel-major (C, N, 2hp1, 2wp1)."""
    y = y.reshape(n, hp1, wp1, 2, 2, c)
    y = jnp.transpose(y, (5, 0, 1, 3, 2, 4))         # (c, n, i, ph, j, pw)
    return y.reshape(c, n, 2 * hp1, 2 * wp1)


def _interleave_cmajor_rows(y, n, hp1, wp1, c):
    """y: (4C, M), rows (ph,pw,c), cols (n,i,j) -> channel-major (C, N, 2hp1, 2wp1)."""
    y = y.reshape(2, 2, c, n, hp1, wp1)
    y = jnp.transpose(y, (2, 3, 4, 0, 5, 1))         # (c, n, i, ph, j, pw)
    return y.reshape(c, n, 2 * hp1, 2 * wp1)


def _parity_weight(w):
    """(Cin, Cout, 4, 4) torch ConvTranspose2d weight ->
       (4, 4*Cin, Cout): [p=(ph,pw), k=(dh,dw,ci), co] with kh=ph+2dh, kw=pw+2dw."""
    cin, cout = w.shape[0], w.shape[1]
    w6 = w.reshape(cin, cout, 2, 2, 2, 2)            # (ci, co, dh, ph, dw, pw)
    w6 = jnp.transpose(w6, (3, 5, 2, 4, 0, 1))       # (ph, pw, dh, dw, ci, co)
    return w6.reshape(4, 4 * cin, cout)


# ------------------------------ parameters ------------------------------
def init_params(key, z_dim=10, im_chan=1, hidden_dim=16, num_classes=10):
    chans = [z_dim + num_classes, hidden_dim * 8, hidden_dim * 4,
             hidden_dim * 2, hidden_dim, im_chan]
    params = []
    for li in range(5):
        cin, cout = chans[li], chans[li + 1]
        key, k1, k2 = jax.random.split(key, 3)
        layer = {
            "w": 0.02 * jax.random.normal(k1, (cin, cout, KSIZE, KSIZE), jnp.float32),
            "b": 0.01 * jax.random.normal(k2, (cout,), jnp.float32),
        }
        if li < 4:  # BatchNorm2d defaults: gamma=1, beta=0
            layer["gamma"] = jnp.ones((cout,), jnp.float32)
            layer["beta"] = jnp.zeros((cout,), jnp.float32)
        params.append(layer)
    return params


def prepare_params(params):
    """Convert torch-layout params into parity-concat / bf16 kernel layouts."""
    prepped = []
    n_layers = len(params)
    for li, p in enumerate(params):
        cin, cout = p["w"].shape[0], p["w"].shape[1]
        w4 = _parity_weight(p["w"])                              # (4, 4*Cin, Cout)
        if li < 2:
            # Row-major layers: single (4*Cin, 4*Cout) weight, cols = (ph,pw,c).
            w_cat = jnp.transpose(w4, (1, 0, 2)).reshape(4 * cin, 4 * cout)
            prepped.append({"w_cat": w_cat.astype(jnp.bfloat16),
                            "gamma": p["gamma"].reshape(1, cout).astype(jnp.float32),
                            "beta": p["beta"].reshape(1, cout).astype(jnp.float32)})
        elif li < n_layers - 1:
            # Transposed layers: (4*Cout, 4*Cin) weight, rows = (ph,pw,c).
            w_catT = jnp.transpose(w4, (0, 2, 1)).reshape(4 * cout, 4 * cin)
            prepped.append({"w_catT": w_catT.astype(jnp.bfloat16),
                            "gamma": p["gamma"].reshape(cout, 1).astype(jnp.float32),
                            "beta": p["beta"].reshape(cout, 1).astype(jnp.float32)})
        else:
            w_catT = jnp.transpose(w4, (0, 2, 1)).reshape(4 * cout, 4 * cin)
            b4 = jnp.tile(p["b"].reshape(cout, 1), (4, 1)).astype(jnp.float32)
            prepped.append({"w_catT": w_catT.astype(jnp.bfloat16), "b4": b4})
        # Note: conv bias of BN layers is dropped (cancelled by batch-stat mean).
    return prepped


# ------------------------------ forward ------------------------------
def starter_generator_forward(params, noise, labels, num_classes=10):
    onehot = jax.nn.one_hot(labels, num_classes, dtype=noise.dtype)
    x = jnp.concatenate([noise, onehot], axis=1)
    n = x.shape[0]
    x = x.reshape(n, 1, 1, -1).astype(jnp.bfloat16)          # NHWC, bf16 activations

    # Layers 0-1: row-major orientation (output lanes = 4*Cout = 512 / 256).
    xc = None
    for li in (0, 1):
        p = params[li]
        _, h, w, _ = x.shape
        a = _im2col_nhwc(x)                                  # (M, 4*Cin)
        y = convt_bn_relu(a, p["w_cat"], p["gamma"], p["beta"])   # (M, 4*Cout)
        cout = p["gamma"].shape[-1]
        if li == 0:
            x = _interleave_nhwc(y, n, h + 1, w + 1, cout)
        else:
            # Emit channel-major so the transposed layers build A^T with no
            # extra XLA relayout.
            xc = _interleave_cmajor_cols(y, n, h + 1, w + 1, cout)

    # Layers 2-3: transposed / channel-major orientation (output lanes = M).
    for li in (2, 3):
        p = params[li]
        _, _, h, w = xc.shape
        a_t = _im2col_cmajor(xc)                             # (4*Cin, M)
        y = convt_bn_relu_t(a_t, p["w_catT"], p["gamma"], p["beta"])   # (4*Cout, M)
        cout = p["gamma"].shape[0]
        xc = _interleave_cmajor_rows(y, n, h + 1, w + 1, cout)

    # Final layer: ConvTranspose + bias + tanh (transposed, lane-dense in M),
    # output reshapes straight into NCHW.
    p = params[-1]
    _, _, h, w = xc.shape
    hp1, wp1 = h + 1, w + 1
    a_t = _im2col_cmajor(xc)                                 # (4*Cin, M)
    y = convt_bias_tanh_t(a_t, p["w_catT"], p["b4"])         # (4*Cout, M) f32
    cout = p["w_catT"].shape[0] // 4
    img = y.reshape(2, 2, cout, n, hp1, wp1)                 # (ph, pw, c, n, i, j)
    img = jnp.transpose(img, (3, 2, 4, 0, 5, 1))             # (n, c, i, ph, j, pw)
    return img.reshape(n, cout, 2 * hp1, 2 * wp1)            # NCHW, matches PyTorch


if __name__ == "__main__":
    Z_DIM, NUM_CLASSES, HIDDEN, IM_CHAN, BATCH = 10, 10, 16, 1, 2

    key = jax.random.PRNGKey(0)
    kp, kn, kl = jax.random.split(key, 3)
    raw_params = init_params(kp, z_dim=Z_DIM, im_chan=IM_CHAN,
                             hidden_dim=HIDDEN, num_classes=NUM_CLASSES)
    params = prepare_params(raw_params)
    noise = jax.random.normal(kn, (BATCH, Z_DIM), jnp.float32)
    labels = jax.random.randint(kl, (BATCH,), 0, NUM_CLASSES)

    fwd = jax.jit(functools.partial(starter_generator_forward,
                                    num_classes=NUM_CLASSES))
    out = fwd(params, noise, labels)
    jax.block_until_ready(out)
    assert out.shape == (BATCH, IM_CHAN, 94, 94), out.shape
    assert bool(jnp.isfinite(out).all())
    print("KERNEL_OK")
</pallas_src>

<mosaic_0001>
module attributes {stable_mosaic.version = 11 : i64} {
  func.func @_convt_bn_relu_kernel(%arg0: memref<8x80xbf16, #tpu.memory_space<vmem>>, %arg1: memref<80x512xbf16, #tpu.memory_space<vmem>>, %arg2: memref<1x128xf32, #tpu.memory_space<vmem>>, %arg3: memref<1x128xf32, #tpu.memory_space<vmem>>, %arg4: memref<8x512xbf16, #tpu.memory_space<vmem>>) attributes {dimension_semantics = [], scalar_prefetch = 0 : i64, scratch_operands = 0 : i64, tpu.core_type = #tpu.core_type<tc>} {
    %c0 = arith.constant 0 : index
    %c0_0 = arith.constant 0 : index
    %0 = vector.load %arg0[%c0, %c0_0] : memref<8x80xbf16, #tpu.memory_space<vmem>>, vector<8x80xbf16>
    %c0_1 = arith.constant 0 : index
    %c0_2 = arith.constant 0 : index
    %1 = vector.load %arg1[%c0_1, %c0_2] : memref<80x512xbf16, #tpu.memory_space<vmem>>, vector<80x512xbf16>
    %cst = arith.constant dense<0.000000e+00> : vector<8x512xf32>
    %2 = tpu.matmul %0, %1, %cst {dimension_numbers = #tpu.dot_dimension_numbers<[1], [0], [0], [1], [0, 0, 1, 1], [], []>} : vector<8x80xbf16>, vector<80x512xbf16>, vector<8x512xf32> -> vector<8x512xf32>
    %cst_3 = arith.constant dense<0.000000e+00> : vector<512xf32>
    %3 = vector.multi_reduction <add>, %2, %cst_3 [0] : vector<8x512xf32> to vector<512xf32>
    %4 = vector.shape_cast %3 : vector<512xf32> to vector<1x512xf32>
    %5 = arith.mulf %2, %2 : vector<8x512xf32>
    %cst_4 = arith.constant dense<0.000000e+00> : vector<512xf32>
    %6 = vector.multi_reduction <add>, %5, %cst_4 [0] : vector<8x512xf32> to vector<512xf32>
    %7 = vector.shape_cast %6 : vector<512xf32> to vector<1x512xf32>
    %8 = vector.extract_strided_slice %4 {offsets = [0, 0], sizes = [1, 128], strides = [1, 1]} : vector<1x512xf32> to vector<1x128xf32>
    %9 = vector.extract_strided_slice %4 {offsets = [0, 128], sizes = [1, 128], strides = [1, 1]} : vector<1x512xf32> to vector<1x128xf32>
    %10 = arith.addf %8, %9 : vector<1x128xf32>
    %11 = vector.extract_strided_slice %4 {offsets = [0, 256], sizes = [1, 128], strides = [1, 1]} : vector<1x512xf32> to vector<1x128xf32>
    %12 = arith.addf %10, %11 : vector<1x128xf32>
    %13 = vector.extract_strided_slice %4 {offsets = [0, 384], sizes = [1, 128], strides = [1, 1]} : vector<1x512xf32> to vector<1x128xf32>
    %14 = arith.addf %12, %13 : vector<1x128xf32>
    %15 = vector.extract_strided_slice %7 {offsets = [0, 0], sizes = [1, 128], strides = [1, 1]} : vector<1x512xf32> to vector<1x128xf32>
    %16 = vector.extract_strided_slice %7 {offsets = [0, 128], sizes = [1, 128], strides = [1, 1]} : vector<1x512xf32> to vector<1x128xf32>
    %17 = arith.addf %15, %16 : vector<1x128xf32>
    %18 = vector.extract_strided_slice %7 {offsets = [0, 256], sizes = [1, 128], strides = [1, 1]} : vector<1x512xf32> to vector<1x128xf32>
    %19 = arith.addf %17, %18 : vector<1x128xf32>
    %20 = vector.extract_strided_slice %7 {offsets = [0, 384], sizes = [1, 128], strides = [1, 1]} : vector<1x512xf32> to vector<1x128xf32>
    %21 = arith.addf %19, %20 : vector<1x128xf32>
    %cst_5 = arith.constant 3.125000e-02 : f32
    %22 = vector.broadcast %cst_5 : f32 to vector<1x128xf32>
    %23 = arith.mulf %14, %22 : vector<1x128xf32>
    %cst_6 = arith.constant 3.125000e-02 : f32
    %24 = vector.broadcast %cst_6 : f32 to vector<1x128xf32>
    %25 = arith.mulf %21, %24 : vector<1x128xf32>
    %26 = arith.mulf %23, %23 : vector<1x128xf32>
    %27 = arith.subf %25, %26 : vector<1x128xf32>
    %c0_7 = arith.constant 0 : index
    %c0_8 = arith.constant 0 : index
    %28 = vector.load %arg2[%c0_7, %c0_8] : memref<1x128xf32, #tpu.memory_space<vmem>>, vector<1x128xf32>
    %cst_9 = arith.constant 9.99999974E-6 : f32
    %29 = vector.broadcast %cst_9 : f32 to vector<1x128xf32>
    %30 = arith.addf %27, %29 : vector<1x128xf32>
    %31 = math.rsqrt %30 : vector<1x128xf32>
    %32 = arith.mulf %28, %31 : vector<1x128xf32>
    %c0_10 = arith.constant 0 : index
    %c0_11 = arith.constant 0 : index
    %33 = vector.load %arg3[%c0_10, %c0_11] : memref<1x128xf32, #tpu.memory_space<vmem>>, vector<1x128xf32>
    %34 = arith.mulf %23, %32 : vector<1x128xf32>
    %35 = arith.subf %33, %34 : vector<1x128xf32>
    %36 = tpu.concatenate %32, %32, %32, %32 in 1 : vector<1x128xf32>, vector<1x128xf32>, vector<1x128xf32>, vector<1x128xf32> -> vector<1x512xf32>
    %37 = tpu.concatenate %35, %35, %35, %35 in 1 : vector<1x128xf32>, vector<1x128xf32>, vector<1x128xf32>, vector<1x128xf32> -> vector<1x512xf32>
    %38 = vector.broadcast %36 : vector<1x512xf32> to vector<8x512xf32>
    %39 = arith.mulf %2, %38 : vector<8x512xf32>
    %40 = vector.broadcast %37 : vector<1x512xf32> to vector<8x512xf32>
    %41 = arith.addf %39, %40 : vector<8x512xf32>
    %cst_12 = arith.constant 0.000000e+00 : f32
    %42 = vector.broadcast %cst_12 : f32 to vector<8x512xf32>
    %43 = arith.maximumf %41, %42 : vector<8x512xf32>
    %44 = arith.truncf %43 : vector<8x512xf32> to vector<8x512xbf16>
    %c0_13 = arith.constant 0 : index
    %c0_14 = arith.constant 0 : index
    %45 = vector.load %arg4[%c0_13, %c0_14] : memref<8x512xbf16, #tpu.memory_space<vmem>>, vector<8x512xbf16>
    tpu.vector_store %arg4[%c0_13, %c0_14], %44 {strides = array<i32>} : memref<8x512xbf16, #tpu.memory_space<vmem>>, vector<8x512xbf16>,
    return
  }
}

module attributes {stable_mosaic.version = 11 : i64} {
  func.func @_convt_bn_relu_kernel(%arg0: memref<50x512xbf16, #tpu.memory_space<vmem>>, %arg1: memref<512x256xbf16, #tpu.memory_space<vmem>>, %arg2: memref<1x64xf32, #tpu.memory_space<vmem>>, %arg3: memref<1x64xf32, #tpu.memory_space<vmem>>, %arg4: memref<50x256xbf16, #tpu.memory_space<vmem>>) attributes {dimension_semantics = [], scalar_prefetch = 0 : i64, scratch_operands = 0 : i64, tpu.core_type = #tpu.core_type<tc>} {
    %c0 = arith.constant 0 : index
    %c0_0 = arith.constant 0 : index
    %0 = vector.load %arg0[%c0, %c0_0] : memref<50x512xbf16, #tpu.memory_space<vmem>>, vector<50x512xbf16>
    %c0_1 = arith.constant 0 : index
    %c0_2 = arith.constant 0 : index
    %1 = vector.load %arg1[%c0_1, %c0_2] : memref<512x256xbf16, #tpu.memory_space<vmem>>, vector<512x256xbf16>
    %cst = arith.constant dense<0.000000e+00> : vector<50x256xf32>
    %2 = tpu.matmul %0, %1, %cst {dimension_numbers = #tpu.dot_dimension_numbers<[1], [0], [0], [1], [0, 0, 1, 1], [], []>} : vector<50x512xbf16>, vector<512x256xbf16>, vector<50x256xf32> -> vector<50x256xf32>
    %cst_3 = arith.constant dense<0.000000e+00> : vector<256xf32>
    %3 = vector.multi_reduction <add>, %2, %cst_3 [0] : vector<50x256xf32> to vector<256xf32>
    %4 = vector.shape_cast %3 : vector<256xf32> to vector<1x256xf32>
    %5 = arith.mulf %2, %2 : vector<50x256xf32>
    %cst_4 = arith.constant dense<0.000000e+00> : vector<256xf32>
    %6 = vector.multi_reduction <add>, %5, %cst_4 [0] : vector<50x256xf32> to vector<256xf32>
    %7 = vector.shape_cast %6 : vector<256xf32> to vector<1x256xf32>
    %8 = vector.extract_strided_slice %4 {offsets = [0, 0], sizes = [1, 64], strides = [1, 1]} : vector<1x256xf32> to vector<1x64xf32>
    %9 = vector.extract_strided_slice %4 {offsets = [0, 64], sizes = [1, 64], strides = [1, 1]} : vector<1x256xf32> to vector<1x64xf32>
    %10 = arith.addf %8, %9 : vector<1x64xf32>
    %11 = vector.extract_strided_slice %4 {offsets = [0, 128], sizes = [1, 64], strides = [1, 1]} : vector<1x256xf32> to vector<1x64xf32>
    %12 = arith.addf %10, %11 : vector<1x64xf32>
    %13 = vector.extract_strided_slice %4 {offsets = [0, 192], sizes = [1, 64], strides = [1, 1]} : vector<1x256xf32> to vector<1x64xf32>
    %14 = arith.addf %12, %13 : vector<1x64xf32>
    %15 = vector.extract_strided_slice %7 {offsets = [0, 0], sizes = [1, 64], strides = [1, 1]} : vector<1x256xf32> to vector<1x64xf32>
    %16 = vector.extract_strided_slice %7 {offsets = [0, 64], sizes = [1, 64], strides = [1, 1]} : vector<1x256xf32> to vector<1x64xf32>
    %17 = arith.addf %15, %16 : vector<1x64xf32>
    %18 = vector.extract_strided_slice %7 {offsets = [0, 128], sizes = [1, 64], strides = [1, 1]} : vector<1x256xf32> to vector<1x64xf32>
    %19 = arith.addf %17, %18 : vector<1x64xf32>
    %20 = vector.extract_strided_slice %7 {offsets = [0, 192], sizes = [1, 64], strides = [1, 1]} : vector<1x256xf32> to vector<1x64xf32>
    %21 = arith.addf %19, %20 : vector<1x64xf32>
    %cst_5 = arith.constant 5.000000e-03 : f32
    %22 = vector.broadcast %cst_5 : f32 to vector<1x64xf32>
    %23 = arith.mulf %14, %22 : vector<1x64xf32>
    %cst_6 = arith.constant 5.000000e-03 : f32
    %24 = vector.broadcast %cst_6 : f32 to vector<1x64xf32>
    %25 = arith.mulf %21, %24 : vector<1x64xf32>
    %26 = arith.mulf %23, %23 : vector<1x64xf32>
    %27 = arith.subf %25, %26 : vector<1x64xf32>
    %c0_7 = arith.constant 0 : index
    %c0_8 = arith.constant 0 : index
    %28 = vector.load %arg2[%c0_7, %c0_8] : memref<1x64xf32, #tpu.memory_space<vmem>>, vector<1x64xf32>
    %cst_9 = arith.constant 9.99999974E-6 : f32
    %29 = vector.broadcast %cst_9 : f32 to vector<1x64xf32>
    %30 = arith.addf %27, %29 : vector<1x64xf32>
    %31 = math.rsqrt %30 : vector<1x64xf32>
    %32 = arith.mulf %28, %31 : vector<1x64xf32>
    %c0_10 = arith.constant 0 : index
    %c0_11 = arith.constant 0 : index
    %33 = vector.load %arg3[%c0_10, %c0_11] : memref<1x64xf32, #tpu.memory_space<vmem>>, vector<1x64xf32>
    %34 = arith.mulf %23, %32 : vector<1x64xf32>
    %35 = arith.subf %33, %34 : vector<1x64xf32>
    %36 = tpu.concatenate %32, %32, %32, %32 in 1 : vector<1x64xf32>, vector<1x64xf32>, vector<1x64xf32>, vector<1x64xf32> -> vector<1x256xf32>
    %37 = tpu.concatenate %35, %35, %35, %35 in 1 : vector<1x64xf32>, vector<1x64xf32>, vector<1x64xf32>, vector<1x64xf32> -> vector<1x256xf32>
    %38 = vector.broadcast %36 : vector<1x256xf32> to vector<50x256xf32>
    %39 = arith.mulf %2, %38 : vector<50x256xf32>
    %40 = vector.broadcast %37 : vector<1x256xf32> to vector<50x256xf32>
    %41 = arith.addf %39, %40 : vector<50x256xf32>
    %cst_12 = arith.constant 0.000000e+00 : f32
    %42 = vector.broadcast %cst_12 : f32 to vector<50x256xf32>
    %43 = arith.maximumf %41, %42 : vector<50x256xf32>
    %44 = arith.truncf %43 : vector<50x256xf32> to vector<50x256xbf16>
    %c0_13 = arith.constant 0 : index
    %c0_14 = arith.constant 0 : index
    %45 = vector.load %arg4[%c0_13, %c0_14] : memref<50x256xbf16, #tpu.memory_space<vmem>>, vector<50x256xbf16>
    tpu.vector_store %arg4[%c0_13, %c0_14], %44 {strides = array<i32>} : memref<50x256xbf16, #tpu.memory_space<vmem>>, vector<50x256xbf16>,
    return
  }
}

module attributes {stable_mosaic.version = 11 : i64} {
  func.func @_convt_bn_relu_t_kernel(%arg0: memref<256x242xbf16, #tpu.memory_space<vmem>>, %arg1: memref<128x256xbf16, #tpu.memory_space<vmem>>, %arg2: memref<32x1xf32, #tpu.memory_space<vmem>>, %arg3: memref<32x1xf32, #tpu.memory_space<vmem>>, %arg4: memref<128x242xbf16, #tpu.memory_space<vmem>>) attributes {dimension_semantics = [], scalar_prefetch = 0 : i64, scratch_operands = 0 : i64, tpu.core_type = #tpu.core_type<tc>} {
    %c0 = arith.constant 0 : index
    %c0_0 = arith.constant 0 : index
    %0 = vector.load %arg1[%c0, %c0_0] : memref<128x256xbf16, #tpu.memory_space<vmem>>, vector<128x256xbf16>
    %c0_1 = arith.constant 0 : index
    %c0_2 = arith.constant 0 : index
    %1 = vector.load %arg0[%c0_1, %c0_2] : memref<256x242xbf16, #tpu.memory_space<vmem>>, vector<256x242xbf16>
    %cst = arith.constant dense<0.000000e+00> : vector<128x242xf32>
    %2 = tpu.matmul %0, %1, %cst {dimension_numbers = #tpu.dot_dimension_numbers<[1], [0], [0], [1], [0, 0, 1, 1], [], []>} : vector<128x256xbf16>, vector<256x242xbf16>, vector<128x242xf32> -> vector<128x242xf32>
    %cst_3 = arith.constant dense<0.000000e+00> : vector<128xf32>
    %3 = vector.multi_reduction <add>, %2, %cst_3 [1] : vector<128x242xf32> to vector<128xf32>
    %4 = vector.shape_cast %3 : vector<128xf32> to vector<128x1xf32>
    %5 = arith.mulf %2, %2 : vector<128x242xf32>
    %cst_4 = arith.constant dense<0.000000e+00> : vector<128xf32>
    %6 = vector.multi_reduction <add>, %5, %cst_4 [1] : vector<128x242xf32> to vector<128xf32>
    %7 = vector.shape_cast %6 : vector<128xf32> to vector<128x1xf32>
    %8 = vector.extract_strided_slice %4 {offsets = [0, 0], sizes = [32, 1], strides = [1, 1]} : vector<128x1xf32> to vector<32x1xf32>
    %9 = vector.extract_strided_slice %4 {offsets = [32, 0], sizes = [32, 1], strides = [1, 1]} : vector<128x1xf32> to vector<32x1xf32>
    %10 = arith.addf %8, %9 : vector<32x1xf32>
    %11 = vector.extract_strided_slice %4 {offsets = [64, 0], sizes = [32, 1], strides = [1, 1]} : vector<128x1xf32> to vector<32x1xf32>
    %12 = arith.addf %10, %11 : vector<32x1xf32>
    %13 = vector.extract_strided_slice %4 {offsets = [96, 0], sizes = [32, 1], strides = [1, 1]} : vector<128x1xf32> to vector<32x1xf32>
    %14 = arith.addf %12, %13 : vector<32x1xf32>
    %15 = vector.extract_strided_slice %7 {offsets = [0, 0], sizes = [32, 1], strides = [1, 1]} : vector<128x1xf32> to vector<32x1xf32>
    %16 = vector.extract_strided_slice %7 {offsets = [32, 0], sizes = [32, 1], strides = [1, 1]} : vector<128x1xf32> to vector<32x1xf32>
    %17 = arith.addf %15, %16 : vector<32x1xf32>
    %18 = vector.extract_strided_slice %7 {offsets = [64, 0], sizes = [32, 1], strides = [1, 1]} : vector<128x1xf32> to vector<32x1xf32>
    %19 = arith.addf %17, %18 : vector<32x1xf32>
    %20 = vector.extract_strided_slice %7 {offsets = [96, 0], sizes = [32, 1], strides = [1, 1]} : vector<128x1xf32> to vector<32x1xf32>
    %21 = arith.addf %19, %20 : vector<32x1xf32>
    %cst_5 = arith.constant 0.00103305781 : f32
    %22 = vector.broadcast %cst_5 : f32 to vector<32x1xf32>
    %23 = arith.mulf %14, %22 : vector<32x1xf32>
    %cst_6 = arith.constant 0.00103305781 : f32
    %24 = vector.broadcast %cst_6 : f32 to vector<32x1xf32>
    %25 = arith.mulf %21, %24 : vector<32x1xf32>
    %26 = arith.mulf %23, %23 : vector<32x1xf32>
    %27 = arith.subf %25, %26 : vector<32x1xf32>
    %c0_7 = arith.constant 0 : index
    %c0_8 = arith.constant 0 : index
    %28 = vector.load %arg2[%c0_7, %c0_8] : memref<32x1xf32, #tpu.memory_space<vmem>>, vector<32x1xf32>
    %cst_9 = arith.constant 9.99999974E-6 : f32
    %29 = vector.broadcast %cst_9 : f32 to vector<32x1xf32>
    %30 = arith.addf %27, %29 : vector<32x1xf32>
    %31 = math.rsqrt %30 : vector<32x1xf32>
    %32 = arith.mulf %28, %31 : vector<32x1xf32>
    %c0_10 = arith.constant 0 : index
    %c0_11 = arith.constant 0 : index
    %33 = vector.load %arg3[%c0_10, %c0_11] : memref<32x1xf32, #tpu.memory_space<vmem>>, vector<32x1xf32>
    %34 = arith.mulf %23, %32 : vector<32x1xf32>
    %35 = arith.subf %33, %34 : vector<32x1xf32>
    %36 = tpu.concatenate %32, %32, %32, %32 in 0 : vector<32x1xf32>, vector<32x1xf32>, vector<32x1xf32>, vector<32x1xf32> -> vector<128x1xf32>
    %37 = tpu.concatenate %35, %35, %35, %35 in 0 : vector<32x1xf32>, vector<32x1xf32>, vector<32x1xf32>, vector<32x1xf32> -> vector<128x1xf32>
    %38 = vector.broadcast %36 : vector<128x1xf32> to vector<128x242xf32>
    %39 = arith.mulf %2, %38 : vector<128x242xf32>
    %40 = vector.broadcast %37 : vector<128x1xf32> to vector<128x242xf32>
    %41 = arith.addf %39, %40 : vector<128x242xf32>
    %cst_12 = arith.constant 0.000000e+00 : f32
    %42 = vector.broadcast %cst_12 : f32 to vector<128x242xf32>
    %43 = arith.maximumf %41, %42 : vector<128x242xf32>
    %44 = arith.truncf %43 : vector<128x242xf32> to vector<128x242xbf16>
    %c0_13 = arith.constant 0 : index
    %c0_14 = arith.constant 0 : index
    %45 = vector.load %arg4[%c0_13, %c0_14] : memref<128x242xbf16, #tpu.memory_space<vmem>>, vector<128x242xbf16>
    tpu.vector_store %arg4[%c0_13, %c0_14], %44 {strides = array<i32>} : memref<128x242xbf16, #tpu.memory_space<vmem>>, vector<128x242xbf16>,
    return
  }
}

module attributes {stable_mosaic.version = 11 : i64} {
  func.func @_convt_bn_relu_t_kernel(%arg0: memref<128x1058xbf16, #tpu.memory_space<vmem>>, %arg1: memref<64x128xbf16, #tpu.memory_space<vmem>>, %arg2: memref<16x1xf32, #tpu.memory_space<vmem>>, %arg3: memref<16x1xf32, #tpu.memory_space<vmem>>, %arg4: memref<64x1058xbf16, #tpu.memory_space<vmem>>) attributes {dimension_semantics = [], scalar_prefetch = 0 : i64, scratch_operands = 0 : i64, tpu.core_type = #tpu.core_type<tc>} {
    %c0 = arith.constant 0 : index
    %c0_0 = arith.constant 0 : index
    %0 = vector.load %arg1[%c0, %c0_0] : memref<64x128xbf16, #tpu.memory_space<vmem>>, vector<64x128xbf16>
    %c0_1 = arith.constant 0 : index
    %c0_2 = arith.constant 0 : index
    %1 = vector.load %arg0[%c0_1, %c0_2] : memref<128x1058xbf16, #tpu.memory_space<vmem>>, vector<128x1058xbf16>
    %cst = arith.constant dense<0.000000e+00> : vector<64x1058xf32>
    %2 = tpu.matmul %0, %1, %cst {dimension_numbers = #tpu.dot_dimension_numbers<[1], [0], [0], [1], [0, 0, 1, 1], [], []>} : vector<64x128xbf16>, vector<128x1058xbf16>, vector<64x1058xf32> -> vector<64x1058xf32>
    %cst_3 = arith.constant dense<0.000000e+00> : vector<64xf32>
    %3 = vector.multi_reduction <add>, %2, %cst_3 [1] : vector<64x1058xf32> to vector<64xf32>
    %4 = vector.shape_cast %3 : vector<64xf32> to vector<64x1xf32>
    %5 = arith.mulf %2, %2 : vector<64x1058xf32>
    %cst_4 = arith.constant dense<0.000000e+00> : vector<64xf32>
    %6 = vector.multi_reduction <add>, %5, %cst_4 [1] : vector<64x1058xf32> to vector<64xf32>
    %7 = vector.shape_cast %6 : vector<64xf32> to vector<64x1xf32>
    %8 = vector.extract_strided_slice %4 {offsets = [0, 0], sizes = [16, 1], strides = [1, 1]} : vector<64x1xf32> to vector<16x1xf32>
    %9 = vector.extract_strided_slice %4 {offsets = [16, 0], sizes = [16, 1], strides = [1, 1]} : vector<64x1xf32> to vector<16x1xf32>
    %10 = arith.addf %8, %9 : vector<16x1xf32>
    %11 = vector.extract_strided_slice %4 {offsets = [32, 0], sizes = [16, 1], strides = [1, 1]} : vector<64x1xf32> to vector<16x1xf32>
    %12 = arith.addf %10, %11 : vector<16x1xf32>
    %13 = vector.extract_strided_slice %4 {offsets = [48, 0], sizes = [16, 1], strides = [1, 1]} : vector<64x1xf32> to vector<16x1xf32>
    %14 = arith.addf %12, %13 : vector<16x1xf32>
    %15 = vector.extract_strided_slice %7 {offsets = [0, 0], sizes = [16, 1], strides = [1, 1]} : vector<64x1xf32> to vector<16x1xf32>
    %16 = vector.extract_strided_slice %7 {offsets = [16, 0], sizes = [16, 1], strides = [1, 1]} : vector<64x1xf32> to vector<16x1xf32>
    %17 = arith.addf %15, %16 : vector<16x1xf32>
    %18 = vector.extract_strided_slice %7 {offsets = [32, 0], sizes = [16, 1], strides = [1, 1]} : vector<64x1xf32> to vector<16x1xf32>
    %19 = arith.addf %17, %18 : vector<16x1xf32>
    %20 = vector.extract_strided_slice %7 {offsets = [48, 0], sizes = [16, 1], strides = [1, 1]} : vector<64x1xf32> to vector<16x1xf32>
    %21 = arith.addf %19, %20 : vector<16x1xf32>
    %cst_5 = arith.constant 2.36294902E-4 : f32
    %22 = vector.broadcast %cst_5 : f32 to vector<16x1xf32>
    %23 = arith.mulf %14, %22 : vector<16x1xf32>
    %cst_6 = arith.constant 2.36294902E-4 : f32
    %24 = vector.broadcast %cst_6 : f32 to vector<16x1xf32>
    %25 = arith.mulf %21, %24 : vector<16x1xf32>
    %26 = arith.mulf %23, %23 : vector<16x1xf32>
    %27 = arith.subf %25, %26 : vector<16x1xf32>
    %c0_7 = arith.constant 0 : index
    %c0_8 = arith.constant 0 : index
    %28 = vector.load %arg2[%c0_7, %c0_8] : memref<16x1xf32, #tpu.memory_space<vmem>>, vector<16x1xf32>
    %cst_9 = arith.constant 9.99999974E-6 : f32
    %29 = vector.broadcast %cst_9 : f32 to vector<16x1xf32>
    %30 = arith.addf %27, %29 : vector<16x1xf32>
    %31 = math.rsqrt %30 : vector<16x1xf32>
    %32 = arith.mulf %28, %31 : vector<16x1xf32>
    %c0_10 = arith.constant 0 : index
    %c0_11 = arith.constant 0 : index
    %33 = vector.load %arg3[%c0_10, %c0_11] : memref<16x1xf32, #tpu.memory_space<vmem>>, vector<16x1xf32>
    %34 = arith.mulf %23, %32 : vector<16x1xf32>
    %35 = arith.subf %33, %34 : vector<16x1xf32>
    %36 = tpu.concatenate %32, %32, %32, %32 in 0 : vector<16x1xf32>, vector<16x1xf32>, vector<16x1xf32>, vector<16x1xf32> -> vector<64x1xf32>
    %37 = tpu.concatenate %35, %35, %35, %35 in 0 : vector<16x1xf32>, vector<16x1xf32>, vector<16x1xf32>, vector<16x1xf32> -> vector<64x1xf32>
    %38 = vector.broadcast %36 : vector<64x1xf32> to vector<64x1058xf32>
    %39 = arith.mulf %2, %38 : vector<64x1058xf32>
    %40 = vector.broadcast %37 : vector<64x1xf32> to vector<64x1058xf32>
    %41 = arith.addf %39, %40 : vector<64x1058xf32>
    %cst_12 = arith.constant 0.000000e+00 : f32
    %42 = vector.broadcast %cst_12 : f32 to vector<64x1058xf32>
    %43 = arith.maximumf %41, %42 : vector<64x1058xf32>
    %44 = arith.truncf %43 : vector<64x1058xf32> to vector<64x1058xbf16>
    %c0_13 = arith.constant 0 : index
    %c0_14 = arith.constant 0 : index
    %45 = vector.load %arg4[%c0_13, %c0_14] : memref<64x1058xbf16, #tpu.memory_space<vmem>>, vector<64x1058xbf16>
    tpu.vector_store %arg4[%c0_13, %c0_14], %44 {strides = array<i32>} : memref<64x1058xbf16, #tpu.memory_space<vmem>>, vector<64x1058xbf16>,
    return
  }
}

module attributes {stable_mosaic.version = 11 : i64} {
  func.func @_convt_tanh_t_kernel(%arg0: memref<64x4418xbf16, #tpu.memory_space<vmem>>, %arg1: memref<4x64xbf16, #tpu.memory_space<vmem>>, %arg2: memref<4x1xf32, #tpu.memory_space<vmem>>, %arg3: memref<4x4418xf32, #tpu.memory_space<vmem>>) attributes {dimension_semantics = [], scalar_prefetch = 0 : i64, scratch_operands = 0 : i64, tpu.core_type = #tpu.core_type<tc>} {
    %c0 = arith.constant 0 : index
    %c0_0 = arith.constant 0 : index
    %0 = vector.load %arg1[%c0, %c0_0] : memref<4x64xbf16, #tpu.memory_space<vmem>>, vector<4x64xbf16>
    %c0_1 = arith.constant 0 : index
    %c0_2 = arith.constant 0 : index
    %1 = vector.load %arg0[%c0_1, %c0_2] : memref<64x4418xbf16, #tpu.memory_space<vmem>>, vector<64x4418xbf16>
    %cst = arith.constant dense<0.000000e+00> : vector<4x4418xf32>
    %2 = tpu.matmul %0, %1, %cst {dimension_numbers = #tpu.dot_dimension_numbers<[1], [0], [0], [1], [0, 0, 1, 1], [], []>} : vector<4x64xbf16>, vector<64x4418xbf16>, vector<4x4418xf32> -> vector<4x4418xf32>
    %c0_3 = arith.constant 0 : index
    %c0_4 = arith.constant 0 : index
    %3 = vector.load %arg2[%c0_3, %c0_4] : memref<4x1xf32, #tpu.memory_space<vmem>>, vector<4x1xf32>
    %4 = vector.broadcast %3 : vector<4x1xf32> to vector<4x4418xf32>
    %5 = arith.addf %2, %4 : vector<4x4418xf32>
    %6 = math.tanh %5 : vector<4x4418xf32>
    %c0_5 = arith.constant 0 : index
    %c0_6 = arith.constant 0 : index
    %7 = vector.load %arg3[%c0_5, %c0_6] : memref<4x4418xf32, #tpu.memory_space<vmem>>, vector<4x4418xf32>
    tpu.vector_store %arg3[%c0_5, %c0_6], %6 {strides = array<i32>} : memref<4x4418xf32, #tpu.memory_space<vmem>>, vector<4x4418xf32>,
    return
  }
}

</mosaic_0001>

<llo_original>
// kernel: starter_generator_forward.5
$region0: #{starter_generator_forward.5}
  #allocation0 [shape = 'u32[]', space=smem, size = 0x4, offset = 0x4, fixed_abs, tag = 'smem constant byte address 0x4 - core index']
  #allocation1 [shape = 'u32[144,128]{1,0:T(1,128)}', space=vmem, size = 0x12000, scoped, tag = 'internal scratch']
  %s0 = inlined_call_operand.vmem [shape: bf16[8,80], index: 0, kind: input, shape index: {}]
  %s1 = inlined_call_operand.hbm [shape: bf16[80,512], index: 1, kind: input, shape index: {}]
  %s2 = inlined_call_operand.hbm [shape: f32[1,128], index: 2, kind: input, shape index: {}]
  %s3 = inlined_call_operand.hbm [shape: f32[1,128], index: 3, kind: input, shape index: {}]
  %s4 = inlined_call_operand.vmem [shape: bf16[8,512], index: 4, kind: output, shape index: {}]
  %s5 = sld [smem:[#allocation0]]
  $region38: #{starter_generator_forward.5} parent=0
    _
  %s7 = ssub.s32 1, %s5
  %s8 = scalar_select 0, %s7, %s5
  $region1: #{starter_generator_forward.5} parent=0
    #allocation2 [shape = 'u8[81920]{0}', space=vmem, size = 0x14000, scoped, tag = 'input window, operand 1, single buffered']
    #allocation3 [shape = 's32[1]{0}', space=sflag, size = 0x4, scoped, tag = 'scoped memory for starter_generator_forward.5']
    #allocation4 [shape = 'u8[512]{0}', space=vmem, size = 0x400, scoped, tag = 'input window, operand 2, single buffered']
    #allocation5 [shape = 's32[1]{0}', space=sflag, size = 0x4, scoped, tag = 'scoped memory for starter_generator_forward.5']
    #allocation6 [shape = 'u8[512]{0}', space=vmem, size = 0x400, scoped, tag = 'input window, operand 3, single buffered']
    %9 = vsyncpa [#allocation3], 0
    %10 = vsyncpa [#allocation5], 0
    // Predicated region
    $region2: #{starter_generator_forward.5} parent=1 // pred_check
      _
    $region3: #{starter_generator_forward.5} parent=1 // pred_check_branch
      %12 = sbr.rel (0) target = $region5
    $region4: #{starter_generator_forward.5} parent=1 // pred_region
      _
    $region5: #{starter_generator_forward.5} parent=1 // pred_fallthru
      _
    // Predicated region
    $region6: #{starter_generator_forward.5} parent=1 // pred_check
      _
    $region7: #{starter_generator_forward.5} parent=1 // pred_check_branch
      %14 = sbr.rel (0) target = $region9
    $region8: #{starter_generator_forward.5} parent=1 // pred_region
      %s16 = ssub.s32 2560, 2560
      %17 = vsyncadd [#allocation3], %s16
      %s18 = sshll.u32 [#allocation2], 4
      %s19 = int_to_ptr.vmem [resolvable:$true] %s18
      %24 = dma.hbm_to_vmem [thread:$0]  %s1, 2560, %s19, [#allocation3], 256, 256, 16
    $region9: #{starter_generator_forward.5} parent=1 // pred_fallthru
      _
    // Predicated region
    $region10: #{starter_generator_forward.5} parent=1 // pred_check
      _
    $region11: #{starter_generator_forward.5} parent=1 // pred_check_branch
      %26 = sbr.rel (0) target = $region13
    $region12: #{starter_generator_forward.5} parent=1 // pred_region
      %s28 = ssub.s32 16, 16
      %29 = vsyncadd [#allocation5], %s28
      %s31 = sshll.u32 [#allocation4], 4
      %s32 = int_to_ptr.vmem [resolvable:$true] %s31
      %34 = dma.hbm_to_vmem [thread:$0]  %s2, 16, %s32, [#allocation5]
    $region13: #{starter_generator_forward.5} parent=1 // pred_fallthru
      _
    // Predicated region
    $region14: #{starter_generator_forward.5} parent=1 // pred_check
      _
    $region15: #{starter_generator_forward.5} parent=1 // pred_check_branch
      %36 = sbr.rel (0) target = $region17
    $region16: #{starter_generator_forward.5} parent=1 // pred_region
      %s38 = ssub.s32 16, 16
      %39 = vsyncadd [#allocation5], %s38
      %s41 = sshll.u32 [#allocation6], 4
      %s42 = int_to_ptr.vmem [resolvable:$true] %s41
      %44 = dma.hbm_to_vmem [thread:$0]  %s3, 16, %s42, [#allocation5]
    $region17: #{starter_generator_forward.5} parent=1 // pred_fallthru
      _
    // Predicated region
    $region18: #{starter_generator_forward.5} parent=1 // pred_check
      _
    $region19: #{starter_generator_forward.5} parent=1 // pred_check_branch
      %46 = sbr.rel (0) target = $region21
    $region20: #{starter_generator_forward.5} parent=1 // pred_region
      %47 = dma.done [#allocation3], 2560
    $region21: #{starter_generator_forward.5} parent=1 // pred_fallthru
      _
    // Predicated region
    $region22: #{starter_generator_forward.5} parent=1 // pred_check
      _
    $region23: #{starter_generator_forward.5} parent=1 // pred_check_branch
      %49 = sbr.rel (0) target = $region25
    $region24: #{starter_generator_forward.5} parent=1 // pred_region
      %50 = dma.done [#allocation5], 16
    $region25: #{starter_generator_forward.5} parent=1 // pred_fallthru
      _
    // Predicated region
    $region26: #{starter_generator_forward.5} parent=1 // pred_check
      _
    $region27: #{starter_generator_forward.5} parent=1 // pred_check_branch
      %52 = sbr.rel (0) target = $region29
    $region28: #{starter_generator_forward.5} parent=1 // pred_region
      %53 = dma.done [#allocation5], 16
    $region29: #{starter_generator_forward.5} parent=1 // pred_fallthru
      _
    %v55 = vld [vmem:[%s0] sm:$0xf]
    %v56 = vld [vmem:[#allocation2] sm:$0xff]
    %v57 = vld [vmem:[#allocation2 + $0x8] sm:$0xff]
    %v58 = vld [vmem:[#allocation2 + $0x10] sm:$0xff]
    %v59 = vld [vmem:[#allocation2 + $0x18] sm:$0xff]
    %v60 = vld [vmem:[#allocation2 + $0x20] sm:$0xff]
    %v61 = vld [vmem:[#allocation2 + $0x28] sm:$0xff]
    %v62 = vld [vmem:[#allocation2 + $0x30] sm:$0xff]
    %v63 = vld [vmem:[#allocation2 + $0x38] sm:$0xff]
    %v64 = vld [vmem:[#allocation2 + $0x40] sm:$0xff]
    %v65 = vld [vmem:[#allocation2 + $0x48] sm:$0xff]
    %v66 = vld [vmem:[#allocation2 + $0x50] sm:$0xff]
    %v67 = vld [vmem:[#allocation2 + $0x58] sm:$0xff]
    %v68 = vld [vmem:[#allocation2 + $0x60] sm:$0xff]
    %v69 = vld [vmem:[#allocation2 + $0x68] sm:$0xff]
    %v70 = vld [vmem:[#allocation2 + $0x70] sm:$0xff]
    %v71 = vld [vmem:[#allocation2 + $0x78] sm:$0xff]
    %v72 = vld [vmem:[#allocation2 + $0x80] sm:$0xff]
    %v73 = vld [vmem:[#allocation2 + $0x88] sm:$0xff]
    %v74 = vld [vmem:[#allocation2 + $0x90] sm:$0xff]
    %v75 = vld [vmem:[#allocation2 + $0x98] sm:$0xff]
    %v96 = vunpack.c.l.b16 %v56
    %v97 = vunpack.c.h.b16 %v56
    %v98 = vunpack.c.l.b16 %v57
    %v99 = vunpack.c.h.b16 %v57
    %v100 = vunpack.c.l.b16 %v58
    %v101 = vunpack.c.h.b16 %v58
    %v102 = vunpack.c.l.b16 %v59
    %v103 = vunpack.c.h.b16 %v59
    %v104 = vunpack.c.l.b16 %v60
    %v105 = vunpack.c.h.b16 %v60
    %v106 = vunpack.c.l.b16 %v61
    %v107 = vunpack.c.h.b16 %v61
    %v108 = vunpack.c.l.b16 %v62
    %v109 = vunpack.c.h.b16 %v62
    %v110 = vunpack.c.l.b16 %v63
    %v111 = vunpack.c.h.b16 %v63
    %v112 = vunpack.c.l.b16 %v64
    %v113 = vunpack.c.h.b16 %v64
    %v114 = vunpack.c.l.b16 %v65
    %v115 = vunpack.c.h.b16 %v65
    %v116 = vunpack.c.l.b16 %v66
    %v117 = vunpack.c.h.b16 %v66
    %v118 = vunpack.c.l.b16 %v67
    %v119 = vunpack.c.h.b16 %v67
    %v120 = vunpack.c.l.b16 %v68
    %v121 = vunpack.c.h.b16 %v68
    %v122 = vunpack.c.l.b16 %v69
    %v123 = vunpack.c.h.b16 %v69
    %v124 = vunpack.c.l.b16 %v70
    %v125 = vunpack.c.h.b16 %v70
    %v126 = vunpack.c.l.b16 %v71
    %v127 = vunpack.c.h.b16 %v71
    %v128 = vunpack.c.l.b16 %v72
    %v129 = vunpack.c.h.b16 %v72
    %v130 = vunpack.c.l.b16 %v73
    %v131 = vunpack.c.h.b16 %v73
    %v132 = vunpack.c.l.b16 %v74
    %v133 = vunpack.c.h.b16 %v74
    %v134 = vunpack.c.l.b16 %v75
    %v135 = vunpack.c.h.b16 %v75
    %v136 = vpack.c.b16 %v100, %v96
    %v137 = vpack.c.b16 %v101, %v97
    %v138 = vpack.c.b16 %v102, %v98
    %v139 = vpack.c.b16 %v103, %v99
    %v140 = vpack.c.b16 %v108, %v104
    %v141 = vpack.c.b16 %v109, %v105
    %v142 = vpack.c.b16 %v110, %v106
    %v143 = vpack.c.b16 %v111, %v107
    %v144 = vpack.c.b16 %v116, %v112
    %v145 = vpack.c.b16 %v117, %v113
    %v146 = vpack.c.b16 %v118, %v114
    %v147 = vpack.c.b16 %v119, %v115
    %v148 = vpack.c.b16 %v124, %v120
    %v149 = vpack.c.b16 %v125, %v121
    %v150 = vpack.c.b16 %v126, %v122
    %v151 = vpack.c.b16 %v127, %v123
    %v152 = vpack.c.b16 %v132, %v128
    %v153 = vpack.c.b16 %v133, %v129
    %v154 = vpack.c.b16 %v134, %v130
    %v155 = vpack.c.b16 %v135, %v131
    %vm176 = vcmask 654336
    %v178 = vsel %vm176, %v55, 0
    %180 = vmatprep.subr.bf16.mxu0 %v137
    %181 = vmatpush1.bf16.msra.mxu0 %v136
    %182 = vmatprep.subr.bf16.mxu0 %v141
    %183 = vmatpush1.bf16.msra.mxu0 %v140
    %184 = vmatprep.subr.bf16.mxu0 %v145
    %185 = vmatpush1.bf16.msra.mxu0 %v144
    %186 = vmatprep.subr.bf16.mxu0 %v149
    %187 = vmatpush1.bf16.msra.mxu0 %v148
    %188 = vmatprep.subr.bf16.mxu0 %v153
    %189 = vmatpush1.bf16.msra.mxu0 %v152
    %190 = vmatprep.subr.bf16.mxu0 0
    %191 = vmatpush1.bf16.msra.mxu0 0
    %192 = vmatprep.subr.bf16.mxu0 0
    %193 = vmatpush1.bf16.msra.mxu0 0
    %194 = vmatprep.subr.bf16.mxu0 0
    %195 = vmatpush1.bf16.msra.mxu0 0
    %196 = vmatprep.subr.bf16.mxu0 0
    %197 = vmatpush1.bf16.msra.mxu0 0
    %198 = vmatprep.subr.bf16.mxu0 0
    %199 = vmatpush1.bf16.msra.mxu0 0
    %200 = vmatprep.subr.bf16.mxu0 0
    %201 = vmatpush1.bf16.msra.mxu0 0
    %202 = vmatprep.subr.bf16.mxu0 0
    %203 = vmatpush1.bf16.msra.mxu0 0
    %204 = vmatprep.subr.bf16.mxu0 0
    %205 = vmatpush1.bf16.msra.mxu0 0
    %206 = vmatprep.subr.bf16.mxu0 0
    %207 = vmatpush1.bf16.msra.mxu0 0
    %208 = vmatprep.subr.bf16.mxu0 0
    %209 = vmatpush1.bf16.msra.mxu0 0
    %210 = vmatprep.subr.bf16.mxu0 0
    %211 = vmatpush1.bf16.msra.mxu0 0
    %212 = vmatprep.mubr.bf16.mxu0 0
    %213 = vmatmul.mubr.bf16.gmra.mrb[0].mxu0 %v178
    %v214 = vpop.f32.mrb[0].mxu0
    %v215 = vadd.f32 0.0, %v214
    %v216 = vpop.f32.mrb[0].mxu0
    %v217 = vadd.f32 0.0, %v216
    %v218 = vpop.f32.mrb[0].mxu0
    %v219 = vpop.f32.mrb[0].mxu0
    %220 = vdwg.mxu0
    %221 = vmatprep.subr.bf16.mxu0 %v139
    %222 = vmatpush1.bf16.msra.mxu0 %v138
    %223 = vmatprep.subr.bf16.mxu0 %v143
    %224 = vmatpush1.bf16.msra.mxu0 %v142
    %225 = vmatprep.subr.bf16.mxu0 %v147
    %226 = vmatpush1.bf16.msra.mxu0 %v146
    %227 = vmatprep.subr.bf16.mxu0 %v151
    %228 = vmatpush1.bf16.msra.mxu0 %v150
    %229 = vmatprep.subr.bf16.mxu0 %v155
    %230 = vmatpush1.bf16.msra.mxu0 %v154
    %231 = vmatprep.subr.bf16.mxu0 0
    %232 = vmatpush1.bf16.msra.mxu0 0
    %233 = vmatprep.subr.bf16.mxu0 0
    %234 = vmatpush1.bf16.msra.mxu0 0
    %235 = vmatprep.subr.bf16.mxu0 0
    %236 = vmatpush1.bf16.msra.mxu0 0
    %237 = vmatprep.subr.bf16.mxu0 0
    %238 = vmatpush1.bf16.msra.mxu0 0
    %239 = vmatprep.subr.bf16.mxu0 0
    %240 = vmatpush1.bf16.msra.mxu0 0
    %241 = vmatprep.subr.bf16.mxu0 0
    %242 = vmatpush1.bf16.msra.mxu0 0
    %243 = vmatprep.subr.bf16.mxu0 0
    %244 = vmatpush1.bf16.msra.mxu0 0
    %245 = vmatprep.subr.bf16.mxu0 0
    %246 = vmatpush1.bf16.msra.mxu0 0
    %247 = vmatprep.subr.bf16.mxu0 0
    %248 = vmatpush1.bf16.msra.mxu0 0
    %249 = vmatprep.subr.bf16.mxu0 0
    %250 = vmatpush1.bf16.msra.mxu0 0
    %251 = vmatprep.subr.bf16.mxu0 0
    %252 = vmatpush1.bf16.msra.mxu0 0
    %253 = vmatprep.mubr.bf16.mxu0 0
    %254 = vmatmul.mubr.bf16.gmra.mrb[0].mxu0 %v178
    %v255 = vpop.f32.mrb[0].mxu0
    %v256 = vadd.f32 0.0, %v255
    %v257 = vpop.f32.mrb[0].mxu0
    %v258 = vadd.f32 0.0, %v257
    %v259 = vpop.f32.mrb[0].mxu0
    %v260 = vpop.f32.mrb[0].mxu0
    %261 = vdwg.mxu0
    %v262 = vrot.slane %v215, 4
    %v263 = vadd.f32 %v215, %v262
    %v264 = vrot.slane %v263, 2
    %v265 = vadd.f32 %v263, %v264
    %v266 = vrot.slane %v265, 1
    %v267 = vadd.f32 %v265, %v266
    %v268 = vrot.slane %v217, 4
    %v269 = vadd.f32 %v217, %v268
    %v270 = vrot.slane %v269, 2
    %v271 = vadd.f32 %v269, %v270
    %v272 = vrot.slane %v271, 1
    %v273 = vadd.f32 %v271, %v272
    %v274 = vrot.slane %v256, 4
    %v275 = vadd.f32 %v256, %v274
    %v276 = vrot.slane %v275, 2
    %v277 = vadd.f32 %v275, %v276
    %v278 = vrot.slane %v277, 1
    %v279 = vadd.f32 %v277, %v278
    %v280 = vrot.slane %v258, 4
    %v281 = vadd.f32 %v258, %v280
    %v282 = vrot.slane %v281, 2
    %v283 = vadd.f32 %v281, %v282
    %v284 = vrot.slane %v283, 1
    %v285 = vadd.f32 %v283, %v284
    %v286 = vmul.f32 %v215, %v215
    %v287 = vmul.f32 %v217, %v217
    %v288 = vmul.f32 %v256, %v256
    %v289 = vmul.f32 %v258, %v258
    %v290 = vrot.slane %v286, 4
    %v291 = vadd.f32 %v286, %v290
    %v292 = vrot.slane %v291, 2
    %v293 = vadd.f32 %v291, %v292
    %v294 = vrot.slane %v293, 1
    %v295 = vadd.f32 %v293, %v294
    %v296 = vrot.slane %v287, 4
    %v297 = vadd.f32 %v287, %v296
    %v298 = vrot.slane %v297, 2
    %v299 = vadd.f32 %v297, %v298
    %v300 = vrot.slane %v299, 1
    %v301 = vadd.f32 %v299, %v300
    %v302 = vrot.slane %v288, 4
    %v303 = vadd.f32 %v288, %v302
    %v304 = vrot.slane %v303, 2
    %v305 = vadd.f32 %v303, %v304
    %v306 = vrot.slane %v305, 1
    %v307 = vadd.f32 %v305, %v306
    %v308 = vrot.slane %v289, 4
    %v309 = vadd.f32 %v289, %v308
    %v310 = vrot.slane %v309, 2
    %v311 = vadd.f32 %v309, %v310
    %v312 = vrot.slane %v311, 1
    %v313 = vadd.f32 %v311, %v312
    %v314 = vadd.f32 %v267, %v273
    %v315 = vadd.f32 %v314, %v279
    %v316 = vadd.f32 %v315, %v285
    %v317 = vadd.f32 %v295, %v301
    %v318 = vadd.f32 %v317, %v307
    %v319 = vadd.f32 %v318, %v313
    %v320 = vmul.f32 %v316, 0.03125
    %v321 = vmul.f32 %v319, 0.03125
    %v322 = vmul.f32 %v320, %v320
    %v323 = vsub.f32 %v321, %v322
    %v324 = vld [vmem:[#allocation4] sm:$0x1]
    %v325 = vadd.f32 %v323, 1e-05
    %v326 = vrsqrt.pop %v325
    %v327 = vmul.f32 %v324, %v326
    %v328 = vld [vmem:[#allocation6] sm:$0x1]
    %v329 = vmul.f32 %v320, %v327
    %v330 = vsub.f32 %v328, %v329
    %v331 = vlaneseq
    %v332 = vshrl.u32 %v331, 7
    %v333 = vsub.s32 0, %v332
    %v334 = vrot.slane %v327, %v333
    %v335 = vmul.f32 %v215, %v334
    %v336 = vmul.f32 %v217, %v334
    %v337 = vmul.f32 %v256, %v334
    %v338 = vmul.f32 %v258, %v334
    %v339 = vlaneseq
    %v340 = vshrl.u32 %v339, 7
    %v341 = vsub.s32 0, %v340
    %v342 = vrot.slane %v330, %v341
    %v343 = vadd.f32 %v335, %v342
    %v344 = vadd.f32 %v336, %v342
    %v345 = vadd.f32 %v337, %v342
    %v346 = vadd.f32 %v338, %v342
    %v347 = vmax.f32 %v343, 0.0
    %v348 = vmax.f32 %v344, 0.0
    %v349 = vmax.f32 %v345, 0.0
    %v350 = vmax.f32 %v346, 0.0
    %v351 = vpack.c.bf16 %v347, %v347
    %v352 = vpack.c.bf16 %v348, %v348
    %v353 = vpack.c.bf16 %v349, %v349
    %v354 = vpack.c.bf16 %v350, %v350
    %v359 = vunpack.c.l.b16 %v351
    %v360 = vunpack.c.l.b16 %v352
    %v361 = vunpack.c.l.b16 %v353
    %v362 = vunpack.c.l.b16 %v354
    %v363 = vpack.c.b16 %v360, %v359
    %v364 = vpack.c.b16 %v362, %v361
    %367 = vst [vmem:[%s4] sm:$0xff] %v363
    %368 = vst [vmem:[%s4 + $0x8] sm:$0xff] %v364
    // Predicated region
    $region30: #{starter_generator_forward.5} parent=1 // pred_check
      _
    $region31: #{starter_generator_forward.5} parent=1 // pred_check_branch
      %370 = sbr.rel (0) target = $region33
    $region32: #{starter_generator_forward.5} parent=1 // pred_region
      _
    $region33: #{starter_generator_forward.5} parent=1 // pred_fallthru
      _
    // Predicated region
    $region34: #{starter_generator_forward.5} parent=1 // pred_check
      _
    $region35: #{starter_generator_forward.5} parent=1 // pred_check_branch
      %372 = sbr.rel (0) target = $region37
    $region36: #{starter_generator_forward.5} parent=1 // pred_region
      _
    $region37: #{starter_generator_forward.5} parent=1 // pred_fallthru
      _
    %373 = vsyncpa [#allocation3], 1
    %374 = vsyncpa [#allocation5], 1

// kernel: starter_generator_forward.6
$region0: #{starter_generator_forward.6}
  #allocation0 [shape = 'u32[]', space=smem, size = 0x4, offset = 0x4, fixed_abs, tag = 'smem constant byte address 0x4 - core index']
  #allocation1 [shape = 'u32[144,128]{1,0:T(1,128)}', space=vmem, size = 0x12000, scoped, tag = 'internal scratch']
  %s0 = inlined_call_operand.vmem [shape: bf16[50,512], index: 0, kind: input, shape index: {}]
  %s1 = inlined_call_operand.hbm [shape: bf16[512,256], index: 1, kind: input, shape index: {}]
  %s2 = inlined_call_operand.hbm [shape: f32[1,64], index: 2, kind: input, shape index: {}]
  %s3 = inlined_call_operand.hbm [shape: f32[1,64], index: 3, kind: input, shape index: {}]
  %s4 = inlined_call_operand.vmem [shape: bf16[50,256], index: 4, kind: output, shape index: {}]
  %s5 = sld [smem:[#allocation0]]
  $region38: #{starter_generator_forward.6} parent=0
    _
  %s7 = ssub.s32 1, %s5
  %s8 = scalar_select 0, %s7, %s5
  $region1: #{starter_generator_forward.6} parent=0
    #allocation2 [shape = 'u8[262144]{0}', space=vmem, size = 0x40000, scoped, tag = 'input window, operand 1, single buffered']
    #allocation3 [shape = 's32[1]{0}', space=sflag, size = 0x4, scoped, tag = 'scoped memory for starter_generator_forward.6']
    #allocation4 [shape = 'u8[512]{0}', space=vmem, size = 0x400, scoped, tag = 'input window, operand 2, single buffered']
    #allocation5 [shape = 's32[1]{0}', space=sflag, size = 0x4, scoped, tag = 'scoped memory for starter_generator_forward.6']
    #allocation6 [shape = 'u8[512]{0}', space=vmem, size = 0x400, scoped, tag = 'input window, operand 3, single buffered']
    %9 = vsyncpa [#allocation3], 0
    %10 = vsyncpa [#allocation5], 0
    // Predicated region
    $region2: #{starter_generator_forward.6} parent=1 // pred_check
      _
    $region3: #{starter_generator_forward.6} parent=1 // pred_check_branch
      %12 = sbr.rel (0) target = $region5
    $region4: #{starter_generator_forward.6} parent=1 // pred_region
      _
    $region5: #{starter_generator_forward.6} parent=1 // pred_fallthru
      _
    // Predicated region
    $region6: #{starter_generator_forward.6} parent=1 // pred_check
      _
    $region7: #{starter_generator_forward.6} parent=1 // pred_check_branch
      %14 = sbr.rel (0) target = $region9
    $region8: #{starter_generator_forward.6} parent=1 // pred_region
      %s16 = ssub.s32 8192, 8192
      %17 = vsyncadd [#allocation3], %s16
      %s18 = sshll.u32 [#allocation2], 4
      %s19 = int_to_ptr.vmem [resolvable:$true] %s18
      %24 = dma.hbm_to_vmem [thread:$0]  %s1, 8192, %s19, [#allocation3], 128, 128, 8
    $region9: #{starter_generator_forward.6} parent=1 // pred_fallthru
      _
    // Predicated region
    $region10: #{starter_generator_forward.6} parent=1 // pred_check
      _
    $region11: #{starter_generator_forward.6} parent=1 // pred_check_branch
      %26 = sbr.rel (0) target = $region13
    $region12: #{starter_generator_forward.6} parent=1 // pred_region
      %s28 = ssub.s32 16, 16
      %29 = vsyncadd [#allocation5], %s28
      %s31 = sshll.u32 [#allocation4], 4
      %s32 = int_to_ptr.vmem [resolvable:$true] %s31
      %34 = dma.hbm_to_vmem [thread:$0]  %s2, 16, %s32, [#allocation5]
    $region13: #{starter_generator_forward.6} parent=1 // pred_fallthru
      _
    // Predicated region
    $region14: #{starter_generator_forward.6} parent=1 // pred_check
      _
    $region15: #{starter_generator_forward.6} parent=1 // pred_check_branch
      %36 = sbr.rel (0) target = $region17
    $region16: #{starter_generator_forward.6} parent=1 // pred_region
      %s38 = ssub.s32 16, 16
      %39 = vsyncadd [#allocation5], %s38
      %s41 = sshll.u32 [#allocation6], 4
      %s42 = int_to_ptr.vmem [resolvable:$true] %s41
      %44 = dma.hbm_to_vmem [thread:$0]  %s3, 16, %s42, [#allocation5]
    $region17: #{starter_generator_forward.6} parent=1 // pred_fallthru
      _
    // Predicated region
    $region18: #{starter_generator_forward.6} parent=1 // pred_check
      _
    $region19: #{starter_generator_forward.6} parent=1 // pred_check_branch
      %46 = sbr.rel (0) target = $region21
    $region20: #{starter_generator_forward.6} parent=1 // pred_region
      %47 = dma.done [#allocation3], 8192
    $region21: #{starter_generator_forward.6} parent=1 // pred_fallthru
      _
    // Predicated region
    $region22: #{starter_generator_forward.6} parent=1 // pred_check
      _
    $region23: #{starter_generator_forward.6} parent=1 // pred_check_branch
      %49 = sbr.rel (0) target = $region25
    $region24: #{starter_generator_forward.6} parent=1 // pred_region
      %50 = dma.done [#allocation5], 16
    $region25: #{starter_generator_forward.6} parent=1 // pred_fallthru
      _
    // Predicated region
    $region26: #{starter_generator_forward.6} parent=1 // pred_check
      _
    $region27: #{starter_generator_forward.6} parent=1 // pred_check_branch
      %52 = sbr.rel (0) target = $region29
    $region28: #{starter_generator_forward.6} parent=1 // pred_region
      %53 = dma.done [#allocation5], 16
    $region29: #{starter_generator_forward.6} parent=1 // pred_fallthru
      _
    %v54 = vld [vmem:[%s0] sm:$0xff]
    %v55 = vld [vmem:[%s0 + $0x8] sm:$0xff]
    %v56 = vld [vmem:[%s0 + $0x10] sm:$0xff]
    %v57 = vld [vmem:[%s0 + $0x18] sm:$0xff]
    %v58 = vld [vmem:[%s0 + $0x20] sm:$0xff]
    %v59 = vld [vmem:[%s0 + $0x28] sm:$0xff]
    %v60 = vld [vmem:[%s0 + $0x30] sm:$0xff]
    %v61 = vld [vmem:[%s0 + $0x38] sm:$0xff]
    %v62 = vld [vmem:[%s0 + $0x40] sm:$0xff]
    %v63 = vld [vmem:[%s0 + $0x48] sm:$0xff]
    %v64 = vld [vmem:[%s0 + $0x50] sm:$0xff]
    %v65 = vld [vmem:[%s0 + $0x58] sm:$0xff]
    %v66 = vld [vmem:[%s0 + $0x60] sm:$0x11]
    %v67 = vld [vmem:[%s0 + $0x68] sm:$0x11]
    %v68 = vld [vmem:[#allocation2] sm:$0xff]
    %v69 = vld [vmem:[#allocation2 + $0x8] sm:$0xff]
    %v70 = vld [vmem:[#allocation2 + $0x10] sm:$0xff]
    %v71 = vld [vmem:[#allocation2 + $0x18] sm:$0xff]
    %v72 = vld [vmem:[#allocation2 + $0x20] sm:$0xff]
    %v73 = vld [vmem:[#allocation2 + $0x28] sm:$0xff]
    %v74 = vld [vmem:[#allocation2 + $0x30] sm:$0xff]
    %v75 = vld [vmem:[#allocation2 + $0x38] sm:$0xff]
    %v76 = vld [vmem:[#allocation2 + $0x40] sm:$0xff]
    %v77 = vld [vmem:[#allocation2 + $0x48] sm:$0xff]
    %v78 = vld [vmem:[#allocation2 + $0x50] sm:$0xff]
    %v79 = vld [vmem:[#allocation2 + $0x58] sm:$0xff]
    %v80 = vld [vmem:[#allocation2 + $0x60] sm:$0xff]
    %v81 = vld [vmem:[#allocation2 + $0x68] sm:$0xff]
    %v82 = vld [vmem:[#allocation2 + $0x70] sm:$0xff]
    %v83 = vld [vmem:[#allocation2 + $0x78] sm:$0xff]
    %v84 = vld [vmem:[#allocation2 + $0x80] sm:$0xff]
    %v85 = vld [vmem:[#allocation2 + $0x88] sm:$0xff]
    %v86 = vld [vmem:[#allocation2 + $0x90] sm:$0xff]
    %v87 = vld [vmem:[#allocation2 + $0x98] sm:$0xff]
    %v88 = vld [vmem:[#allocation2 + $0xa0] sm:$0xff]
    %v89 = vld [vmem:[#allocation2 + $0xa8] sm:$0xff]
    %v90 = vld [vmem:[#allocation2 + $0xb0] sm:$0xff]
    %v91 = vld [vmem:[#allocation2 + $0xb8] sm:$0xff]
    %v92 = vld [vmem:[#allocation2 + $0xc0] sm:$0xff]
    %v93 = vld [vmem:[#allocation2 + $0xc8] sm:$0xff]
    %v94 = vld [vmem:[#allocation2 + $0xd0] sm:$0xff]
    %v95 = vld [vmem:[#allocation2 + $0xd8] sm:$0xff]
    %v96 = vld [vmem:[#allocation2 + $0xe0] sm:$0xff]
    %v97 = vld [vmem:[#allocation2 + $0xe8] sm:$0xff]
    %v98 = vld [vmem:[#allocation2 + $0xf0] sm:$0xff]
    %v99 = vld [vmem:[#allocation2 + $0xf8] sm:$0xff]
    %v100 = vld [vmem:[#allocation2 + $0x100] sm:$0xff]
    %v101 = vld [vmem:[#allocation2 + $0x108] sm:$0xff]
    %v102 = vld [vmem:[#allocation2 + $0x110] sm:$0xff]
    %v103 = vld [vmem:[#allocation2 + $0x118] sm:$0xff]
    %v104 = vld [vmem:[#allocation2 + $0x120] sm:$0xff]
    %v105 = vld [vmem:[#allocation2 + $0x128] sm:$0xff]
    %v106 = vld [vmem:[#allocation2 + $0x130] sm:$0xff]
    %v107 = vld [vmem:[#allocation2 + $0x138] sm:$0xff]
    %v108 = vld [vmem:[#allocation2 + $0x140] sm:$0xff]
    %v109 = vld [vmem:[#allocation2 + $0x148] sm:$0xff]
    %v110 = vld [vmem:[#allocation2 + $0x150] sm:$0xff]
    %v111 = vld [vmem:[#allocation2 + $0x158] sm:$0xff]
    %v112 = vld [vmem:[#allocation2 + $0x160] sm:$0xff]
    %v113 = vld [vmem:[#allocation2 + $0x168] sm:$0xff]
    %v114 = vld [vmem:[#allocation2 + $0x170] sm:$0xff]
    %v115 = vld [vmem:[#allocation2 + $0x178] sm:$0xff]
    %v116 = vld [vmem:[#allocation2 + $0x180] sm:$0xff]
    %v117 = vld [vmem:[#allocation2 + $0x188] sm:$0xff]
    %v118 = vld [vmem:[#allocation2 + $0x190] sm:$0xff]
    %v119 = vld [vmem:[#allocation2 + $0x198] sm:$0xff]
    %v120 = vld [vmem:[#allocation2 + $0x1a0] sm:$0xff]
    %v121 = vld [vmem:[#allocation2 + $0x1a8] sm:$0xff]
    %v122 = vld [vmem:[#allocation2 + $0x1b0] sm:$0xff]
    %v123 = vld [vmem:[#allocation2 + $0x1b8] sm:$0xff]
    %v124 = vld [vmem:[#allocation2 + $0x1c0] sm:$0xff]
    %v125 = vld [vmem:[#allocation2 + $0x1c8] sm:$0xff]
    %v126 = vld [vmem:[#allocation2 + $0x1d0] sm:$0xff]
    %v127 = vld [vmem:[#allocation2 + $0x1d8] sm:$0xff]
    %v128 = vld [vmem:[#allocation2 + $0x1e0] sm:$0xff]
    %v129 = vld [vmem:[#allocation2 + $0x1e8] sm:$0xff]
    %v130 = vld [vmem:[#allocation2 + $0x1f0] sm:$0xff]
    %v131 = vld [vmem:[#allocation2 + $0x1f8] sm:$0xff]
    %v146 = vunpack.c.l.b16 %v54
    %v147 = vunpack.c.h.b16 %v54
    %v148 = vunpack.c.l.b16 %v55
    %v149 = vunpack.c.h.b16 %v55
    %v150 = vunpack.c.l.b16 %v56
    %v151 = vunpack.c.h.b16 %v56
    %v152 = vunpack.c.l.b16 %v57
    %v153 = vunpack.c.h.b16 %v57
    %v154 = vunpack.c.l.b16 %v58
    %v155 = vunpack.c.h.b16 %v58
    %v156 = vunpack.c.l.b16 %v59
    %v157 = vunpack.c.h.b16 %v59
    %v158 = vunpack.c.l.b16 %v60
    %v159 = vunpack.c.h.b16 %v60
    %v160 = vunpack.c.l.b16 %v61
    %v161 = vunpack.c.h.b16 %v61
    %v162 = vunpack.c.l.b16 %v62
    %v163 = vunpack.c.h.b16 %v62
    %v164 = vunpack.c.l.b16 %v63
    %v165 = vunpack.c.h.b16 %v63
    %v166 = vunpack.c.l.b16 %v64
    %v167 = vunpack.c.h.b16 %v64
    %v168 = vunpack.c.l.b16 %v65
    %v169 = vunpack.c.h.b16 %v65
    %v170 = vunpack.c.l.b16 %v66
    %v171 = vunpack.c.h.b16 %v66
    %v172 = vunpack.c.l.b16 %v67
    %v173 = vunpack.c.h.b16 %v67
    %v174 = vpack.c.b16 %v150, %v146
    %v175 = vpack.c.b16 %v151, %v147
    %v176 = vpack.c.b16 %v152, %v148
    %v177 = vpack.c.b16 %v153, %v149
    %v178 = vpack.c.b16 %v158, %v154
    %v179 = vpack.c.b16 %v159, %v155
    %v180 = vpack.c.b16 %v160, %v156
    %v181 = vpack.c.b16 %v161, %v157
    %v182 = vpack.c.b16 %v166, %v162
    %v183 = vpack.c.b16 %v167, %v163
    %v184 = vpack.c.b16 %v168, %v164
    %v185 = vpack.c.b16 %v169, %v165
    %v186 = vpack.c.b16 %v170, %v170
    %v187 = vpack.c.b16 %v171, %v171
    %v188 = vpack.c.b16 %v172, %v172
    %v189 = vpack.c.b16 %v173, %v173
    %v270 = vunpack.c.l.b16 %v68
    %v271 = vunpack.c.h.b16 %v68
    %v272 = vunpack.c.l.b16 %v69
    %v273 = vunpack.c.h.b16 %v69
    %v274 = vunpack.c.l.b16 %v70
    %v275 = vunpack.c.h.b16 %v70
    %v276 = vunpack.c.l.b16 %v71
    %v277 = vunpack.c.h.b16 %v71
    %v278 = vunpack.c.l.b16 %v72
    %v279 = vunpack.c.h.b16 %v72
    %v280 = vunpack.c.l.b16 %v73
    %v281 = vunpack.c.h.b16 %v73
    %v282 = vunpack.c.l.b16 %v74
    %v283 = vunpack.c.h.b16 %v74
    %v284 = vunpack.c.l.b16 %v75
    %v285 = vunpack.c.h.b16 %v75
    %v286 = vunpack.c.l.b16 %v76
    %v287 = vunpack.c.h.b16 %v76
    %v288 = vunpack.c.l.b16 %v77
    %v289 = vunpack.c.h.b16 %v77
    %v290 = vunpack.c.l.b16 %v78
    %v291 = vunpack.c.h.b16 %v78
    %v292 = vunpack.c.l.b16 %v79
    %v293 = vunpack.c.h.b16 %v79
    %v294 = vunpack.c.l.b16 %v80
    %v295 = vunpack.c.h.b16 %v80
    %v296 = vunpack.c.l.b16 %v81
    %v297 = vunpack.c.h.b16 %v81
    %v298 = vunpack.c.l.b16 %v82
    %v299 = vunpack.c.h.b16 %v82
    %v300 = vunpack.c.l.b16 %v83
    %v301 = vunpack.c.h.b16 %v83
    %v302 = vunpack.c.l.b16 %v84
    %v303 = vunpack.c.h.b16 %v84
    %v304 = vunpack.c.l.b16 %v85
    %v305 = vunpack.c.h.b16 %v85
    %v306 = vunpack.c.l.b16 %v86
    %v307 = vunpack.c.h.b16 %v86
    %v308 = vunpack.c.l.b16 %v87
    %v309 = vunpack.c.h.b16 %v87
    %v310 = vunpack.c.l.b16 %v88
    %v311 = vunpack.c.h.b16 %v88
    %v312 = vunpack.c.l.b16 %v89
    %v313 = vunpack.c.h.b16 %v89
    %v314 = vunpack.c.l.b16 %v90
    %v315 = vunpack.c.h.b16 %v90
    %v316 = vunpack.c.l.b16 %v91
    %v317 = vunpack.c.h.b16 %v91
    %v318 = vunpack.c.l.b16 %v92
    %v319 = vunpack.c.h.b16 %v92
    %v320 = vunpack.c.l.b16 %v93
    %v321 = vunpack.c.h.b16 %v93
    %v322 = vunpack.c.l.b16 %v94
    %v323 = vunpack.c.h.b16 %v94
    %v324 = vunpack.c.l.b16 %v95
    %v325 = vunpack.c.h.b16 %v95
    %v326 = vunpack.c.l.b16 %v96
    %v327 = vunpack.c.h.b16 %v96
    %v328 = vunpack.c.l.b16 %v97
    %v329 = vunpack.c.h.b16 %v97
    %v330 = vunpack.c.l.b16 %v98
    %v331 = vunpack.c.h.b16 %v98
    %v332 = vunpack.c.l.b16 %v99
    %v333 = vunpack.c.h.b16 %v99
    %v334 = vunpack.c.l.b16 %v100
    %v335 = vunpack.c.h.b16 %v100
    %v336 = vunpack.c.l.b16 %v101
    %v337 = vunpack.c.h.b16 %v101
    %v338 = vunpack.c.l.b16 %v102
    %v339 = vunpack.c.h.b16 %v102
    %v340 = vunpack.c.l.b16 %v103
    %v341 = vunpack.c.h.b16 %v103
    %v342 = vunpack.c.l.b16 %v104
    %v343 = vunpack.c.h.b16 %v104
    %v344 = vunpack.c.l.b16 %v105
    %v345 = vunpack.c.h.b16 %v105
    %v346 = vunpack.c.l.b16 %v106
    %v347 = vunpack.c.h.b16 %v106
    %v348 = vunpack.c.l.b16 %v107
    %v349 = vunpack.c.h.b16 %v107
    %v350 = vunpack.c.l.b16 %v108
    %v351 = vunpack.c.h.b16 %v108
    %v352 = vunpack.c.l.b16 %v109
    %v353 = vunpack.c.h.b16 %v109
    %v354 = vunpack.c.l.b16 %v110
    %v355 = vunpack.c.h.b16 %v110
    %v356 = vunpack.c.l.b16 %v111
    %v357 = vunpack.c.h.b16 %v111
    %v358 = vunpack.c.l.b16 %v112
    %v359 = vunpack.c.h.b16 %v112
    %v360 = vunpack.c.l.b16 %v113
    %v361 = vunpack.c.h.b16 %v113
    %v362 = vunpack.c.l.b16 %v114
    %v363 = vunpack.c.h.b16 %v114
    %v364 = vunpack.c.l.b16 %v115
    %v365 = vunpack.c.h.b16 %v115
    %v366 = vunpack.c.l.b16 %v116
    %v367 = vunpack.c.h.b16 %v116
    %v368 = vunpack.c.l.b16 %v117
    %v369 = vunpack.c.h.b16 %v117
    %v370 = vunpack.c.l.b16 %v118
    %v371 = vunpack.c.h.b16 %v118
    %v372 = vunpack.c.l.b16 %v119
    %v373 = vunpack.c.h.b16 %v119
    %v374 = vunpack.c.l.b16 %v120
    %v375 = vunpack.c.h.b16 %v120
    %v376 = vunpack.c.l.b16 %v121
    %v377 = vunpack.c.h.b16 %v121
    %v378 = vunpack.c.l.b16 %v122
    %v379 = vunpack.c.h.b16 %v122
    %v380 = vunpack.c.l.b16 %v123
    %v381 = vunpack.c.h.b16 %v123
    %v382 = vunpack.c.l.b16 %v124
    %v383 = vunpack.c.h.b16 %v124
    %v384 = vunpack.c.l.b16 %v125
    %v385 = vunpack.c.h.b16 %v125
    %v386 = vunpack.c.l.b16 %v126
    %v387 = vunpack.c.h.b16 %v126
    %v388 = vunpack.c.l.b16 %v127
    %v389 = vunpack.c.h.b16 %v127
    %v390 = vunpack.c.l.b16 %v128
    %v391 = vunpack.c.h.b16 %v128
    %v392 = vunpack.c.l.b16 %v129
    %v393 = vunpack.c.h.b16 %v129
    %v394 = vunpack.c.l.b16 %v130
    %v395 = vunpack.c.h.b16 %v130
    %v396 = vunpack.c.l.b16 %v131
    %v397 = vunpack.c.h.b16 %v131
    %v398 = vpack.c.b16 %v272, %v270
    %v399 = vpack.c.b16 %v273, %v271
    %v400 = vpack.c.b16 %v276, %v274
    %v401 = vpack.c.b16 %v277, %v275
    %v402 = vpack.c.b16 %v280, %v278
    %v403 = vpack.c.b16 %v281, %v279
    %v404 = vpack.c.b16 %v284, %v282
    %v405 = vpack.c.b16 %v285, %v283
    %v406 = vpack.c.b16 %v288, %v286
    %v407 = vpack.c.b16 %v289, %v287
    %v408 = vpack.c.b16 %v292, %v290
    %v409 = vpack.c.b16 %v293, %v291
    %v410 = vpack.c.b16 %v296, %v294
    %v411 = vpack.c.b16 %v297, %v295
    %v412 = vpack.c.b16 %v300, %v298
    %v413 = vpack.c.b16 %v301, %v299
    %v414 = vpack.c.b16 %v304, %v302
    %v415 = vpack.c.b16 %v305, %v303
    %v416 = vpack.c.b16 %v308, %v306
    %v417 = vpack.c.b16 %v309, %v307
    %v418 = vpack.c.b16 %v312, %v310
    %v419 = vpack.c.b16 %v313, %v311
    %v420 = vpack.c.b16 %v316, %v314
    %v421 = vpack.c.b16 %v317, %v315
    %v422 = vpack.c.b16 %v320, %v318
    %v423 = vpack.c.b16 %v321, %v319
    %v424 = vpack.c.b16 %v324, %v322
    %v425 = vpack.c.b16 %v325, %v323
    %v426 = vpack.c.b16 %v328, %v326
    %v427 = vpack.c.b16 %v329, %v327
    %v428 = vpack.c.b16 %v332, %v330
    %v429 = vpack.c.b16 %v333, %v331
    %v430 = vpack.c.b16 %v336, %v334
    %v431 = vpack.c.b16 %v337, %v335
    %v432 = vpack.c.b16 %v340, %v338
    %v433 = vpack.c.b16 %v341, %v339
    %v434 = vpack.c.b16 %v344, %v342
    %v435 = vpack.c.b16 %v345, %v343
    %v436 = vpack.c.b16 %v348, %v346
    %v437 = vpack.c.b16 %v349, %v347
    %v438 = vpack.c.b16 %v352, %v350
    %v439 = vpack.c.b16 %v353, %v351
    %v440 = vpack.c.b16 %v356, %v354
    %v441 = vpack.c.b16 %v357, %v355
    %v442 = vpack.c.b16 %v360, %v358
    %v443 = vpack.c.b16 %v361, %v359
    %v444 = vpack.c.b16 %v364, %v362
    %v445 = vpack.c.b16 %v365, %v363
    %v446 = vpack.c.b16 %v368, %v366
    %v447 = vpack.c.b16 %v369, %v367
    %v448 = vpack.c.b16 %v372, %v370
    %v449 = vpack.c.b16 %v373, %v371
    %v450 = vpack.c.b16 %v376, %v374
    %v451 = vpack.c.b16 %v377, %v375
    %v452 = vpack.c.b16 %v380, %v378
    %v453 = vpack.c.b16 %v381, %v379
    %v454 = vpack.c.b16 %v384, %v382
    %v455 = vpack.c.b16 %v385, %v383
    %v456 = vpack.c.b16 %v388, %v386
    %v457 = vpack.c.b16 %v389, %v387
    %v458 = vpack.c.b16 %v392, %v390
    %v459 = vpack.c.b16 %v393, %v391
    %v460 = vpack.c.b16 %v396, %v394
    %v461 = vpack.c.b16 %v397, %v395
    %526 = vmatprep.subr.bf16.mxu0 %v399
    %527 = vmatpush1.bf16.msra.mxu0 %v398
    %528 = vmatprep.subr.bf16.mxu0 %v401
    %529 = vmatpush1.bf16.msra.mxu0 %v400
    %530 = vmatprep.subr.bf16.mxu0 %v403
    %531 = vmatpush1.bf16.msra.mxu0 %v402
    %532 = vmatprep.subr.bf16.mxu0 %v405
    %533 = vmatpush1.bf16.msra.mxu0 %v404
    %534 = vmatprep.subr.bf16.mxu0 %v407
    %535 = vmatpush1.bf16.msra.mxu0 %v406
    %536 = vmatprep.subr.bf16.mxu0 %v409
    %537 = vmatpush1.bf16.msra.mxu0 %v408
    %538 = vmatprep.subr.bf16.mxu0 %v411
    %539 = vmatpush1.bf16.msra.mxu0 %v410
    %540 = vmatprep.subr.bf16.mxu0 %v413
    %541 = vmatpush1.bf16.msra.mxu0 %v412
    %542 = vmatprep.subr.bf16.mxu0 %v415
    %543 = vmatpush1.bf16.msra.mxu0 %v414
    %544 = vmatprep.subr.bf16.mxu0 %v417
    %545 = vmatpush1.bf16.msra.mxu0 %v416
    %546 = vmatprep.subr.bf16.mxu0 %v419
    %547 = vmatpush1.bf16.msra.mxu0 %v418
    %548 = vmatprep.subr.bf16.mxu0 %v421
    %549 = vmatpush1.bf16.msra.mxu0 %v420
    %550 = vmatprep.subr.bf16.mxu0 %v423
    %551 = vmatpush1.bf16.msra.mxu0 %v422
    %552 = vmatprep.subr.bf16.mxu0 %v425
    %553 = vmatpush1.bf16.msra.mxu0 %v424
    %554 = vmatprep.subr.bf16.mxu0 %v427
    %555 = vmatpush1.bf16.msra.mxu0 %v426
    %556 = vmatprep.subr.bf16.mxu0 %v429
    %557 = vmatpush1.bf16.msra.mxu0 %v428
    %558 = vmatprep.mubr.bf16.mxu0 %v175
    %559 = vmatmul.mubr.bf16.gmra.mrb[0].mxu0 %v174
    %v560 = vpop.f32.mrb[0].mxu0
    %v561 = vadd.f32 0.0, %v560
    %v562 = vpop.f32.mrb[0].mxu0
    %v563 = vadd.f32 0.0, %v562
    %v564 = vpop.f32.mrb[0].mxu0
    %v565 = vadd.f32 0.0, %v564
    %v566 = vpop.f32.mrb[0].mxu0
    %v567 = vadd.f32 0.0, %v566
    %568 = vmatprep.mubr.bf16.mxu0 %v179
    %569 = vmatmul.mubr.bf16.gmra.mrb[0].mxu0 %v178
    %v570 = vpop.f32.mrb[0].mxu0
    %v571 = vadd.f32 0.0, %v570
    %v572 = vpop.f32.mrb[0].mxu0
    %v573 = vadd.f32 0.0, %v572
    %v574 = vpop.f32.mrb[0].mxu0
    %v575 = vadd.f32 0.0, %v574
    %v576 = vpop.f32.mrb[0].mxu0
    %v577 = vadd.f32 0.0, %v576
    %578 = vmatprep.mubr.bf16.mxu0 %v183
    %579 = vmatmul.mubr.bf16.gmra.mrb[0].mxu0 %v182
    %v580 = vpop.f32.mrb[0].mxu0
    %v581 = vadd.f32 0.0, %v580
    %v582 = vpop.f32.mrb[0].mxu0
    %v583 = vadd.f32 0.0, %v582
    %v584 = vpop.f32.mrb[0].mxu0
    %v585 = vadd.f32 0.0, %v584
    %v586 = vpop.f32.mrb[0].mxu0
    %v587 = vadd.f32 0.0, %v586
    %588 = vmatprep.mubr.bf16.mxu0 %v187
    %589 = vmatmul.mubr.bf16.gmra.mrb[0].mxu0 %v186
    %v590 = vpop.f32.mrb[0].mxu0
    %v591 = vadd.f32 0.0, %v590
    %v592 = vpop.f32.mrb[0].mxu0
    %v593 = vadd.f32 0.0, %v592
    %v594 = vpop.f32.mrb[0].mxu0
    %v595 = vpop.f32.mrb[0].mxu0
    %596 = vdwg.mxu0
    %597 = vmatprep.subr.bf16.mxu0 %v431
    %598 = vmatpush1.bf16.msra.mxu0 %v430
    %599 = vmatprep.subr.bf16.mxu0 %v433
    %600 = vmatpush1.bf16.msra.mxu0 %v432
    %601 = vmatprep.subr.bf16.mxu0 %v435
    %602 = vmatpush1.bf16.msra.mxu0 %v434
    %603 = vmatprep.subr.bf16.mxu0 %v437
    %604 = vmatpush1.bf16.msra.mxu0 %v436
    %605 = vmatprep.subr.bf16.mxu0 %v439
    %606 = vmatpush1.bf16.msra.mxu0 %v438
    %607 = vmatprep.subr.bf16.mxu0 %v441
    %608 = vmatpush1.bf16.msra.mxu0 %v440
    %609 = vmatprep.subr.bf16.mxu0 %v443
    %610 = vmatpush1.bf16.msra.mxu0 %v442
    %611 = vmatprep.subr.bf16.mxu0 %v445
    %612 = vmatpush1.bf16.msra.mxu0 %v444
    %613 = vmatprep.subr.bf16.mxu0 %v447
    %614 = vmatpush1.bf16.msra.mxu0 %v446
    %615 = vmatprep.subr.bf16.mxu0 %v449
    %616 = vmatpush1.bf16.msra.mxu0 %v448
    %617 = vmatprep.subr.bf16.mxu0 %v451
    %618 = vmatpush1.bf16.msra.mxu0 %v450
    %619 = vmatprep.subr.bf16.mxu0 %v453
    %620 = vmatpush1.bf16.msra.mxu0 %v452
    %621 = vmatprep.subr.bf16.mxu0 %v455
    %622 = vmatpush1.bf16.msra.mxu0 %v454
    %623 = vmatprep.subr.bf16.mxu0 %v457
    %624 = vmatpush1.bf16.msra.mxu0 %v456
    %625 = vmatprep.subr.bf16.mxu0 %v459
    %626 = vmatpush1.bf16.msra.mxu0 %v458
    %627 = vmatprep.subr.bf16.mxu0 %v461
    %628 = vmatpush1.bf16.msra.mxu0 %v460
    %629 = vmatprep.mubr.bf16.mxu0 %v177
    %630 = vmatmul.mubr.bf16.gmra.mrb[0].mxu0 %v176
    %v631 = vpop.f32.mrb[0].mxu0
    %v632 = vadd.f32 %v561, %v631
    %v633 = vpop.f32.mrb[0].mxu0
    %v634 = vadd.f32 %v563, %v633
    %v635 = vpop.f32.mrb[0].mxu0
    %v636 = vadd.f32 %v565, %v635
    %v637 = vpop.f32.mrb[0].mxu0
    %v638 = vadd.f32 %v567, %v637
    %639 = vmatprep.mubr.bf16.mxu0 %v181
    %640 = vmatmul.mubr.bf16.gmra.mrb[0].mxu0 %v180
    %v641 = vpop.f32.mrb[0].mxu0
    %v642 = vadd.f32 %v571, %v641
    %v643 = vpop.f32.mrb[0].mxu0
    %v644 = vadd.f32 %v573, %v643
    %v645 = vpop.f32.mrb[0].mxu0
    %v646 = vadd.f32 %v575, %v645
    %v647 = vpop.f32.mrb[0].mxu0
    %v648 = vadd.f32 %v577, %v647
    %649 = vmatprep.mubr.bf16.mxu0 %v185
    %650 = vmatmul.mubr.bf16.gmra.mrb[0].mxu0 %v184
    %v651 = vpop.f32.mrb[0].mxu0
    %v652 = vadd.f32 %v581, %v651
    %v653 = vpop.f32.mrb[0].mxu0
    %v654 = vadd.f32 %v583, %v653
    %v655 = vpop.f32.mrb[0].mxu0
    %v656 = vadd.f32 %v585, %v655
    %v657 = vpop.f32.mrb[0].mxu0
    %v658 = vadd.f32 %v587, %v657
    %659 = vmatprep.mubr.bf16.mxu0 %v189
    %660 = vmatmul.mubr.bf16.gmra.mrb[0].mxu0 %v188
    %v661 = vpop.f32.mrb[0].mxu0
    %v662 = vadd.f32 %v591, %v661
    %v663 = vpop.f32.mrb[0].mxu0
    %v664 = vadd.f32 %v593, %v663
    %v665 = vpop.f32.mrb[0].mxu0
    %v666 = vpop.f32.mrb[0].mxu0
    %667 = vdwg.mxu0
    %v668 = vadd.f32 %v632, %v636
    %v669 = vadd.f32 %v668, %v642
    %v670 = vadd.f32 %v669, %v646
    %v671 = vadd.f32 %v670, %v652
    %v672 = vadd.f32 %v671, %v656
    %vm673 = vcmask 1041408
    %v674 = vsel %vm673, %v662, 0.0
    %v675 = vadd.f32 %v672, %v674
    %v676 = vrot.slane %v675, 4
    %v677 = vadd.f32 %v675, %v676
    %v678 = vrot.slane %v677, 2
    %v679 = vadd.f32 %v677, %v678
    %v680 = vrot.slane %v679, 1
    %v681 = vadd.f32 %v679, %v680
    %v682 = vadd.f32 %v634, %v638
    %v683 = vadd.f32 %v682, %v644
    %v684 = vadd.f32 %v683, %v648
    %v685 = vadd.f32 %v684, %v654
    %v686 = vadd.f32 %v685, %v658
    %v687 = vsel %vm673, %v664, 0.0
    %v688 = vadd.f32 %v686, %v687
    %v689 = vrot.slane %v688, 4
    %v690 = vadd.f32 %v688, %v689
    %v691 = vrot.slane %v690, 2
    %v692 = vadd.f32 %v690, %v691
    %v693 = vrot.slane %v692, 1
    %v694 = vadd.f32 %v692, %v693
    %v695 = vmul.f32 %v632, %v632
    %v696 = vmul.f32 %v634, %v634
    %v697 = vmul.f32 %v636, %v636
    %v698 = vmul.f32 %v638, %v638
    %v699 = vmul.f32 %v642, %v642
    %v700 = vmul.f32 %v644, %v644
    %v701 = vmul.f32 %v646, %v646
    %v702 = vmul.f32 %v648, %v648
    %v703 = vmul.f32 %v652, %v652
    %v704 = vmul.f32 %v654, %v654
    %v705 = vmul.f32 %v656, %v656
    %v706 = vmul.f32 %v658, %v658
    %v707 = vmul.f32 %v662, %v662
    %v708 = vmul.f32 %v664, %v664
    %v709 = vadd.f32 %v695, %v697
    %v710 = vadd.f32 %v709, %v699
    %v711 = vadd.f32 %v710, %v701
    %v712 = vadd.f32 %v711, %v703
    %v713 = vadd.f32 %v712, %v705
    %v714 = vsel %vm673, %v707, 0.0
    %v715 = vadd.f32 %v713, %v714
    %v716 = vrot.slane %v715, 4
    %v717 = vadd.f32 %v715, %v716
    %v718 = vrot.slane %v717, 2
    %v719 = vadd.f32 %v717, %v718
    %v720 = vrot.slane %v719, 1
    %v721 = vadd.f32 %v719, %v720
    %v722 = vadd.f32 %v696, %v698
    %v723 = vadd.f32 %v722, %v700
    %v724 = vadd.f32 %v723, %v702
    %v725 = vadd.f32 %v724, %v704
    %v726 = vadd.f32 %v725, %v706
    %v727 = vsel %vm673, %v708, 0.0
    %v728 = vadd.f32 %v726, %v727
    %v729 = vrot.slane %v728, 4
    %v730 = vadd.f32 %v728, %v729
    %v731 = vrot.slane %v730, 2
    %v732 = vadd.f32 %v730, %v731
    %v733 = vrot.slane %v732, 1
    %v734 = vadd.f32 %v732, %v733
    %736 = vrot.lane.b32.xlu0 %v681, 64
    %v737 = vpop.permute.xlu0 %736
    %v739 = vadd.f32 %v681, %v737
    %v740 = vadd.f32 %v739, %v694
    %742 = vrot.lane.b32.xlu0 %v694, 64
    %v743 = vpop.permute.xlu0 %742
    %v745 = vadd.f32 %v740, %v743
    %747 = vrot.lane.b32.xlu0 %v721, 64
    %v748 = vpop.permute.xlu0 %747
    %v750 = vadd.f32 %v721, %v748
    %v751 = vadd.f32 %v750, %v734
    %753 = vrot.lane.b32.xlu0 %v734, 64
    %v754 = vpop.permute.xlu0 %753
    %v756 = vadd.f32 %v751, %v754
    %v757 = vmul.f32 %v745, 0.005
    %v758 = vmul.f32 %v756, 0.005
    %v759 = vmul.f32 %v757, %v757
    %v760 = vsub.f32 %v758, %v759
    %v761 = vld [vmem:[#allocation4] sm:$0x1]
    %v762 = vadd.f32 %v760, 1e-05
    %v763 = vrsqrt.pop %v762
    %v764 = vmul.f32 %v761, %v763
    %v765 = vld [vmem:[#allocation6] sm:$0x1]
    %v766 = vmul.f32 %v757, %v764
    %v767 = vsub.f32 %v765, %v766
    %v769 = vlaneseq
    %v770 = vshrl.u32 %v769, 7
    %v771 = vsub.s32 0, %v770
    %v772 = vrot.slane %v764, %v771
    %773 = vrot.lane.b32.xlu0 %v772, 64
    %v774 = vpop.permute.xlu0 %773
    %vm776 = vcmask 523264
    %v777 = vsel %vm776, %v764, %v774
    %v779 = vlaneseq
    %v780 = vshrl.u32 %v779, 7
    %v781 = vsub.s32 0, %v780
    %v782 = vrot.slane %v767, %v781
    %783 = vrot.lane.b32.xlu0 %v782, 64
    %v784 = vpop.permute.xlu0 %783
    %v786 = vsel %vm776, %v767, %v784
    %v787 = vlaneseq
    %v788 = vshrl.u32 %v787, 7
    %v789 = vsub.s32 0, %v788
    %v790 = vrot.slane %v777, %v789
    %v791 = vmul.f32 %v632, %v790
    %v792 = vmul.f32 %v634, %v790
    %v793 = vmul.f32 %v636, %v790
    %v794 = vmul.f32 %v638, %v790
    %v795 = vmul.f32 %v642, %v790
    %v796 = vmul.f32 %v644, %v790
    %v797 = vmul.f32 %v646, %v790
    %v798 = vmul.f32 %v648, %v790
    %v799 = vmul.f32 %v652, %v790
    %v800 = vmul.f32 %v654, %v790
    %v801 = vmul.f32 %v656, %v790
    %v802 = vmul.f32 %v658, %v790
    %v803 = vmul.f32 %v662, %v790
    %v804 = vmul.f32 %v664, %v790
    %v805 = vlaneseq
    %v806 = vshrl.u32 %v805, 7
    %v807 = vsub.s32 0, %v806
    %v808 = vrot.slane %v786, %v807
    %v809 = vadd.f32 %v791, %v808
    %v810 = vadd.f32 %v792, %v808
    %v811 = vadd.f32 %v793, %v808
    %v812 = vadd.f32 %v794, %v808
    %v813 = vadd.f32 %v795, %v808
    %v814 = vadd.f32 %v796, %v808
    %v815 = vadd.f32 %v797, %v808
    %v816 = vadd.f32 %v798, %v808
    %v817 = vadd.f32 %v799, %v808
    %v818 = vadd.f32 %v800, %v808
    %v819 = vadd.f32 %v801, %v808
    %v820 = vadd.f32 %v802, %v808
    %v821 = vadd.f32 %v803, %v808
    %v822 = vadd.f32 %v804, %v808
    %v823 = vmax.f32 %v809, 0.0
    %v824 = vmax.f32 %v810, 0.0
    %v825 = vmax.f32 %v811, 0.0
    %v826 = vmax.f32 %v812, 0.0
    %v827 = vmax.f32 %v813, 0.0
    %v828 = vmax.f32 %v814, 0.0
    %v829 = vmax.f32 %v815, 0.0
    %v830 = vmax.f32 %v816, 0.0
    %v831 = vmax.f32 %v817, 0.0
    %v832 = vmax.f32 %v818, 0.0
    %v833 = vmax.f32 %v819, 0.0
    %v834 = vmax.f32 %v820, 0.0
    %v835 = vmax.f32 %v821, 0.0
    %v836 = vmax.f32 %v822, 0.0
    %v837 = vpack.c.bf16 %v825, %v823
    %v838 = vpack.c.bf16 %v826, %v824
    %v839 = vpack.c.bf16 %v829, %v827
    %v840 = vpack.c.bf16 %v830, %v828
    %v841 = vpack.c.bf16 %v833, %v831
    %v842 = vpack.c.bf16 %v834, %v832
    %v843 = vpack.c.bf16 %v835, %v835
    %v844 = vpack.c.bf16 %v836, %v836
    %v853 = vunpack.c.l.b16 %v837
    %v854 = vunpack.c.l.b16 %v838
    %v855 = vunpack.c.h.b16 %v837
    %v856 = vunpack.c.h.b16 %v838
    %v857 = vunpack.c.l.b16 %v839
    %v858 = vunpack.c.l.b16 %v840
    %v859 = vunpack.c.h.b16 %v839
    %v860 = vunpack.c.h.b16 %v840
    %v861 = vunpack.c.l.b16 %v841
    %v862 = vunpack.c.l.b16 %v842
    %v863 = vunpack.c.h.b16 %v841
    %v864 = vunpack.c.h.b16 %v842
    %v865 = vunpack.c.l.b16 %v843
    %v866 = vunpack.c.l.b16 %v844
    %v867 = vpack.c.b16 %v854, %v853
    %v868 = vpack.c.b16 %v856, %v855
    %v869 = vpack.c.b16 %v858, %v857
    %v870 = vpack.c.b16 %v860, %v859
    %v871 = vpack.c.b16 %v862, %v861
    %v872 = vpack.c.b16 %v864, %v863
    %v873 = vpack.c.b16 %v866, %v865
    %881 = vst [vmem:[%s4] sm:$0xff] %v867
    %882 = vst [vmem:[%s4 + $0x8] sm:$0xff] %v868
    %883 = vst [vmem:[%s4 + $0x10] sm:$0xff] %v869
    %884 = vst [vmem:[%s4 + $0x18] sm:$0xff] %v870
    %885 = vst [vmem:[%s4 + $0x20] sm:$0xff] %v871
    %886 = vst [vmem:[%s4 + $0x28] sm:$0xff] %v872
    %887 = vst [vmem:[%s4 + $0x30] sm:$0x11] %v873
    // Predicated region
    $region30: #{starter_generator_forward.6} parent=1 // pred_check
      _
    $region31: #{starter_generator_forward.6} parent=1 // pred_check_branch
      %889 = sbr.rel (0) target = $region33
    $region32: #{starter_generator_forward.6} parent=1 // pred_region
      _
    $region33: #{starter_generator_forward.6} parent=1 // pred_fallthru
      _
    // Predicated region
    $region34: #{starter_generator_forward.6} parent=1 // pred_check
      _
    $region35: #{starter_generator_forward.6} parent=1 // pred_check_branch
      %891 = sbr.rel (0) target = $region37
    $region36: #{starter_generator_forward.6} parent=1 // pred_region
      _
    $region37: #{starter_generator_forward.6} parent=1 // pred_fallthru
      _
    %892 = vsyncpa [#allocation3], 1
    %893 = vsyncpa [#allocation5], 1

// kernel: starter_generator_forward.7
$region0: #{starter_generator_forward.7}
  #allocation0 [shape = 'u32[]', space=smem, size = 0x4, offset = 0x4, fixed_abs, tag = 'smem constant byte address 0x4 - core index']
  #allocation1 [shape = 'u32[144,128]{1,0:T(1,128)}', space=vmem, size = 0x12000, scoped, tag = 'internal scratch']
  %s0 = inlined_call_operand.vmem [shape: bf16[256,242], index: 0, kind: input, shape index: {}]
  %s1 = inlined_call_operand.vmem [shape: bf16[128,256], index: 1, kind: input, shape index: {}]
  %s2 = inlined_call_operand.vmem [shape: f32[32,1], index: 2, kind: input, shape index: {}]
  %s3 = inlined_call_operand.vmem [shape: f32[32,1], index: 3, kind: input, shape index: {}]
  %s4 = inlined_call_operand.vmem [shape: bf16[128,242], index: 4, kind: output, shape index: {}]
  %s5 = sld [smem:[#allocation0]]
  $region26: #{starter_generator_forward.7} parent=0
    _
  %s7 = ssub.s32 1, %s5
  %s8 = scalar_select 0, %s7, %s5
  // Predicated region
  $region2: #{starter_generator_forward.7} parent=0 // pred_check
    _
  $region3: #{starter_generator_forward.7} parent=0 // pred_check_branch
    %10 = sbr.rel (0) target = $region5
  $region4: #{starter_generator_forward.7} parent=0 // pred_region
    _
  $region5: #{starter_generator_forward.7} parent=0 // pred_fallthru
    _
  // Predicated region
  $region6: #{starter_generator_forward.7} parent=0 // pred_check
    _
  $region7: #{starter_generator_forward.7} parent=0 // pred_check_branch
    %12 = sbr.rel (0) target = $region9
  $region8: #{starter_generator_forward.7} parent=0 // pred_region
    _
  $region9: #{starter_generator_forward.7} parent=0 // pred_fallthru
    _
  // Predicated region
  $region10: #{starter_generator_forward.7} parent=0 // pred_check
    _
  $region11: #{starter_generator_forward.7} parent=0 // pred_check_branch
    %14 = sbr.rel (0) target = $region13
  $region12: #{starter_generator_forward.7} parent=0 // pred_region
    _
  $region13: #{starter_generator_forward.7} parent=0 // pred_fallthru
    _
  // Predicated region
  $region14: #{starter_generator_forward.7} parent=0 // pred_check
    _
  $region15: #{starter_generator_forward.7} parent=0 // pred_check_branch
    %16 = sbr.rel (0) target = $region17
  $region16: #{starter_generator_forward.7} parent=0 // pred_region
    _
  $region17: #{starter_generator_forward.7} parent=0 // pred_fallthru
    _
  %v17 = vld [vmem:[%s1] sm:$0xff]
  %v18 = vld [vmem:[%s1 + $0x8] sm:$0xff]
  %v19 = vld [vmem:[%s1 + $0x10] sm:$0xff]
  %v20 = vld [vmem:[%s1 + $0x18] sm:$0xff]
  %v21 = vld [vmem:[%s1 + $0x20] sm:$0xff]
  %v22 = vld [vmem:[%s1 + $0x28] sm:$0xff]
  %v23 = vld [vmem:[%s1 + $0x30] sm:$0xff]
  %v24 = vld [vmem:[%s1 + $0x38] sm:$0xff]
  %v25 = vld [vmem:[%s1 + $0x40] sm:$0xff]
  %v26 = vld [vmem:[%s1 + $0x48] sm:$0xff]
  %v27 = vld [vmem:[%s1 + $0x50] sm:$0xff]
  %v28 = vld [vmem:[%s1 + $0x58] sm:$0xff]
  %v29 = vld [vmem:[%s1 + $0x60] sm:$0xff]
  %v30 = vld [vmem:[%s1 + $0x68] sm:$0xff]
  %v31 = vld [vmem:[%s1 + $0x70] sm:$0xff]
  %v32 = vld [vmem:[%s1 + $0x78] sm:$0xff]
  %v33 = vld [vmem:[%s0] sm:$0xff]
  %v34 = vld [vmem:[%s0 + $0x8] sm:$0xff]
  %v35 = vld [vmem:[%s0 + $0x10] sm:$0xff]
  %v36 = vld [vmem:[%s0 + $0x18] sm:$0xff]
  %v37 = vld [vmem:[%s0 + $0x20] sm:$0xff]
  %v38 = vld [vmem:[%s0 + $0x28] sm:$0xff]
  %v39 = vld [vmem:[%s0 + $0x30] sm:$0xff]
  %v40 = vld [vmem:[%s0 + $0x38] sm:$0xff]
  %v41 = vld [vmem:[%s0 + $0x40] sm:$0xff]
  %v42 = vld [vmem:[%s0 + $0x48] sm:$0xff]
  %v43 = vld [vmem:[%s0 + $0x50] sm:$0xff]
  %v44 = vld [vmem:[%s0 + $0x58] sm:$0xff]
  %v45 = vld [vmem:[%s0 + $0x60] sm:$0xff]
  %v46 = vld [vmem:[%s0 + $0x68] sm:$0xff]
  %v47 = vld [vmem:[%s0 + $0x70] sm:$0xff]
  %v48 = vld [vmem:[%s0 + $0x78] sm:$0xff]
  %v49 = vld [vmem:[%s0 + $0x80] sm:$0xff]
  %v50 = vld [vmem:[%s0 + $0x88] sm:$0xff]
  %v51 = vld [vmem:[%s0 + $0x90] sm:$0xff]
  %v52 = vld [vmem:[%s0 + $0x98] sm:$0xff]
  %v53 = vld [vmem:[%s0 + $0xa0] sm:$0xff]
  %v54 = vld [vmem:[%s0 + $0xa8] sm:$0xff]
  %v55 = vld [vmem:[%s0 + $0xb0] sm:$0xff]
  %v56 = vld [vmem:[%s0 + $0xb8] sm:$0xff]
  %v57 = vld [vmem:[%s0 + $0xc0] sm:$0xff]
  %v58 = vld [vmem:[%s0 + $0xc8] sm:$0xff]
  %v59 = vld [vmem:[%s0 + $0xd0] sm:$0xff]
  %v60 = vld [vmem:[%s0 + $0xd8] sm:$0xff]
  %v61 = vld [vmem:[%s0 + $0xe0] sm:$0xff]
  %v62 = vld [vmem:[%s0 + $0xe8] sm:$0xff]
  %v63 = vld [vmem:[%s0 + $0xf0] sm:$0xff]
  %v64 = vld [vmem:[%s0 + $0xf8] sm:$0xff]
  %v81 = vunpack.c.l.b16 %v17
  %v82 = vunpack.c.h.b16 %v17
  %v83 = vunpack.c.l.b16 %v18
  %v84 = vunpack.c.h.b16 %v18
  %v85 = vunpack.c.l.b16 %v19
  %v86 = vunpack.c.h.b16 %v19
  %v87 = vunpack.c.l.b16 %v20
  %v88 = vunpack.c.h.b16 %v20
  %v89 = vunpack.c.l.b16 %v21
  %v90 = vunpack.c.h.b16 %v21
  %v91 = vunpack.c.l.b16 %v22
  %v92 = vunpack.c.h.b16 %v22
  %v93 = vunpack.c.l.b16 %v23
  %v94 = vunpack.c.h.b16 %v23
  %v95 = vunpack.c.l.b16 %v24
  %v96 = vunpack.c.h.b16 %v24
  %v97 = vunpack.c.l.b16 %v25
  %v98 = vunpack.c.h.b16 %v25
  %v99 = vunpack.c.l.b16 %v26
  %v100 = vunpack.c.h.b16 %v26
  %v101 = vunpack.c.l.b16 %v27
  %v102 = vunpack.c.h.b16 %v27
  %v103 = vunpack.c.l.b16 %v28
  %v104 = vunpack.c.h.b16 %v28
  %v105 = vunpack.c.l.b16 %v29
  %v106 = vunpack.c.h.b16 %v29
  %v107 = vunpack.c.l.b16 %v30
  %v108 = vunpack.c.h.b16 %v30
  %v109 = vunpack.c.l.b16 %v31
  %v110 = vunpack.c.h.b16 %v31
  %v111 = vunpack.c.l.b16 %v32
  %v112 = vunpack.c.h.b16 %v32
  %v113 = vpack.c.b16 %v83, %v81
  %v114 = vpack.c.b16 %v84, %v82
  %v115 = vpack.c.b16 %v87, %v85
  %v116 = vpack.c.b16 %v88, %v86
  %v117 = vpack.c.b16 %v91, %v89
  %v118 = vpack.c.b16 %v92, %v90
  %v119 = vpack.c.b16 %v95, %v93
  %v120 = vpack.c.b16 %v96, %v94
  %v121 = vpack.c.b16 %v99, %v97
  %v122 = vpack.c.b16 %v100, %v98
  %v123 = vpack.c.b16 %v103, %v101
  %v124 = vpack.c.b16 %v104, %v102
  %v125 = vpack.c.b16 %v107, %v105
  %v126 = vpack.c.b16 %v108, %v106
  %v127 = vpack.c.b16 %v111, %v109
  %v128 = vpack.c.b16 %v112, %v110
  %v177 = vunpack.c.l.b16 %v33
  %v178 = vunpack.c.h.b16 %v33
  %v179 = vunpack.c.l.b16 %v34
  %v180 = vunpack.c.h.b16 %v34
  %v181 = vunpack.c.l.b16 %v35
  %v182 = vunpack.c.h.b16 %v35
  %v183 = vunpack.c.l.b16 %v36
  %v184 = vunpack.c.h.b16 %v36
  %v185 = vunpack.c.l.b16 %v37
  %v186 = vunpack.c.h.b16 %v37
  %v187 = vunpack.c.l.b16 %v38
  %v188 = vunpack.c.h.b16 %v38
  %v189 = vunpack.c.l.b16 %v39
  %v190 = vunpack.c.h.b16 %v39
  %v191 = vunpack.c.l.b16 %v40
  %v192 = vunpack.c.h.b16 %v40
  %v193 = vunpack.c.l.b16 %v41
  %v194 = vunpack.c.h.b16 %v41
  %v195 = vunpack.c.l.b16 %v42
  %v196 = vunpack.c.h.b16 %v42
  %v197 = vunpack.c.l.b16 %v43
  %v198 = vunpack.c.h.b16 %v43
  %v199 = vunpack.c.l.b16 %v44
  %v200 = vunpack.c.h.b16 %v44
  %v201 = vunpack.c.l.b16 %v45
  %v202 = vunpack.c.h.b16 %v45
  %v203 = vunpack.c.l.b16 %v46
  %v204 = vunpack.c.h.b16 %v46
  %v205 = vunpack.c.l.b16 %v47
  %v206 = vunpack.c.h.b16 %v47
  %v207 = vunpack.c.l.b16 %v48
  %v208 = vunpack.c.h.b16 %v48
  %v209 = vunpack.c.l.b16 %v49
  %v210 = vunpack.c.h.b16 %v49
  %v211 = vunpack.c.l.b16 %v50
  %v212 = vunpack.c.h.b16 %v50
  %v213 = vunpack.c.l.b16 %v51
  %v214 = vunpack.c.h.b16 %v51
  %v215 = vunpack.c.l.b16 %v52
  %v216 = vunpack.c.h.b16 %v52
  %v217 = vunpack.c.l.b16 %v53
  %v218 = vunpack.c.h.b16 %v53
  %v219 = vunpack.c.l.b16 %v54
  %v220 = vunpack.c.h.b16 %v54
  %v221 = vunpack.c.l.b16 %v55
  %v222 = vunpack.c.h.b16 %v55
  %v223 = vunpack.c.l.b16 %v56
  %v224 = vunpack.c.h.b16 %v56
  %v225 = vunpack.c.l.b16 %v57
  %v226 = vunpack.c.h.b16 %v57
  %v227 = vunpack.c.l.b16 %v58
  %v228 = vunpack.c.h.b16 %v58
  %v229 = vunpack.c.l.b16 %v59
  %v230 = vunpack.c.h.b16 %v59
  %v231 = vunpack.c.l.b16 %v60
  %v232 = vunpack.c.h.b16 %v60
  %v233 = vunpack.c.l.b16 %v61
  %v234 = vunpack.c.h.b16 %v61
  %v235 = vunpack.c.l.b16 %v62
  %v236 = vunpack.c.h.b16 %v62
  %v237 = vunpack.c.l.b16 %v63
  %v238 = vunpack.c.h.b16 %v63
  %v239 = vunpack.c.l.b16 %v64
  %v240 = vunpack.c.h.b16 %v64
  %v241 = vpack.c.b16 %v179, %v177
  %v242 = vpack.c.b16 %v180, %v178
  %v243 = vpack.c.b16 %v183, %v181
  %v244 = vpack.c.b16 %v184, %v182
  %v245 = vpack.c.b16 %v187, %v185
  %v246 = vpack.c.b16 %v188, %v186
  %v247 = vpack.c.b16 %v191, %v189
  %v248 = vpack.c.b16 %v192, %v190
  %v249 = vpack.c.b16 %v195, %v193
  %v250 = vpack.c.b16 %v196, %v194
  %v251 = vpack.c.b16 %v199, %v197
  %v252 = vpack.c.b16 %v200, %v198
  %v253 = vpack.c.b16 %v203, %v201
  %v254 = vpack.c.b16 %v204, %v202
  %v255 = vpack.c.b16 %v207, %v205
  %v256 = vpack.c.b16 %v208, %v206
  %v257 = vpack.c.b16 %v211, %v209
  %v258 = vpack.c.b16 %v212, %v210
  %v259 = vpack.c.b16 %v215, %v213
  %v260 = vpack.c.b16 %v216, %v214
  %v261 = vpack.c.b16 %v219, %v217
  %v262 = vpack.c.b16 %v220, %v218
  %v263 = vpack.c.b16 %v223, %v221
  %v264 = vpack.c.b16 %v224, %v222
  %v265 = vpack.c.b16 %v227, %v225
  %v266 = vpack.c.b16 %v228, %v226
  %v267 = vpack.c.b16 %v231, %v229
  %v268 = vpack.c.b16 %v232, %v230
  %v269 = vpack.c.b16 %v235, %v233
  %v270 = vpack.c.b16 %v236, %v234
  %v271 = vpack.c.b16 %v239, %v237
  %v272 = vpack.c.b16 %v240, %v238
  %305 = vmatprep.subr.bf16.mxu0 %v242
  %306 = vmatpush1.bf16.msra.mxu0 %v241
  %307 = vmatprep.subr.bf16.mxu0 %v244
  %308 = vmatpush1.bf16.msra.mxu0 %v243
  %309 = vmatprep.subr.bf16.mxu0 %v246
  %310 = vmatpush1.bf16.msra.mxu0 %v245
  %311 = vmatprep.subr.bf16.mxu0 %v248
  %312 = vmatpush1.bf16.msra.mxu0 %v247
  %313 = vmatprep.subr.bf16.mxu0 %v250
  %314 = vmatpush1.bf16.msra.mxu0 %v249
  %315 = vmatprep.subr.bf16.mxu0 %v252
  %316 = vmatpush1.bf16.msra.mxu0 %v251
  %317 = vmatprep.subr.bf16.mxu0 %v254
  %318 = vmatpush1.bf16.msra.mxu0 %v253
  %319 = vmatprep.subr.bf16.mxu0 %v256
  %320 = vmatpush1.bf16.msra.mxu0 %v255
  %321 = vmatprep.subr.bf16.mxu0 %v258
  %322 = vmatpush1.bf16.msra.mxu0 %v257
  %323 = vmatprep.subr.bf16.mxu0 %v260
  %324 = vmatpush1.bf16.msra.mxu0 %v259
  %325 = vmatprep.subr.bf16.mxu0 %v262
  %326 = vmatpush1.bf16.msra.mxu0 %v261
  %327 = vmatprep.subr.bf16.mxu0 %v264
  %328 = vmatpush1.bf16.msra.mxu0 %v263
  %329 = vmatprep.subr.bf16.mxu0 %v266
  %330 = vmatpush1.bf16.msra.mxu0 %v265
  %331 = vmatprep.subr.bf16.mxu0 %v268
  %332 = vmatpush1.bf16.msra.mxu0 %v267
  %333 = vmatprep.subr.bf16.mxu0 %v270
  %334 = vmatpush1.bf16.msra.mxu0 %v269
  %335 = vmatprep.subr.bf16.mxu0 %v272
  %336 = vmatpush1.bf16.msra.mxu0 %v271
  %337 = vmatprep.mubr.bf16.mxu0 %v114
  %338 = vmatmul.mubr.bf16.gmra.mrb[0].mxu0 %v113
  %v339 = vpop.f32.mrb[0].mxu0
  %v340 = vadd.f32 0.0, %v339
  %v341 = vpop.f32.mrb[0].mxu0
  %v342 = vadd.f32 0.0, %v341
  %v343 = vpop.f32.mrb[0].mxu0
  %v344 = vadd.f32 0.0, %v343
  %v345 = vpop.f32.mrb[0].mxu0
  %v346 = vadd.f32 0.0, %v345
  %347 = vmatprep.mubr.bf16.mxu0 %v116
  %348 = vmatmul.mubr.bf16.gmra.mrb[0].mxu0 %v115
  %v349 = vpop.f32.mrb[0].mxu0
  %v350 = vadd.f32 0.0, %v349
  %v351 = vpop.f32.mrb[0].mxu0
  %v352 = vadd.f32 0.0, %v351
  %v353 = vpop.f32.mrb[0].mxu0
  %v354 = vadd.f32 0.0, %v353
  %v355 = vpop.f32.mrb[0].mxu0
  %v356 = vadd.f32 0.0, %v355
  %357 = vmatprep.mubr.bf16.mxu0 %v118
  %358 = vmatmul.mubr.bf16.gmra.mrb[0].mxu0 %v117
  %v359 = vpop.f32.mrb[0].mxu0
  %v360 = vadd.f32 0.0, %v359
  %v361 = vpop.f32.mrb[0].mxu0
  %v362 = vadd.f32 0.0, %v361
  %v363 = vpop.f32.mrb[0].mxu0
  %v364 = vadd.f32 0.0, %v363
  %v365 = vpop.f32.mrb[0].mxu0
  %v366 = vadd.f32 0.0, %v365
  %367 = vmatprep.mubr.bf16.mxu0 %v120
  %368 = vmatmul.mubr.bf16.gmra.mrb[0].mxu0 %v119
  %v369 = vpop.f32.mrb[0].mxu0
  %v370 = vadd.f32 0.0, %v369
  %v371 = vpop.f32.mrb[0].mxu0
  %v372 = vadd.f32 0.0, %v371
  %v373 = vpop.f32.mrb[0].mxu0
  %v374 = vadd.f32 0.0, %v373
  %v375 = vpop.f32.mrb[0].mxu0
  %v376 = vadd.f32 0.0, %v375
  %377 = vmatprep.mubr.bf16.mxu0 %v122
  %378 = vmatmul.mubr.bf16.gmra.mrb[0].mxu0 %v121
  %v379 = vpop.f32.mrb[0].mxu0
  %v380 = vadd.f32 0.0, %v379
  %v381 = vpop.f32.mrb[0].mxu0
  %v382 = vadd.f32 0.0, %v381
  %v383 = vpop.f32.mrb[0].mxu0
  %v384 = vadd.f32 0.0, %v383
  %v385 = vpop.f32.mrb[0].mxu0
  %v386 = vadd.f32 0.0, %v385
  %387 = vmatprep.mubr.bf16.mxu0 %v124
  %388 = vmatmul.mubr.bf16.gmra.mrb[0].mxu0 %v123
  %v389 = vpop.f32.mrb[0].mxu0
  %v390 = vadd.f32 0.0, %v389
  %v391 = vpop.f32.mrb[0].mxu0
  %v392 = vadd.f32 0.0, %v391
  %v393 = vpop.f32.mrb[0].mxu0
  %v394 = vadd.f32 0.0, %v393
  %v395 = vpop.f32.mrb[0].mxu0
  %v396 = vadd.f32 0.0, %v395
  %397 = vmatprep.mubr.bf16.mxu0 %v126
  %398 = vmatmul.mubr.bf16.gmra.mrb[0].mxu0 %v125
  %v399 = vpop.f32.mrb[0].mxu0
  %v400 = vadd.f32 0.0, %v399
  %v401 = vpop.f32.mrb[0].mxu0
  %v402 = vadd.f32 0.0, %v401
  %v403 = vpop.f32.mrb[0].mxu0
  %v404 = vadd.f32 0.0, %v403
  %v405 = vpop.f32.mrb[0].mxu0
  %v406 = vadd.f32 0.0, %v405
  %407 = vmatprep.mubr.bf16.mxu0 %v128
  %408 = vmatmul.mubr.bf16.gmra.mrb[0].mxu0 %v127
  %v409 = vpop.f32.mrb[0].mxu0
  %v410 = vadd.f32 0.0, %v409
  %v411 = vpop.f32.mrb[0].mxu0
  %v412 = vadd.f32 0.0, %v411
  %v413 = vpop.f32.mrb[0].mxu0
  %v414 = vadd.f32 0.0, %v413
  %v415 = vpop.f32.mrb[0].mxu0
  %v416 = vadd.f32 0.0, %v415
  %417 = vdwg.mxu0
  %vm418 = vcmask 932864
  %v419 = vsel %vm418, %v342, 0.0
  %v420 = vadd.f32 %v340, %v419
  %421 = vadd.xlane.f32.xlu0 %v420
  %v422 = vpop.xlane.xlu0 %421
  %v423 = vsel %vm418, %v346, 0.0
  %v424 = vadd.f32 %v344, %v423
  %425 = vadd.xlane.f32.xlu0 %v424
  %v426 = vpop.xlane.xlu0 %425
  %v427 = vsel %vm418, %v352, 0.0
  %v428 = vadd.f32 %v350, %v427
  %429 = vadd.xlane.f32.xlu0 %v428
  %v430 = vpop.xlane.xlu0 %429
  %v431 = vsel %vm418, %v356, 0.0
  %v432 = vadd.f32 %v354, %v431
  %433 = vadd.xlane.f32.xlu0 %v432
  %v434 = vpop.xlane.xlu0 %433
  %v435 = vsel %vm418, %v362, 0.0
  %v436 = vadd.f32 %v360, %v435
  %437 = vadd.xlane.f32.xlu0 %v436
  %v438 = vpop.xlane.xlu0 %437
  %v439 = vsel %vm418, %v366, 0.0
  %v440 = vadd.f32 %v364, %v439
  %441 = vadd.xlane.f32.xlu0 %v440
  %v442 = vpop.xlane.xlu0 %441
  %v443 = vsel %vm418, %v372, 0.0
  %v444 = vadd.f32 %v370, %v443
  %445 = vadd.xlane.f32.xlu0 %v444
  %v446 = vpop.xlane.xlu0 %445
  %v447 = vsel %vm418, %v376, 0.0
  %v448 = vadd.f32 %v374, %v447
  %449 = vadd.xlane.f32.xlu0 %v448
  %v450 = vpop.xlane.xlu0 %449
  %v451 = vsel %vm418, %v382, 0.0
  %v452 = vadd.f32 %v380, %v451
  %453 = vadd.xlane.f32.xlu0 %v452
  %v454 = vpop.xlane.xlu0 %453
  %v455 = vsel %vm418, %v386, 0.0
  %v456 = vadd.f32 %v384, %v455
  %457 = vadd.xlane.f32.xlu0 %v456
  %v458 = vpop.xlane.xlu0 %457
  %v459 = vsel %vm418, %v392, 0.0
  %v460 = vadd.f32 %v390, %v459
  %461 = vadd.xlane.f32.xlu0 %v460
  %v462 = vpop.xlane.xlu0 %461
  %v463 = vsel %vm418, %v396, 0.0
  %v464 = vadd.f32 %v394, %v463
  %465 = vadd.xlane.f32.xlu0 %v464
  %v466 = vpop.xlane.xlu0 %465
  %v467 = vsel %vm418, %v402, 0.0
  %v468 = vadd.f32 %v400, %v467
  %469 = vadd.xlane.f32.xlu0 %v468
  %v470 = vpop.xlane.xlu0 %469
  %v471 = vsel %vm418, %v406, 0.0
  %v472 = vadd.f32 %v404, %v471
  %473 = vadd.xlane.f32.xlu0 %v472
  %v474 = vpop.xlane.xlu0 %473
  %v475 = vsel %vm418, %v412, 0.0
  %v476 = vadd.f32 %v410, %v475
  %477 = vadd.xlane.f32.xlu0 %v476
  %v478 = vpop.xlane.xlu0 %477
  %v479 = vsel %vm418, %v416, 0.0
  %v480 = vadd.f32 %v414, %v479
  %481 = vadd.xlane.f32.xlu0 %v480
  %v482 = vpop.xlane.xlu0 %481
  %v483 = vmul.f32 %v340, %v340
  %v484 = vmul.f32 %v342, %v342
  %v485 = vmul.f32 %v344, %v344
  %v486 = vmul.f32 %v346, %v346
  %v487 = vmul.f32 %v350, %v350
  %v488 = vmul.f32 %v352, %v352
  %v489 = vmul.f32 %v354, %v354
  %v490 = vmul.f32 %v356, %v356
  %v491 = vmul.f32 %v360, %v360
  %v492 = vmul.f32 %v362, %v362
  %v493 = vmul.f32 %v364, %v364
  %v494 = vmul.f32 %v366, %v366
  %v495 = vmul.f32 %v370, %v370
  %v496 = vmul.f32 %v372, %v372
  %v497 = vmul.f32 %v374, %v374
  %v498 = vmul.f32 %v376, %v376
  %v499 = vmul.f32 %v380, %v380
  %v500 = vmul.f32 %v382, %v382
  %v501 = vmul.f32 %v384, %v384
  %v502 = vmul.f32 %v386, %v386
  %v503 = vmul.f32 %v390, %v390
  %v504 = vmul.f32 %v392, %v392
  %v505 = vmul.f32 %v394, %v394
  %v506 = vmul.f32 %v396, %v396
  %v507 = vmul.f32 %v400, %v400
  %v508 = vmul.f32 %v402, %v402
  %v509 = vmul.f32 %v404, %v404
  %v510 = vmul.f32 %v406, %v406
  %v511 = vmul.f32 %v410, %v410
  %v512 = vmul.f32 %v412, %v412
  %v513 = vmul.f32 %v414, %v414
  %v514 = vmul.f32 %v416, %v416
  %v515 = vsel %vm418, %v484, 0.0
  %v516 = vadd.f32 %v483, %v515
  %517 = vadd.xlane.f32.xlu0 %v516
  %v518 = vpop.xlane.xlu0 %517
  %v519 = vsel %vm418, %v486, 0.0
  %v520 = vadd.f32 %v485, %v519
  %521 = vadd.xlane.f32.xlu0 %v520
  %v522 = vpop.xlane.xlu0 %521
  %v523 = vsel %vm418, %v488, 0.0
  %v524 = vadd.f32 %v487, %v523
  %525 = vadd.xlane.f32.xlu0 %v524
  %v526 = vpop.xlane.xlu0 %525
  %v527 = vsel %vm418, %v490, 0.0
  %v528 = vadd.f32 %v489, %v527
  %529 = vadd.xlane.f32.xlu0 %v528
  %v530 = vpop.xlane.xlu0 %529
  %v531 = vsel %vm418, %v492, 0.0
  %v532 = vadd.f32 %v491, %v531
  %533 = vadd.xlane.f32.xlu0 %v532
  %v534 = vpop.xlane.xlu0 %533
  %v535 = vsel %vm418, %v494, 0.0
  %v536 = vadd.f32 %v493, %v535
  %537 = vadd.xlane.f32.xlu0 %v536
  %v538 = vpop.xlane.xlu0 %537
  %v539 = vsel %vm418, %v496, 0.0
  %v540 = vadd.f32 %v495, %v539
  %541 = vadd.xlane.f32.xlu0 %v540
  %v542 = vpop.xlane.xlu0 %541
  %v543 = vsel %vm418, %v498, 0.0
  %v544 = vadd.f32 %v497, %v543
  %545 = vadd.xlane.f32.xlu0 %v544
  %v546 = vpop.xlane.xlu0 %545
  %v547 = vsel %vm418, %v500, 0.0
  %v548 = vadd.f32 %v499, %v547
  %549 = vadd.xlane.f32.xlu0 %v548
  %v550 = vpop.xlane.xlu0 %549
  %v551 = vsel %vm418, %v502, 0.0
  %v552 = vadd.f32 %v501, %v551
  %553 = vadd.xlane.f32.xlu0 %v552
  %v554 = vpop.xlane.xlu0 %553
  %v555 = vsel %vm418, %v504, 0.0
  %v556 = vadd.f32 %v503, %v555
  %557 = vadd.xlane.f32.xlu0 %v556
  %v558 = vpop.xlane.xlu0 %557
  %v559 = vsel %vm418, %v506, 0.0
  %v560 = vadd.f32 %v505, %v559
  %561 = vadd.xlane.f32.xlu0 %v560
  %v562 = vpop.xlane.xlu0 %561
  %v563 = vsel %vm418, %v508, 0.0
  %v564 = vadd.f32 %v507, %v563
  %565 = vadd.xlane.f32.xlu0 %v564
  %v566 = vpop.xlane.xlu0 %565
  %v567 = vsel %vm418, %v510, 0.0
  %v568 = vadd.f32 %v509, %v567
  %569 = vadd.xlane.f32.xlu0 %v568
  %v570 = vpop.xlane.xlu0 %569
  %v571 = vsel %vm418, %v512, 0.0
  %v572 = vadd.f32 %v511, %v571
  %573 = vadd.xlane.f32.xlu0 %v572
  %v574 = vpop.xlane.xlu0 %573
  %v575 = vsel %vm418, %v514, 0.0
  %v576 = vadd.f32 %v513, %v575
  %577 = vadd.xlane.f32.xlu0 %v576
  %v578 = vpop.xlane.xlu0 %577
  %v579 = vadd.f32 %v422, %v438
  %v580 = vadd.f32 %v426, %v442
  %v581 = vadd.f32 %v430, %v446
  %v582 = vadd.f32 %v434, %v450
  %v583 = vadd.f32 %v579, %v454
  %v584 = vadd.f32 %v580, %v458
  %v585 = vadd.f32 %v581, %v462
  %v586 = vadd.f32 %v582, %v466
  %v587 = vadd.f32 %v583, %v470
  %v588 = vadd.f32 %v584, %v474
  %v589 = vadd.f32 %v585, %v478
  %v590 = vadd.f32 %v586, %v482
  %v591 = vadd.f32 %v518, %v534
  %v592 = vadd.f32 %v522, %v538
  %v593 = vadd.f32 %v526, %v542
  %v594 = vadd.f32 %v530, %v546
  %v595 = vadd.f32 %v591, %v550
  %v596 = vadd.f32 %v592, %v554
  %v597 = vadd.f32 %v593, %v558
  %v598 = vadd.f32 %v594, %v562
  %v599 = vadd.f32 %v595, %v566
  %v600 = vadd.f32 %v596, %v570
  %v601 = vadd.f32 %v597, %v574
  %v602 = vadd.f32 %v598, %v578
  %v603 = vmul.f32 %v587, 0.0010330578
  %v604 = vmul.f32 %v588, 0.0010330578
  %v605 = vmul.f32 %v589, 0.0010330578
  %v606 = vmul.f32 %v590, 0.0010330578
  %v607 = vmul.f32 %v599, 0.0010330578
  %v608 = vmul.f32 %v600, 0.0010330578
  %v609 = vmul.f32 %v601, 0.0010330578
  %v610 = vmul.f32 %v602, 0.0010330578
  %v611 = vmul.f32 %v603, %v603
  %v612 = vmul.f32 %v604, %v604
  %v613 = vmul.f32 %v605, %v605
  %v614 = vmul.f32 %v606, %v606
  %v615 = vsub.f32 %v607, %v611
  %v616 = vsub.f32 %v608, %v612
  %v617 = vsub.f32 %v609, %v613
  %v618 = vsub.f32 %v610, %v614
  %v619 = vld [vmem:[%s2] sm:$0xff]
  %v620 = vld [vmem:[%s2 + $0x8] sm:$0xff]
  %v621 = vld [vmem:[%s2 + $0x10] sm:$0xff]
  %v622 = vld [vmem:[%s2 + $0x18] sm:$0xff]
  %v623 = vadd.f32 %v615, 1e-05
  %v624 = vadd.f32 %v616, 1e-05
  %v625 = vadd.f32 %v617, 1e-05
  %v626 = vadd.f32 %v618, 1e-05
  %v627 = vrsqrt.pop %v623
  %v628 = vrsqrt.pop %v624
  %v629 = vrsqrt.pop %v625
  %v630 = vrsqrt.pop %v626
  %v631 = vmul.f32 %v619, %v627
  %v632 = vmul.f32 %v620, %v628
  %v633 = vmul.f32 %v621, %v629
  %v634 = vmul.f32 %v622, %v630
  %v635 = vld [vmem:[%s3] sm:$0xff]
  %v636 = vld [vmem:[%s3 + $0x8] sm:$0xff]
  %v637 = vld [vmem:[%s3 + $0x10] sm:$0xff]
  %v638 = vld [vmem:[%s3 + $0x18] sm:$0xff]
  %v639 = vmul.f32 %v603, %v631
  %v640 = vmul.f32 %v604, %v632
  %v641 = vmul.f32 %v605, %v633
  %v642 = vmul.f32 %v606, %v634
  %v643 = vsub.f32 %v635, %v639
  %v644 = vsub.f32 %v636, %v640
  %v645 = vsub.f32 %v637, %v641
  %v646 = vsub.f32 %v638, %v642
  %648 = vset.pattern.permute.xlu0 0
  %649 = vperm.xlu0 %648, %v631
  %v650 = vpop.permute.xlu0 %649
  %653 = vset.pattern.permute.xlu0 0
  %654 = vperm.xlu0 %653, %v632
  %v655 = vpop.permute.xlu0 %654
  %658 = vset.pattern.permute.xlu0 0
  %659 = vperm.xlu0 %658, %v633
  %v660 = vpop.permute.xlu0 %659
  %663 = vset.pattern.permute.xlu0 0
  %664 = vperm.xlu0 %663, %v634
  %v665 = vpop.permute.xlu0 %664
  %v667 = vmul.f32 %v340, %v650
  %v668 = vmul.f32 %v342, %v650
  %v669 = vmul.f32 %v344, %v655
  %v670 = vmul.f32 %v346, %v655
  %v671 = vmul.f32 %v350, %v660
  %v672 = vmul.f32 %v352, %v660
  %v673 = vmul.f32 %v354, %v665
  %v674 = vmul.f32 %v356, %v665
  %v675 = vmul.f32 %v360, %v650
  %v676 = vmul.f32 %v362, %v650
  %v677 = vmul.f32 %v364, %v655
  %v678 = vmul.f32 %v366, %v655
  %v679 = vmul.f32 %v370, %v660
  %v680 = vmul.f32 %v372, %v660
  %v681 = vmul.f32 %v374, %v665
  %v682 = vmul.f32 %v376, %v665
  %v683 = vmul.f32 %v380, %v650
  %v684 = vmul.f32 %v382, %v650
  %v685 = vmul.f32 %v384, %v655
  %v686 = vmul.f32 %v386, %v655
  %v687 = vmul.f32 %v390, %v660
  %v688 = vmul.f32 %v392, %v660
  %v689 = vmul.f32 %v394, %v665
  %v690 = vmul.f32 %v396, %v665
  %v691 = vmul.f32 %v400, %v650
  %v692 = vmul.f32 %v402, %v650
  %v693 = vmul.f32 %v404, %v655
  %v694 = vmul.f32 %v406, %v655
  %v695 = vmul.f32 %v410, %v660
  %v696 = vmul.f32 %v412, %v660
  %v697 = vmul.f32 %v414, %v665
  %v698 = vmul.f32 %v416, %v665
  %700 = vset.pattern.permute.xlu0 0
  %701 = vperm.xlu0 %700, %v643
  %v702 = vpop.permute.xlu0 %701
  %705 = vset.pattern.permute.xlu0 0
  %706 = vperm.xlu0 %705, %v644
  %v707 = vpop.permute.xlu0 %706
  %710 = vset.pattern.permute.xlu0 0
  %711 = vperm.xlu0 %710, %v645
  %v712 = vpop.permute.xlu0 %711
  %715 = vset.pattern.permute.xlu0 0
  %716 = vperm.xlu0 %715, %v646
  %v717 = vpop.permute.xlu0 %716
  %v719 = vadd.f32 %v667, %v702
  %v720 = vadd.f32 %v668, %v702
  %v721 = vadd.f32 %v669, %v707
  %v722 = vadd.f32 %v670, %v707
  %v723 = vadd.f32 %v671, %v712
  %v724 = vadd.f32 %v672, %v712
  %v725 = vadd.f32 %v673, %v717
  %v726 = vadd.f32 %v674, %v717
  %v727 = vadd.f32 %v675, %v702
  %v728 = vadd.f32 %v676, %v702
  %v729 = vadd.f32 %v677, %v707
  %v730 = vadd.f32 %v678, %v707
  %v731 = vadd.f32 %v679, %v712
  %v732 = vadd.f32 %v680, %v712
  %v733 = vadd.f32 %v681, %v717
  %v734 = vadd.f32 %v682, %v717
  %v735 = vadd.f32 %v683, %v702
  %v736 = vadd.f32 %v684, %v702
  %v737 = vadd.f32 %v685, %v707
  %v738 = vadd.f32 %v686, %v707
  %v739 = vadd.f32 %v687, %v712
  %v740 = vadd.f32 %v688, %v712
  %v741 = vadd.f32 %v689, %v717
  %v742 = vadd.f32 %v690, %v717
  %v743 = vadd.f32 %v691, %v702
  %v744 = vadd.f32 %v692, %v702
  %v745 = vadd.f32 %v693, %v707
  %v746 = vadd.f32 %v694, %v707
  %v747 = vadd.f32 %v695, %v712
  %v748 = vadd.f32 %v696, %v712
  %v749 = vadd.f32 %v697, %v717
  %v750 = vadd.f32 %v698, %v717
  %v751 = vmax.f32 %v719, 0.0
  %v752 = vmax.f32 %v720, 0.0
  %v753 = vmax.f32 %v721, 0.0
  %v754 = vmax.f32 %v722, 0.0
  %v755 = vmax.f32 %v723, 0.0
  %v756 = vmax.f32 %v724, 0.0
  %v757 = vmax.f32 %v725, 0.0
  %v758 = vmax.f32 %v726, 0.0
  %v759 = vmax.f32 %v727, 0.0
  %v760 = vmax.f32 %v728, 0.0
  %v761 = vmax.f32 %v729, 0.0
  %v762 = vmax.f32 %v730, 0.0
  %v763 = vmax.f32 %v731, 0.0
  %v764 = vmax.f32 %v732, 0.0
  %v765 = vmax.f32 %v733, 0.0
  %v766 = vmax.f32 %v734, 0.0
  %v767 = vmax.f32 %v735, 0.0
  %v768 = vmax.f32 %v736, 0.0
  %v769 = vmax.f32 %v737, 0.0
  %v770 = vmax.f32 %v738, 0.0
  %v771 = vmax.f32 %v739, 0.0
  %v772 = vmax.f32 %v740, 0.0
  %v773 = vmax.f32 %v741, 0.0
  %v774 = vmax.f32 %v742, 0.0
  %v775 = vmax.f32 %v743, 0.0
  %v776 = vmax.f32 %v744, 0.0
  %v777 = vmax.f32 %v745, 0.0
  %v778 = vmax.f32 %v746, 0.0
  %v779 = vmax.f32 %v747, 0.0
  %v780 = vmax.f32 %v748, 0.0
  %v781 = vmax.f32 %v749, 0.0
  %v782 = vmax.f32 %v750, 0.0
  %v783 = vpack.c.bf16 %v753, %v751
  %v784 = vpack.c.bf16 %v754, %v752
  %v785 = vpack.c.bf16 %v757, %v755
  %v786 = vpack.c.bf16 %v758, %v756
  %v787 = vpack.c.bf16 %v761, %v759
  %v788 = vpack.c.bf16 %v762, %v760
  %v789 = vpack.c.bf16 %v765, %v763
  %v790 = vpack.c.bf16 %v766, %v764
  %v791 = vpack.c.bf16 %v769, %v767
  %v792 = vpack.c.bf16 %v770, %v768
  %v793 = vpack.c.bf16 %v773, %v771
  %v794 = vpack.c.bf16 %v774, %v772
  %v795 = vpack.c.bf16 %v777, %v775
  %v796 = vpack.c.bf16 %v778, %v776
  %v797 = vpack.c.bf16 %v781, %v779
  %v798 = vpack.c.bf16 %v782, %v780
  %v815 = vunpack.c.l.b16 %v783
  %v816 = vunpack.c.l.b16 %v784
  %v817 = vunpack.c.h.b16 %v783
  %v818 = vunpack.c.h.b16 %v784
  %v819 = vunpack.c.l.b16 %v785
  %v820 = vunpack.c.l.b16 %v786
  %v821 = vunpack.c.h.b16 %v785
  %v822 = vunpack.c.h.b16 %v786
  %v823 = vunpack.c.l.b16 %v787
  %v824 = vunpack.c.l.b16 %v788
  %v825 = vunpack.c.h.b16 %v787
  %v826 = vunpack.c.h.b16 %v788
  %v827 = vunpack.c.l.b16 %v789
  %v828 = vunpack.c.l.b16 %v790
  %v829 = vunpack.c.h.b16 %v789
  %v830 = vunpack.c.h.b16 %v790
  %v831 = vunpack.c.l.b16 %v791
  %v832 = vunpack.c.l.b16 %v792
  %v833 = vunpack.c.h.b16 %v791
  %v834 = vunpack.c.h.b16 %v792
  %v835 = vunpack.c.l.b16 %v793
  %v836 = vunpack.c.l.b16 %v794
  %v837 = vunpack.c.h.b16 %v793
  %v838 = vunpack.c.h.b16 %v794
  %v839 = vunpack.c.l.b16 %v795
  %v840 = vunpack.c.l.b16 %v796
  %v841 = vunpack.c.h.b16 %v795
  %v842 = vunpack.c.h.b16 %v796
  %v843 = vunpack.c.l.b16 %v797
  %v844 = vunpack.c.l.b16 %v798
  %v845 = vunpack.c.h.b16 %v797
  %v846 = vunpack.c.h.b16 %v798
  %v847 = vpack.c.b16 %v816, %v815
  %v848 = vpack.c.b16 %v818, %v817
  %v849 = vpack.c.b16 %v820, %v819
  %v850 = vpack.c.b16 %v822, %v821
  %v851 = vpack.c.b16 %v824, %v823
  %v852 = vpack.c.b16 %v826, %v825
  %v853 = vpack.c.b16 %v828, %v827
  %v854 = vpack.c.b16 %v830, %v829
  %v855 = vpack.c.b16 %v832, %v831
  %v856 = vpack.c.b16 %v834, %v833
  %v857 = vpack.c.b16 %v836, %v835
  %v858 = vpack.c.b16 %v838, %v837
  %v859 = vpack.c.b16 %v840, %v839
  %v860 = vpack.c.b16 %v842, %v841
  %v861 = vpack.c.b16 %v844, %v843
  %v862 = vpack.c.b16 %v846, %v845
  %vm879 = vcmask 1043456
  %vm880 = vcmask 932868
  %vm881 = vmor %vm880, %vm879
  %882 = vst.msk [vmem:[%s4] sm:$0xff] %vm881, %v847
  %883 = vst.msk [vmem:[%s4 + $0x8] sm:$0xff] %vm881, %v848
  %884 = vst.msk [vmem:[%s4 + $0x10] sm:$0xff] %vm881, %v849
  %885 = vst.msk [vmem:[%s4 + $0x18] sm:$0xff] %vm881, %v850
  %886 = vst.msk [vmem:[%s4 + $0x20] sm:$0xff] %vm881, %v851
  %887 = vst.msk [vmem:[%s4 + $0x28] sm:$0xff] %vm881, %v852
  %888 = vst.msk [vmem:[%s4 + $0x30] sm:$0xff] %vm881, %v853
  %889 = vst.msk [vmem:[%s4 + $0x38] sm:$0xff] %vm881, %v854
  %890 = vst.msk [vmem:[%s4 + $0x40] sm:$0xff] %vm881, %v855
  %891 = vst.msk [vmem:[%s4 + $0x48] sm:$0xff] %vm881, %v856
  %892 = vst.msk [vmem:[%s4 + $0x50] sm:$0xff] %vm881, %v857
  %893 = vst.msk [vmem:[%s4 + $0x58] sm:$0xff] %vm881, %v858
  %894 = vst.msk [vmem:[%s4 + $0x60] sm:$0xff] %vm881, %v859
  %895 = vst.msk [vmem:[%s4 + $0x68] sm:$0xff] %vm881, %v860
  %896 = vst.msk [vmem:[%s4 + $0x70] sm:$0xff] %vm881, %v861
  %897 = vst.msk [vmem:[%s4 + $0x78] sm:$0xff] %vm881, %v862
  // Predicated region
  $region18: #{starter_generator_forward.7} parent=0 // pred_check
    _
  $region19: #{starter_generator_forward.7} parent=0 // pred_check_branch
    %899 = sbr.rel (0) target = $region21
  $region20: #{starter_generator_forward.7} parent=0 // pred_region
    _
  $region21: #{starter_generator_forward.7} parent=0 // pred_fallthru
    _
  // Predicated region
  $region22: #{starter_generator_forward.7} parent=0 // pred_check
    _
  $region23: #{starter_generator_forward.7} parent=0 // pred_check_branch
    %901 = sbr.rel (0) target = $region25
  $region24: #{starter_generator_forward.7} parent=0 // pred_region
    _
  $region25: #{starter_generator_forward.7} parent=0 // pred_fallthru
    _

// kernel: starter_generator_forward.8
$region0: #{starter_generator_forward.8}
  #allocation0 [shape = 'u32[]', space=smem, size = 0x4, offset = 0x4, fixed_abs, tag = 'smem constant byte address 0x4 - core index']
  #allocation1 [shape = 'u32[144,128]{1,0:T(1,128)}', space=vmem, size = 0x12000, scoped, tag = 'internal scratch']
  %s0 = inlined_call_operand.vmem [shape: bf16[128,1058], index: 0, kind: input, shape index: {}]
  %s1 = inlined_call_operand.vmem [shape: bf16[64,128], index: 1, kind: input, shape index: {}]
  %s2 = inlined_call_operand.vmem [shape: f32[16,1], index: 2, kind: input, shape index: {}]
  %s3 = inlined_call_operand.vmem [shape: f32[16,1], index: 3, kind: input, shape index: {}]
  %s4 = inlined_call_operand.vmem [shape: bf16[64,1058], index: 4, kind: output, shape index: {}]
  %s5 = sld [smem:[#allocation0]]
  $region26: #{starter_generator_forward.8} parent=0
    _
  %s7 = ssub.s32 1, %s5
  %s8 = scalar_select 0, %s7, %s5
  // Predicated region
  $region2: #{starter_generator_forward.8} parent=0 // pred_check
    _
  $region3: #{starter_generator_forward.8} parent=0 // pred_check_branch
    %10 = sbr.rel (0) target = $region5
  $region4: #{starter_generator_forward.8} parent=0 // pred_region
    _
  $region5: #{starter_generator_forward.8} parent=0 // pred_fallthru
    _
  // Predicated region
  $region6: #{starter_generator_forward.8} parent=0 // pred_check
    _
  $region7: #{starter_generator_forward.8} parent=0 // pred_check_branch
    %12 = sbr.rel (0) target = $region9
  $region8: #{starter_generator_forward.8} parent=0 // pred_region
    _
  $region9: #{starter_generator_forward.8} parent=0 // pred_fallthru
    _
  // Predicated region
  $region10: #{starter_generator_forward.8} parent=0 // pred_check
    _
  $region11: #{starter_generator_forward.8} parent=0 // pred_check_branch
    %14 = sbr.rel (0) target = $region13
  $region12: #{starter_generator_forward.8} parent=0 // pred_region
    _
  $region13: #{starter_generator_forward.8} parent=0 // pred_fallthru
    _
  // Predicated region
  $region14: #{starter_generator_forward.8} parent=0 // pred_check
    _
  $region15: #{starter_generator_forward.8} parent=0 // pred_check_branch
    %16 = sbr.rel (0) target = $region17
  $region16: #{starter_generator_forward.8} parent=0 // pred_region
    _
  $region17: #{starter_generator_forward.8} parent=0 // pred_fallthru
    _
  %v18 = vld [vmem:[%s1] sm:$0xf]
  %v19 = vld [vmem:[%s1 + $0x4] sm:$0xf]
  %v20 = vld [vmem:[%s1 + $0x8] sm:$0xf]
  %v21 = vld [vmem:[%s1 + $0xc] sm:$0xf]
  %v22 = vld [vmem:[%s1 + $0x10] sm:$0xf]
  %v23 = vld [vmem:[%s1 + $0x14] sm:$0xf]
  %v24 = vld [vmem:[%s1 + $0x18] sm:$0xf]
  %v25 = vld [vmem:[%s1 + $0x1c] sm:$0xf]
  %v26 = vld [vmem:[%s0] sm:$0xff]
  %v27 = vld [vmem:[%s0 + $0x8] sm:$0xff]
  %v28 = vld [vmem:[%s0 + $0x10] sm:$0xff]
  %v29 = vld [vmem:[%s0 + $0x18] sm:$0xff]
  %v30 = vld [vmem:[%s0 + $0x20] sm:$0xf]
  %v31 = vld [vmem:[%s0 + $0x24] sm:$0xff]
  %v32 = vld [vmem:[%s0 + $0x2c] sm:$0xff]
  %v33 = vld [vmem:[%s0 + $0x34] sm:$0xff]
  %v34 = vld [vmem:[%s0 + $0x3c] sm:$0xff]
  %v35 = vld [vmem:[%s0 + $0x44] sm:$0xf]
  %v36 = vld [vmem:[%s0 + $0x48] sm:$0xff]
  %v37 = vld [vmem:[%s0 + $0x50] sm:$0xff]
  %v38 = vld [vmem:[%s0 + $0x58] sm:$0xff]
  %v39 = vld [vmem:[%s0 + $0x60] sm:$0xff]
  %v40 = vld [vmem:[%s0 + $0x68] sm:$0xf]
  %v41 = vld [vmem:[%s0 + $0x6c] sm:$0xff]
  %v42 = vld [vmem:[%s0 + $0x74] sm:$0xff]
  %v43 = vld [vmem:[%s0 + $0x7c] sm:$0xff]
  %v44 = vld [vmem:[%s0 + $0x84] sm:$0xff]
  %v45 = vld [vmem:[%s0 + $0x8c] sm:$0xf]
  %v46 = vld [vmem:[%s0 + $0x90] sm:$0xff]
  %v47 = vld [vmem:[%s0 + $0x98] sm:$0xff]
  %v48 = vld [vmem:[%s0 + $0xa0] sm:$0xff]
  %v49 = vld [vmem:[%s0 + $0xa8] sm:$0xff]
  %v50 = vld [vmem:[%s0 + $0xb0] sm:$0xf]
  %v51 = vld [vmem:[%s0 + $0xb4] sm:$0xff]
  %v52 = vld [vmem:[%s0 + $0xbc] sm:$0xff]
  %v53 = vld [vmem:[%s0 + $0xc4] sm:$0xff]
  %v54 = vld [vmem:[%s0 + $0xcc] sm:$0xff]
  %v55 = vld [vmem:[%s0 + $0xd4] sm:$0xf]
  %v56 = vld [vmem:[%s0 + $0xd8] sm:$0xff]
  %v57 = vld [vmem:[%s0 + $0xe0] sm:$0xff]
  %v58 = vld [vmem:[%s0 + $0xe8] sm:$0xff]
  %v59 = vld [vmem:[%s0 + $0xf0] sm:$0xff]
  %v60 = vld [vmem:[%s0 + $0xf8] sm:$0xf]
  %v61 = vld [vmem:[%s0 + $0xfc] sm:$0xff]
  %v62 = vld [vmem:[%s0 + $0x104] sm:$0xff]
  %v63 = vld [vmem:[%s0 + $0x10c] sm:$0xff]
  %v64 = vld [vmem:[%s0 + $0x114] sm:$0xff]
  %v65 = vld [vmem:[%s0 + $0x11c] sm:$0xf]
  %v66 = vld [vmem:[%s0 + $0x120] sm:$0xff]
  %v67 = vld [vmem:[%s0 + $0x128] sm:$0xff]
  %v68 = vld [vmem:[%s0 + $0x130] sm:$0xff]
  %v69 = vld [vmem:[%s0 + $0x138] sm:$0xff]
  %v70 = vld [vmem:[%s0 + $0x140] sm:$0xf]
  %v71 = vld [vmem:[%s0 + $0x144] sm:$0xff]
  %v72 = vld [vmem:[%s0 + $0x14c] sm:$0xff]
  %v73 = vld [vmem:[%s0 + $0x154] sm:$0xff]
  %v74 = vld [vmem:[%s0 + $0x15c] sm:$0xff]
  %v75 = vld [vmem:[%s0 + $0x164] sm:$0xf]
  %v76 = vld [vmem:[%s0 + $0x168] sm:$0xff]
  %v77 = vld [vmem:[%s0 + $0x170] sm:$0xff]
  %v78 = vld [vmem:[%s0 + $0x178] sm:$0xff]
  %v79 = vld [vmem:[%s0 + $0x180] sm:$0xff]
  %v80 = vld [vmem:[%s0 + $0x188] sm:$0xf]
  %v81 = vld [vmem:[%s0 + $0x18c] sm:$0xff]
  %v82 = vld [vmem:[%s0 + $0x194] sm:$0xff]
  %v83 = vld [vmem:[%s0 + $0x19c] sm:$0xff]
  %v84 = vld [vmem:[%s0 + $0x1a4] sm:$0xff]
  %v85 = vld [vmem:[%s0 + $0x1ac] sm:$0xf]
  %v86 = vld [vmem:[%s0 + $0x1b0] sm:$0xff]
  %v87 = vld [vmem:[%s0 + $0x1b8] sm:$0xff]
  %v88 = vld [vmem:[%s0 + $0x1c0] sm:$0xff]
  %v89 = vld [vmem:[%s0 + $0x1c8] sm:$0xff]
  %v90 = vld [vmem:[%s0 + $0x1d0] sm:$0xf]
  %v91 = vld [vmem:[%s0 + $0x1d4] sm:$0xff]
  %v92 = vld [vmem:[%s0 + $0x1dc] sm:$0xff]
  %v93 = vld [vmem:[%s0 + $0x1e4] sm:$0xff]
  %v94 = vld [vmem:[%s0 + $0x1ec] sm:$0xff]
  %v95 = vld [vmem:[%s0 + $0x1f4] sm:$0xf]
  %v96 = vld [vmem:[%s0 + $0x1f8] sm:$0xff]
  %v97 = vld [vmem:[%s0 + $0x200] sm:$0xff]
  %v98 = vld [vmem:[%s0 + $0x208] sm:$0xff]
  %v99 = vld [vmem:[%s0 + $0x210] sm:$0xff]
  %v100 = vld [vmem:[%s0 + $0x218] sm:$0xf]
  %v101 = vld [vmem:[%s0 + $0x21c] sm:$0xff]
  %v102 = vld [vmem:[%s0 + $0x224] sm:$0xff]
  %v103 = vld [vmem:[%s0 + $0x22c] sm:$0xff]
  %v104 = vld [vmem:[%s0 + $0x234] sm:$0xff]
  %v105 = vld [vmem:[%s0 + $0x23c] sm:$0xf]
  %v114 = vunpack.c.l.b16 %v18
  %v115 = vunpack.c.l.b16 %v19
  %v116 = vunpack.c.l.b16 %v20
  %v117 = vunpack.c.l.b16 %v21
  %v118 = vunpack.c.l.b16 %v22
  %v119 = vunpack.c.l.b16 %v23
  %v120 = vunpack.c.l.b16 %v24
  %v121 = vunpack.c.l.b16 %v25
  %v122 = vpack.c.b16 %v115, %v114
  %v123 = vpack.c.b16 %v117, %v116
  %v124 = vpack.c.b16 %v119, %v118
  %v125 = vpack.c.b16 %v121, %v120
  %v210 = vunpack.c.l.b16 %v26
  %v211 = vunpack.c.h.b16 %v26
  %v212 = vunpack.c.l.b16 %v27
  %v213 = vunpack.c.h.b16 %v27
  %v214 = vunpack.c.l.b16 %v28
  %v215 = vunpack.c.h.b16 %v28
  %v216 = vunpack.c.l.b16 %v29
  %v217 = vunpack.c.h.b16 %v29
  %v218 = vunpack.c.l.b16 %v30
  %v219 = vunpack.c.l.b16 %v31
  %v220 = vunpack.c.h.b16 %v31
  %v221 = vunpack.c.l.b16 %v32
  %v222 = vunpack.c.h.b16 %v32
  %v223 = vunpack.c.l.b16 %v33
  %v224 = vunpack.c.h.b16 %v33
  %v225 = vunpack.c.l.b16 %v34
  %v226 = vunpack.c.h.b16 %v34
  %v227 = vunpack.c.l.b16 %v35
  %v228 = vunpack.c.l.b16 %v36
  %v229 = vunpack.c.h.b16 %v36
  %v230 = vunpack.c.l.b16 %v37
  %v231 = vunpack.c.h.b16 %v37
  %v232 = vunpack.c.l.b16 %v38
  %v233 = vunpack.c.h.b16 %v38
  %v234 = vunpack.c.l.b16 %v39
  %v235 = vunpack.c.h.b16 %v39
  %v236 = vunpack.c.l.b16 %v40
  %v237 = vunpack.c.l.b16 %v41
  %v238 = vunpack.c.h.b16 %v41
  %v239 = vunpack.c.l.b16 %v42
  %v240 = vunpack.c.h.b16 %v42
  %v241 = vunpack.c.l.b16 %v43
  %v242 = vunpack.c.h.b16 %v43
  %v243 = vunpack.c.l.b16 %v44
  %v244 = vunpack.c.h.b16 %v44
  %v245 = vunpack.c.l.b16 %v45
  %v246 = vunpack.c.l.b16 %v46
  %v247 = vunpack.c.h.b16 %v46
  %v248 = vunpack.c.l.b16 %v47
  %v249 = vunpack.c.h.b16 %v47
  %v250 = vunpack.c.l.b16 %v48
  %v251 = vunpack.c.h.b16 %v48
  %v252 = vunpack.c.l.b16 %v49
  %v253 = vunpack.c.h.b16 %v49
  %v254 = vunpack.c.l.b16 %v50
  %v255 = vunpack.c.l.b16 %v51
  %v256 = vunpack.c.h.b16 %v51
  %v257 = vunpack.c.l.b16 %v52
  %v258 = vunpack.c.h.b16 %v52
  %v259 = vunpack.c.l.b16 %v53
  %v260 = vunpack.c.h.b16 %v53
  %v261 = vunpack.c.l.b16 %v54
  %v262 = vunpack.c.h.b16 %v54
  %v263 = vunpack.c.l.b16 %v55
  %v264 = vunpack.c.l.b16 %v56
  %v265 = vunpack.c.h.b16 %v56
  %v266 = vunpack.c.l.b16 %v57
  %v267 = vunpack.c.h.b16 %v57
  %v268 = vunpack.c.l.b16 %v58
  %v269 = vunpack.c.h.b16 %v58
  %v270 = vunpack.c.l.b16 %v59
  %v271 = vunpack.c.h.b16 %v59
  %v272 = vunpack.c.l.b16 %v60
  %v273 = vunpack.c.l.b16 %v61
  %v274 = vunpack.c.h.b16 %v61
  %v275 = vunpack.c.l.b16 %v62
  %v276 = vunpack.c.h.b16 %v62
  %v277 = vunpack.c.l.b16 %v63
  %v278 = vunpack.c.h.b16 %v63
  %v279 = vunpack.c.l.b16 %v64
  %v280 = vunpack.c.h.b16 %v64
  %v281 = vunpack.c.l.b16 %v65
  %v282 = vunpack.c.l.b16 %v66
  %v283 = vunpack.c.h.b16 %v66
  %v284 = vunpack.c.l.b16 %v67
  %v285 = vunpack.c.h.b16 %v67
  %v286 = vunpack.c.l.b16 %v68
  %v287 = vunpack.c.h.b16 %v68
  %v288 = vunpack.c.l.b16 %v69
  %v289 = vunpack.c.h.b16 %v69
  %v290 = vunpack.c.l.b16 %v70
  %v291 = vunpack.c.l.b16 %v71
  %v292 = vunpack.c.h.b16 %v71
  %v293 = vunpack.c.l.b16 %v72
  %v294 = vunpack.c.h.b16 %v72
  %v295 = vunpack.c.l.b16 %v73
  %v296 = vunpack.c.h.b16 %v73
  %v297 = vunpack.c.l.b16 %v74
  %v298 = vunpack.c.h.b16 %v74
  %v299 = vunpack.c.l.b16 %v75
  %v300 = vunpack.c.l.b16 %v76
  %v301 = vunpack.c.h.b16 %v76
  %v302 = vunpack.c.l.b16 %v77
  %v303 = vunpack.c.h.b16 %v77
  %v304 = vunpack.c.l.b16 %v78
  %v305 = vunpack.c.h.b16 %v78
  %v306 = vunpack.c.l.b16 %v79
  %v307 = vunpack.c.h.b16 %v79
  %v308 = vunpack.c.l.b16 %v80
  %v309 = vunpack.c.l.b16 %v81
  %v310 = vunpack.c.h.b16 %v81
  %v311 = vunpack.c.l.b16 %v82
  %v312 = vunpack.c.h.b16 %v82
  %v313 = vunpack.c.l.b16 %v83
  %v314 = vunpack.c.h.b16 %v83
  %v315 = vunpack.c.l.b16 %v84
  %v316 = vunpack.c.h.b16 %v84
  %v317 = vunpack.c.l.b16 %v85
  %v318 = vunpack.c.l.b16 %v86
  %v319 = vunpack.c.h.b16 %v86
  %v320 = vunpack.c.l.b16 %v87
  %v321 = vunpack.c.h.b16 %v87
  %v322 = vunpack.c.l.b16 %v88
  %v323 = vunpack.c.h.b16 %v88
  %v324 = vunpack.c.l.b16 %v89
  %v325 = vunpack.c.h.b16 %v89
  %v326 = vunpack.c.l.b16 %v90
  %v327 = vunpack.c.l.b16 %v91
  %v328 = vunpack.c.h.b16 %v91
  %v329 = vunpack.c.l.b16 %v92
  %v330 = vunpack.c.h.b16 %v92
  %v331 = vunpack.c.l.b16 %v93
  %v332 = vunpack.c.h.b16 %v93
  %v333 = vunpack.c.l.b16 %v94
  %v334 = vunpack.c.h.b16 %v94
  %v335 = vunpack.c.l.b16 %v95
  %v336 = vunpack.c.l.b16 %v96
  %v337 = vunpack.c.h.b16 %v96
  %v338 = vunpack.c.l.b16 %v97
  %v339 = vunpack.c.h.b16 %v97
  %v340 = vunpack.c.l.b16 %v98
  %v341 = vunpack.c.h.b16 %v98
  %v342 = vunpack.c.l.b16 %v99
  %v343 = vunpack.c.h.b16 %v99
  %v344 = vunpack.c.l.b16 %v100
  %v345 = vunpack.c.l.b16 %v101
  %v346 = vunpack.c.h.b16 %v101
  %v347 = vunpack.c.l.b16 %v102
  %v348 = vunpack.c.h.b16 %v102
  %v349 = vunpack.c.l.b16 %v103
  %v350 = vunpack.c.h.b16 %v103
  %v351 = vunpack.c.l.b16 %v104
  %v352 = vunpack.c.h.b16 %v104
  %v353 = vunpack.c.l.b16 %v105
  %v354 = vpack.c.b16 %v219, %v210
  %v355 = vpack.c.b16 %v220, %v211
  %v356 = vpack.c.b16 %v221, %v212
  %v357 = vpack.c.b16 %v222, %v213
  %v358 = vpack.c.b16 %v223, %v214
  %v359 = vpack.c.b16 %v224, %v215
  %v360 = vpack.c.b16 %v225, %v216
  %v361 = vpack.c.b16 %v226, %v217
  %v362 = vpack.c.b16 %v227, %v218
  %v363 = vpack.c.b16 %v237, %v228
  %v364 = vpack.c.b16 %v238, %v229
  %v365 = vpack.c.b16 %v239, %v230
  %v366 = vpack.c.b16 %v240, %v231
  %v367 = vpack.c.b16 %v241, %v232
  %v368 = vpack.c.b16 %v242, %v233
  %v369 = vpack.c.b16 %v243, %v234
  %v370 = vpack.c.b16 %v244, %v235
  %v371 = vpack.c.b16 %v245, %v236
  %v372 = vpack.c.b16 %v255, %v246
  %v373 = vpack.c.b16 %v256, %v247
  %v374 = vpack.c.b16 %v257, %v248
  %v375 = vpack.c.b16 %v258, %v249
  %v376 = vpack.c.b16 %v259, %v250
  %v377 = vpack.c.b16 %v260, %v251
  %v378 = vpack.c.b16 %v261, %v252
  %v379 = vpack.c.b16 %v262, %v253
  %v380 = vpack.c.b16 %v263, %v254
  %v381 = vpack.c.b16 %v273, %v264
  %v382 = vpack.c.b16 %v274, %v265
  %v383 = vpack.c.b16 %v275, %v266
  %v384 = vpack.c.b16 %v276, %v267
  %v385 = vpack.c.b16 %v277, %v268
  %v386 = vpack.c.b16 %v278, %v269
  %v387 = vpack.c.b16 %v279, %v270
  %v388 = vpack.c.b16 %v280, %v271
  %v389 = vpack.c.b16 %v281, %v272
  %v390 = vpack.c.b16 %v291, %v282
  %v391 = vpack.c.b16 %v292, %v283
  %v392 = vpack.c.b16 %v293, %v284
  %v393 = vpack.c.b16 %v294, %v285
  %v394 = vpack.c.b16 %v295, %v286
  %v395 = vpack.c.b16 %v296, %v287
  %v396 = vpack.c.b16 %v297, %v288
  %v397 = vpack.c.b16 %v298, %v289
  %v398 = vpack.c.b16 %v299, %v290
  %v399 = vpack.c.b16 %v309, %v300
  %v400 = vpack.c.b16 %v310, %v301
  %v401 = vpack.c.b16 %v311, %v302
  %v402 = vpack.c.b16 %v312, %v303
  %v403 = vpack.c.b16 %v313, %v304
  %v404 = vpack.c.b16 %v314, %v305
  %v405 = vpack.c.b16 %v315, %v306
  %v406 = vpack.c.b16 %v316, %v307
  %v407 = vpack.c.b16 %v317, %v308
  %v408 = vpack.c.b16 %v327, %v318
  %v409 = vpack.c.b16 %v328, %v319
  %v410 = vpack.c.b16 %v329, %v320
  %v411 = vpack.c.b16 %v330, %v321
  %v412 = vpack.c.b16 %v331, %v322
  %v413 = vpack.c.b16 %v332, %v323
  %v414 = vpack.c.b16 %v333, %v324
  %v415 = vpack.c.b16 %v334, %v325
  %v416 = vpack.c.b16 %v335, %v326
  %v417 = vpack.c.b16 %v345, %v336
  %v418 = vpack.c.b16 %v346, %v337
  %v419 = vpack.c.b16 %v347, %v338
  %v420 = vpack.c.b16 %v348, %v339
  %v421 = vpack.c.b16 %v349, %v340
  %v422 = vpack.c.b16 %v350, %v341
  %v423 = vpack.c.b16 %v351, %v342
  %v424 = vpack.c.b16 %v352, %v343
  %v425 = vpack.c.b16 %v353, %v344
  %498 = vmatprep.subr.bf16.mxu0 %v355
  %499 = vmatpush1.bf16.msra.mxu0 %v354
  %500 = vmatprep.subr.bf16.mxu0 %v364
  %501 = vmatpush1.bf16.msra.mxu0 %v363
  %502 = vmatprep.subr.bf16.mxu0 %v373
  %503 = vmatpush1.bf16.msra.mxu0 %v372
  %504 = vmatprep.subr.bf16.mxu0 %v382
  %505 = vmatpush1.bf16.msra.mxu0 %v381
  %506 = vmatprep.subr.bf16.mxu0 %v391
  %507 = vmatpush1.bf16.msra.mxu0 %v390
  %508 = vmatprep.subr.bf16.mxu0 %v400
  %509 = vmatpush1.bf16.msra.mxu0 %v399
  %510 = vmatprep.subr.bf16.mxu0 %v409
  %511 = vmatpush1.bf16.msra.mxu0 %v408
  %512 = vmatprep.subr.bf16.mxu0 %v418
  %513 = vmatpush1.bf16.msra.mxu0 %v417
  %514 = vmatprep.subr.bf16.mxu0 0
  %515 = vmatpush1.bf16.msra.mxu0 0
  %516 = vmatprep.subr.bf16.mxu0 0
  %517 = vmatpush1.bf16.msra.mxu0 0
  %518 = vmatprep.subr.bf16.mxu0 0
  %519 = vmatpush1.bf16.msra.mxu0 0
  %520 = vmatprep.subr.bf16.mxu0 0
  %521 = vmatpush1.bf16.msra.mxu0 0
  %522 = vmatprep.subr.bf16.mxu0 0
  %523 = vmatpush1.bf16.msra.mxu0 0
  %524 = vmatprep.subr.bf16.mxu0 0
  %525 = vmatpush1.bf16.msra.mxu0 0
  %526 = vmatprep.subr.bf16.mxu0 0
  %527 = vmatpush1.bf16.msra.mxu0 0
  %528 = vmatprep.subr.bf16.mxu0 0
  %529 = vmatpush1.bf16.msra.mxu0 0
  %530 = vmatprep.mubr.bf16.mxu0 0
  %531 = vmatmul.mubr.bf16.gmra.mrb[0].mxu0 %v122
  %v532 = vpop.f32.mrb[0].mxu0
  %v533 = vadd.f32 0.0, %v532
  %v534 = vpop.f32.mrb[0].mxu0
  %v535 = vadd.f32 0.0, %v534
  %v536 = vpop.f32.mrb[0].mxu0
  %v537 = vadd.f32 0.0, %v536
  %v538 = vpop.f32.mrb[0].mxu0
  %v539 = vadd.f32 0.0, %v538
  %540 = vmatprep.mubr.bf16.mxu0 0
  %541 = vmatmul.mubr.bf16.gmra.mrb[0].mxu0 %v123
  %v542 = vpop.f32.mrb[0].mxu0
  %v543 = vadd.f32 0.0, %v542
  %v544 = vpop.f32.mrb[0].mxu0
  %v545 = vadd.f32 0.0, %v544
  %v546 = vpop.f32.mrb[0].mxu0
  %v547 = vadd.f32 0.0, %v546
  %v548 = vpop.f32.mrb[0].mxu0
  %v549 = vadd.f32 0.0, %v548
  %550 = vmatprep.mubr.bf16.mxu0 0
  %551 = vmatmul.mubr.bf16.gmra.mrb[0].mxu0 %v124
  %v552 = vpop.f32.mrb[0].mxu0
  %v553 = vadd.f32 0.0, %v552
  %v554 = vpop.f32.mrb[0].mxu0
  %v555 = vadd.f32 0.0, %v554
  %v556 = vpop.f32.mrb[0].mxu0
  %v557 = vadd.f32 0.0, %v556
  %v558 = vpop.f32.mrb[0].mxu0
  %v559 = vadd.f32 0.0, %v558
  %560 = vmatprep.mubr.bf16.mxu0 0
  %561 = vmatmul.mubr.bf16.gmra.mrb[0].mxu0 %v125
  %v562 = vpop.f32.mrb[0].mxu0
  %v563 = vadd.f32 0.0, %v562
  %v564 = vpop.f32.mrb[0].mxu0
  %v565 = vadd.f32 0.0, %v564
  %v566 = vpop.f32.mrb[0].mxu0
  %v567 = vadd.f32 0.0, %v566
  %v568 = vpop.f32.mrb[0].mxu0
  %v569 = vadd.f32 0.0, %v568
  %570 = vdwg.mxu0
  %571 = vmatprep.subr.bf16.mxu0 %v357
  %572 = vmatpush1.bf16.msra.mxu0 %v356
  %573 = vmatprep.subr.bf16.mxu0 %v366
  %574 = vmatpush1.bf16.msra.mxu0 %v365
  %575 = vmatprep.subr.bf16.mxu0 %v375
  %576 = vmatpush1.bf16.msra.mxu0 %v374
  %577 = vmatprep.subr.bf16.mxu0 %v384
  %578 = vmatpush1.bf16.msra.mxu0 %v383
  %579 = vmatprep.subr.bf16.mxu0 %v393
  %580 = vmatpush1.bf16.msra.mxu0 %v392
  %581 = vmatprep.subr.bf16.mxu0 %v402
  %582 = vmatpush1.bf16.msra.mxu0 %v401
  %583 = vmatprep.subr.bf16.mxu0 %v411
  %584 = vmatpush1.bf16.msra.mxu0 %v410
  %585 = vmatprep.subr.bf16.mxu0 %v420
  %586 = vmatpush1.bf16.msra.mxu0 %v419
  %587 = vmatprep.subr.bf16.mxu0 0
  %588 = vmatpush1.bf16.msra.mxu0 0
  %589 = vmatprep.subr.bf16.mxu0 0
  %590 = vmatpush1.bf16.msra.mxu0 0
  %591 = vmatprep.subr.bf16.mxu0 0
  %592 = vmatpush1.bf16.msra.mxu0 0
  %593 = vmatprep.subr.bf16.mxu0 0
  %594 = vmatpush1.bf16.msra.mxu0 0
  %595 = vmatprep.subr.bf16.mxu0 0
  %596 = vmatpush1.bf16.msra.mxu0 0
  %597 = vmatprep.subr.bf16.mxu0 0
  %598 = vmatpush1.bf16.msra.mxu0 0
  %599 = vmatprep.subr.bf16.mxu0 0
  %600 = vmatpush1.bf16.msra.mxu0 0
  %601 = vmatprep.subr.bf16.mxu0 0
  %602 = vmatpush1.bf16.msra.mxu0 0
  %603 = vmatprep.mubr.bf16.mxu0 0
  %604 = vmatmul.mubr.bf16.gmra.mrb[0].mxu0 %v122
  %v605 = vpop.f32.mrb[0].mxu0
  %v606 = vadd.f32 0.0, %v605
  %v607 = vpop.f32.mrb[0].mxu0
  %v608 = vadd.f32 0.0, %v607
  %v609 = vpop.f32.mrb[0].mxu0
  %v610 = vadd.f32 0.0, %v609
  %v611 = vpop.f32.mrb[0].mxu0
  %v612 = vadd.f32 0.0, %v611
  %613 = vmatprep.mubr.bf16.mxu0 0
  %614 = vmatmul.mubr.bf16.gmra.mrb[0].mxu0 %v123
  %v615 = vpop.f32.mrb[0].mxu0
  %v616 = vadd.f32 0.0, %v615
  %v617 = vpop.f32.mrb[0].mxu0
  %v618 = vadd.f32 0.0, %v617
  %v619 = vpop.f32.mrb[0].mxu0
  %v620 = vadd.f32 0.0, %v619
  %v621 = vpop.f32.mrb[0].mxu0
  %v622 = vadd.f32 0.0, %v621
  %623 = vmatprep.mubr.bf16.mxu0 0
  %624 = vmatmul.mubr.bf16.gmra.mrb[0].mxu0 %v124
  %v625 = vpop.f32.mrb[0].mxu0
  %v626 = vadd.f32 0.0, %v625
  %v627 = vpop.f32.mrb[0].mxu0
  %v628 = vadd.f32 0.0, %v627
  %v629 = vpop.f32.mrb[0].mxu0
  %v630 = vadd.f32 0.0, %v629
  %v631 = vpop.f32.mrb[0].mxu0
  %v632 = vadd.f32 0.0, %v631
  %633 = vmatprep.mubr.bf16.mxu0 0
  %634 = vmatmul.mubr.bf16.gmra.mrb[0].mxu0 %v125
  %v635 = vpop.f32.mrb[0].mxu0
  %v636 = vadd.f32 0.0, %v635
  %v637 = vpop.f32.mrb[0].mxu0
  %v638 = vadd.f32 0.0, %v637
  %v639 = vpop.f32.mrb[0].mxu0
  %v640 = vadd.f32 0.0, %v639
  %v641 = vpop.f32.mrb[0].mxu0
  %v642 = vadd.f32 0.0, %v641
  %643 = vdwg.mxu0
  %644 = vmatprep.subr.bf16.mxu0 %v359
  %645 = vmatpush1.bf16.msra.mxu0 %v358
  %646 = vmatprep.subr.bf16.mxu0 %v368
  %647 = vmatpush1.bf16.msra.mxu0 %v367
  %648 = vmatprep.subr.bf16.mxu0 %v377
  %649 = vmatpush1.bf16.msra.mxu0 %v376
  %650 = vmatprep.subr.bf16.mxu0 %v386
  %651 = vmatpush1.bf16.msra.mxu0 %v385
  %652 = vmatprep.subr.bf16.mxu0 %v395
  %653 = vmatpush1.bf16.msra.mxu0 %v394
  %654 = vmatprep.subr.bf16.mxu0 %v404
  %655 = vmatpush1.bf16.msra.mxu0 %v403
  %656 = vmatprep.subr.bf16.mxu0 %v413
  %657 = vmatpush1.bf16.msra.mxu0 %v412
  %658 = vmatprep.subr.bf16.mxu0 %v422
  %659 = vmatpush1.bf16.msra.mxu0 %v421
  %660 = vmatprep.subr.bf16.mxu0 0
  %661 = vmatpush1.bf16.msra.mxu0 0
  %662 = vmatprep.subr.bf16.mxu0 0
  %663 = vmatpush1.bf16.msra.mxu0 0
  %664 = vmatprep.subr.bf16.mxu0 0
  %665 = vmatpush1.bf16.msra.mxu0 0
  %666 = vmatprep.subr.bf16.mxu0 0
  %667 = vmatpush1.bf16.msra.mxu0 0
  %668 = vmatprep.subr.bf16.mxu0 0
  %669 = vmatpush1.bf16.msra.mxu0 0
  %670 = vmatprep.subr.bf16.mxu0 0
  %671 = vmatpush1.bf16.msra.mxu0 0
  %672 = vmatprep.subr.bf16.mxu0 0
  %673 = vmatpush1.bf16.msra.mxu0 0
  %674 = vmatprep.subr.bf16.mxu0 0
  %675 = vmatpush1.bf16.msra.mxu0 0
  %676 = vmatprep.mubr.bf16.mxu0 0
  %677 = vmatmul.mubr.bf16.gmra.mrb[0].mxu0 %v122
  %v678 = vpop.f32.mrb[0].mxu0
  %v679 = vadd.f32 0.0, %v678
  %v680 = vpop.f32.mrb[0].mxu0
  %v681 = vadd.f32 0.0, %v680
  %v682 = vpop.f32.mrb[0].mxu0
  %v683 = vadd.f32 0.0, %v682
  %v684 = vpop.f32.mrb[0].mxu0
  %v685 = vadd.f32 0.0, %v684
  %686 = vmatprep.mubr.bf16.mxu0 0
  %687 = vmatmul.mubr.bf16.gmra.mrb[0].mxu0 %v123
  %v688 = vpop.f32.mrb[0].mxu0
  %v689 = vadd.f32 0.0, %v688
  %v690 = vpop.f32.mrb[0].mxu0
  %v691 = vadd.f32 0.0, %v690
  %v692 = vpop.f32.mrb[0].mxu0
  %v693 = vadd.f32 0.0, %v692
  %v694 = vpop.f32.mrb[0].mxu0
  %v695 = vadd.f32 0.0, %v694
  %696 = vmatprep.mubr.bf16.mxu0 0
  %697 = vmatmul.mubr.bf16.gmra.mrb[0].mxu0 %v124
  %v698 = vpop.f32.mrb[0].mxu0
  %v699 = vadd.f32 0.0, %v698
  %v700 = vpop.f32.mrb[0].mxu0
  %v701 = vadd.f32 0.0, %v700
  %v702 = vpop.f32.mrb[0].mxu0
  %v703 = vadd.f32 0.0, %v702
  %v704 = vpop.f32.mrb[0].mxu0
  %v705 = vadd.f32 0.0, %v704
  %706 = vmatprep.mubr.bf16.mxu0 0
  %707 = vmatmul.mubr.bf16.gmra.mrb[0].mxu0 %v125
  %v708 = vpop.f32.mrb[0].mxu0
  %v709 = vadd.f32 0.0, %v708
  %v710 = vpop.f32.mrb[0].mxu0
  %v711 = vadd.f32 0.0, %v710
  %v712 = vpop.f32.mrb[0].mxu0
  %v713 = vadd.f32 0.0, %v712
  %v714 = vpop.f32.mrb[0].mxu0
  %v715 = vadd.f32 0.0, %v714
  %716 = vdwg.mxu0
  %717 = vmatprep.subr.bf16.mxu0 %v361
  %718 = vmatpush1.bf16.msra.mxu0 %v360
  %719 = vmatprep.subr.bf16.mxu0 %v370
  %720 = vmatpush1.bf16.msra.mxu0 %v369
  %721 = vmatprep.subr.bf16.mxu0 %v379
  %722 = vmatpush1.bf16.msra.mxu0 %v378
  %723 = vmatprep.subr.bf16.mxu0 %v388
  %724 = vmatpush1.bf16.msra.mxu0 %v387
  %725 = vmatprep.subr.bf16.mxu0 %v397
  %726 = vmatpush1.bf16.msra.mxu0 %v396
  %727 = vmatprep.subr.bf16.mxu0 %v406
  %728 = vmatpush1.bf16.msra.mxu0 %v405
  %729 = vmatprep.subr.bf16.mxu0 %v415
  %730 = vmatpush1.bf16.msra.mxu0 %v414
  %731 = vmatprep.subr.bf16.mxu0 %v424
  %732 = vmatpush1.bf16.msra.mxu0 %v423
  %733 = vmatprep.subr.bf16.mxu0 0
  %734 = vmatpush1.bf16.msra.mxu0 0
  %735 = vmatprep.subr.bf16.mxu0 0
  %736 = vmatpush1.bf16.msra.mxu0 0
  %737 = vmatprep.subr.bf16.mxu0 0
  %738 = vmatpush1.bf16.msra.mxu0 0
  %739 = vmatprep.subr.bf16.mxu0 0
  %740 = vmatpush1.bf16.msra.mxu0 0
  %741 = vmatprep.subr.bf16.mxu0 0
  %742 = vmatpush1.bf16.msra.mxu0 0
  %743 = vmatprep.subr.bf16.mxu0 0
  %744 = vmatpush1.bf16.msra.mxu0 0
  %745 = vmatprep.subr.bf16.mxu0 0
  %746 = vmatpush1.bf16.msra.mxu0 0
  %747 = vmatprep.subr.bf16.mxu0 0
  %748 = vmatpush1.bf16.msra.mxu0 0
  %749 = vmatprep.mubr.bf16.mxu0 0
  %750 = vmatmul.mubr.bf16.gmra.mrb[0].mxu0 %v122
  %v751 = vpop.f32.mrb[0].mxu0
  %v752 = vadd.f32 0.0, %v751
  %v753 = vpop.f32.mrb[0].mxu0
  %v754 = vadd.f32 0.0, %v753
  %v755 = vpop.f32.mrb[0].mxu0
  %v756 = vadd.f32 0.0, %v755
  %v757 = vpop.f32.mrb[0].mxu0
  %v758 = vadd.f32 0.0, %v757
  %759 = vmatprep.mubr.bf16.mxu0 0
  %760 = vmatmul.mubr.bf16.gmra.mrb[0].mxu0 %v123
  %v761 = vpop.f32.mrb[0].mxu0
  %v762 = vadd.f32 0.0, %v761
  %v763 = vpop.f32.mrb[0].mxu0
  %v764 = vadd.f32 0.0, %v763
  %v765 = vpop.f32.mrb[0].mxu0
  %v766 = vadd.f32 0.0, %v765
  %v767 = vpop.f32.mrb[0].mxu0
  %v768 = vadd.f32 0.0, %v767
  %769 = vmatprep.mubr.bf16.mxu0 0
  %770 = vmatmul.mubr.bf16.gmra.mrb[0].mxu0 %v124
  %v771 = vpop.f32.mrb[0].mxu0
  %v772 = vadd.f32 0.0, %v771
  %v773 = vpop.f32.mrb[0].mxu0
  %v774 = vadd.f32 0.0, %v773
  %v775 = vpop.f32.mrb[0].mxu0
  %v776 = vadd.f32 0.0, %v775
  %v777 = vpop.f32.mrb[0].mxu0
  %v778 = vadd.f32 0.0, %v777
  %779 = vmatprep.mubr.bf16.mxu0 0
  %780 = vmatmul.mubr.bf16.gmra.mrb[0].mxu0 %v125
  %v781 = vpop.f32.mrb[0].mxu0
  %v782 = vadd.f32 0.0, %v781
  %v783 = vpop.f32.mrb[0].mxu0
  %v784 = vadd.f32 0.0, %v783
  %v785 = vpop.f32.mrb[0].mxu0
  %v786 = vadd.f32 0.0, %v785
  %v787 = vpop.f32.mrb[0].mxu0
  %v788 = vadd.f32 0.0, %v787
  %789 = vdwg.mxu0
  %790 = vmatprep.subr.bf16.mxu0 0
  %791 = vmatpush1.bf16.msra.mxu0 %v362
  %792 = vmatprep.subr.bf16.mxu0 0
  %793 = vmatpush1.bf16.msra.mxu0 %v371
  %794 = vmatprep.subr.bf16.mxu0 0
  %795 = vmatpush1.bf16.msra.mxu0 %v380
  %796 = vmatprep.subr.bf16.mxu0 0
  %797 = vmatpush1.bf16.msra.mxu0 %v389
  %798 = vmatprep.subr.bf16.mxu0 0
  %799 = vmatpush1.bf16.msra.mxu0 %v398
  %800 = vmatprep.subr.bf16.mxu0 0
  %801 = vmatpush1.bf16.msra.mxu0 %v407
  %802 = vmatprep.subr.bf16.mxu0 0
  %803 = vmatpush1.bf16.msra.mxu0 %v416
  %804 = vmatprep.subr.bf16.mxu0 0
  %805 = vmatpush1.bf16.msra.mxu0 %v425
  %806 = vmatprep.subr.bf16.mxu0 0
  %807 = vmatpush1.bf16.msra.mxu0 0
  %808 = vmatprep.subr.bf16.mxu0 0
  %809 = vmatpush1.bf16.msra.mxu0 0
  %810 = vmatprep.subr.bf16.mxu0 0
  %811 = vmatpush1.bf16.msra.mxu0 0
  %812 = vmatprep.subr.bf16.mxu0 0
  %813 = vmatpush1.bf16.msra.mxu0 0
  %814 = vmatprep.subr.bf16.mxu0 0
  %815 = vmatpush1.bf16.msra.mxu0 0
  %816 = vmatprep.subr.bf16.mxu0 0
  %817 = vmatpush1.bf16.msra.mxu0 0
  %818 = vmatprep.subr.bf16.mxu0 0
  %819 = vmatpush1.bf16.msra.mxu0 0
  %820 = vmatprep.subr.bf16.mxu0 0
  %821 = vmatpush1.bf16.msra.mxu0 0
  %822 = vmatprep.mubr.bf16.mxu0 0
  %823 = vmatmul.mubr.bf16.gmra.mrb[0].mxu0 %v122
  %v824 = vpop.f32.mrb[0].mxu0
  %v825 = vadd.f32 0.0, %v824
  %v826 = vpop.f32.mrb[0].mxu0
  %v827 = vpop.f32.mrb[0].mxu0
  %v828 = vadd.f32 0.0, %v827
  %v829 = vpop.f32.mrb[0].mxu0
  %830 = vmatprep.mubr.bf16.mxu0 0
  %831 = vmatmul.mubr.bf16.gmra.mrb[0].mxu0 %v123
  %v832 = vpop.f32.mrb[0].mxu0
  %v833 = vadd.f32 0.0, %v832
  %v834 = vpop.f32.mrb[0].mxu0
  %v835 = vpop.f32.mrb[0].mxu0
  %v836 = vadd.f32 0.0, %v835
  %v837 = vpop.f32.mrb[0].mxu0
  %838 = vmatprep.mubr.bf16.mxu0 0
  %839 = vmatmul.mubr.bf16.gmra.mrb[0].mxu0 %v124
  %v840 = vpop.f32.mrb[0].mxu0
  %v841 = vadd.f32 0.0, %v840
  %v842 = vpop.f32.mrb[0].mxu0
  %v843 = vpop.f32.mrb[0].mxu0
  %v844 = vadd.f32 0.0, %v843
  %v845 = vpop.f32.mrb[0].mxu0
  %846 = vmatprep.mubr.bf16.mxu0 0
  %847 = vmatmul.mubr.bf16.gmra.mrb[0].mxu0 %v125
  %v848 = vpop.f32.mrb[0].mxu0
  %v849 = vadd.f32 0.0, %v848
  %v850 = vpop.f32.mrb[0].mxu0
  %v851 = vpop.f32.mrb[0].mxu0
  %v852 = vadd.f32 0.0, %v851
  %v853 = vpop.f32.mrb[0].mxu0
  %854 = vdwg.mxu0
  %v855 = vadd.f32 %v533, %v535
  %v856 = vadd.f32 %v855, %v606
  %v857 = vadd.f32 %v856, %v608
  %v858 = vadd.f32 %v857, %v679
  %v859 = vadd.f32 %v858, %v681
  %v860 = vadd.f32 %v859, %v752
  %v861 = vadd.f32 %v860, %v754
  %vm862 = vcmask 277504
  %v863 = vsel %vm862, %v825, 0.0
  %v864 = vadd.f32 %v861, %v863
  %865 = vadd.xlane.f32.xlu0 %v864
  %v866 = vpop.xlane.xlu0 %865
  %v867 = vadd.f32 %v537, %v539
  %v868 = vadd.f32 %v867, %v610
  %v869 = vadd.f32 %v868, %v612
  %v870 = vadd.f32 %v869, %v683
  %v871 = vadd.f32 %v870, %v685
  %v872 = vadd.f32 %v871, %v756
  %v873 = vadd.f32 %v872, %v758
  %v874 = vsel %vm862, %v828, 0.0
  %v875 = vadd.f32 %v873, %v874
  %876 = vadd.xlane.f32.xlu0 %v875
  %v877 = vpop.xlane.xlu0 %876
  %v878 = vadd.f32 %v543, %v545
  %v879 = vadd.f32 %v878, %v616
  %v880 = vadd.f32 %v879, %v618
  %v881 = vadd.f32 %v880, %v689
  %v882 = vadd.f32 %v881, %v691
  %v883 = vadd.f32 %v882, %v762
  %v884 = vadd.f32 %v883, %v764
  %v885 = vsel %vm862, %v833, 0.0
  %v886 = vadd.f32 %v884, %v885
  %887 = vadd.xlane.f32.xlu0 %v886
  %v888 = vpop.xlane.xlu0 %887
  %v889 = vadd.f32 %v547, %v549
  %v890 = vadd.f32 %v889, %v620
  %v891 = vadd.f32 %v890, %v622
  %v892 = vadd.f32 %v891, %v693
  %v893 = vadd.f32 %v892, %v695
  %v894 = vadd.f32 %v893, %v766
  %v895 = vadd.f32 %v894, %v768
  %v896 = vsel %vm862, %v836, 0.0
  %v897 = vadd.f32 %v895, %v896
  %898 = vadd.xlane.f32.xlu0 %v897
  %v899 = vpop.xlane.xlu0 %898
  %v900 = vadd.f32 %v553, %v555
  %v901 = vadd.f32 %v900, %v626
  %v902 = vadd.f32 %v901, %v628
  %v903 = vadd.f32 %v902, %v699
  %v904 = vadd.f32 %v903, %v701
  %v905 = vadd.f32 %v904, %v772
  %v906 = vadd.f32 %v905, %v774
  %v907 = vsel %vm862, %v841, 0.0
  %v908 = vadd.f32 %v906, %v907
  %909 = vadd.xlane.f32.xlu0 %v908
  %v910 = vpop.xlane.xlu0 %909
  %v911 = vadd.f32 %v557, %v559
  %v912 = vadd.f32 %v911, %v630
  %v913 = vadd.f32 %v912, %v632
  %v914 = vadd.f32 %v913, %v703
  %v915 = vadd.f32 %v914, %v705
  %v916 = vadd.f32 %v915, %v776
  %v917 = vadd.f32 %v916, %v778
  %v918 = vsel %vm862, %v844, 0.0
  %v919 = vadd.f32 %v917, %v918
  %920 = vadd.xlane.f32.xlu0 %v919
  %v921 = vpop.xlane.xlu0 %920
  %v922 = vadd.f32 %v563, %v565
  %v923 = vadd.f32 %v922, %v636
  %v924 = vadd.f32 %v923, %v638
  %v925 = vadd.f32 %v924, %v709
  %v926 = vadd.f32 %v925, %v711
  %v927 = vadd.f32 %v926, %v782
  %v928 = vadd.f32 %v927, %v784
  %v929 = vsel %vm862, %v849, 0.0
  %v930 = vadd.f32 %v928, %v929
  %931 = vadd.xlane.f32.xlu0 %v930
  %v932 = vpop.xlane.xlu0 %931
  %v933 = vadd.f32 %v567, %v569
  %v934 = vadd.f32 %v933, %v640
  %v935 = vadd.f32 %v934, %v642
  %v936 = vadd.f32 %v935, %v713
  %v937 = vadd.f32 %v936, %v715
  %v938 = vadd.f32 %v937, %v786
  %v939 = vadd.f32 %v938, %v788
  %v940 = vsel %vm862, %v852, 0.0
  %v941 = vadd.f32 %v939, %v940
  %942 = vadd.xlane.f32.xlu0 %v941
  %v943 = vpop.xlane.xlu0 %942
  %v944 = vmul.f32 %v533, %v533
  %v945 = vmul.f32 %v535, %v535
  %v946 = vmul.f32 %v606, %v606
  %v947 = vmul.f32 %v608, %v608
  %v948 = vmul.f32 %v679, %v679
  %v949 = vmul.f32 %v681, %v681
  %v950 = vmul.f32 %v752, %v752
  %v951 = vmul.f32 %v754, %v754
  %v952 = vmul.f32 %v825, %v825
  %v953 = vmul.f32 %v537, %v537
  %v954 = vmul.f32 %v539, %v539
  %v955 = vmul.f32 %v610, %v610
  %v956 = vmul.f32 %v612, %v612
  %v957 = vmul.f32 %v683, %v683
  %v958 = vmul.f32 %v685, %v685
  %v959 = vmul.f32 %v756, %v756
  %v960 = vmul.f32 %v758, %v758
  %v961 = vmul.f32 %v828, %v828
  %v962 = vmul.f32 %v543, %v543
  %v963 = vmul.f32 %v545, %v545
  %v964 = vmul.f32 %v616, %v616
  %v965 = vmul.f32 %v618, %v618
  %v966 = vmul.f32 %v689, %v689
  %v967 = vmul.f32 %v691, %v691
  %v968 = vmul.f32 %v762, %v762
  %v969 = vmul.f32 %v764, %v764
  %v970 = vmul.f32 %v833, %v833
  %v971 = vmul.f32 %v547, %v547
  %v972 = vmul.f32 %v549, %v549
  %v973 = vmul.f32 %v620, %v620
  %v974 = vmul.f32 %v622, %v622
  %v975 = vmul.f32 %v693, %v693
  %v976 = vmul.f32 %v695, %v695
  %v977 = vmul.f32 %v766, %v766
  %v978 = vmul.f32 %v768, %v768
  %v979 = vmul.f32 %v836, %v836
  %v980 = vmul.f32 %v553, %v553
  %v981 = vmul.f32 %v555, %v555
  %v982 = vmul.f32 %v626, %v626
  %v983 = vmul.f32 %v628, %v628
  %v984 = vmul.f32 %v699, %v699
  %v985 = vmul.f32 %v701, %v701
  %v986 = vmul.f32 %v772, %v772
  %v987 = vmul.f32 %v774, %v774
  %v988 = vmul.f32 %v841, %v841
  %v989 = vmul.f32 %v557, %v557
  %v990 = vmul.f32 %v559, %v559
  %v991 = vmul.f32 %v630, %v630
  %v992 = vmul.f32 %v632, %v632
  %v993 = vmul.f32 %v703, %v703
  %v994 = vmul.f32 %v705, %v705
  %v995 = vmul.f32 %v776, %v776
  %v996 = vmul.f32 %v778, %v778
  %v997 = vmul.f32 %v844, %v844
  %v998 = vmul.f32 %v563, %v563
  %v999 = vmul.f32 %v565, %v565
  %v1000 = vmul.f32 %v636, %v636
  %v1001 = vmul.f32 %v638, %v638
  %v1002 = vmul.f32 %v709, %v709
  %v1003 = vmul.f32 %v711, %v711
  %v1004 = vmul.f32 %v782, %v782
  %v1005 = vmul.f32 %v784, %v784
  %v1006 = vmul.f32 %v849, %v849
  %v1007 = vmul.f32 %v567, %v567
  %v1008 = vmul.f32 %v569, %v569
  %v1009 = vmul.f32 %v640, %v640
  %v1010 = vmul.f32 %v642, %v642
  %v1011 = vmul.f32 %v713, %v713
  %v1012 = vmul.f32 %v715, %v715
  %v1013 = vmul.f32 %v786, %v786
  %v1014 = vmul.f32 %v788, %v788
  %v1015 = vmul.f32 %v852, %v852
  %v1016 = vadd.f32 %v944, %v945
  %v1017 = vadd.f32 %v1016, %v946
  %v1018 = vadd.f32 %v1017, %v947
  %v1019 = vadd.f32 %v1018, %v948
  %v1020 = vadd.f32 %v1019, %v949
  %v1021 = vadd.f32 %v1020, %v950
  %v1022 = vadd.f32 %v1021, %v951
  %v1023 = vsel %vm862, %v952, 0.0
  %v1024 = vadd.f32 %v1022, %v1023
  %1025 = vadd.xlane.f32.xlu0 %v1024
  %v1026 = vpop.xlane.xlu0 %1025
  %v1027 = vadd.f32 %v953, %v954
  %v1028 = vadd.f32 %v1027, %v955
  %v1029 = vadd.f32 %v1028, %v956
  %v1030 = vadd.f32 %v1029, %v957
  %v1031 = vadd.f32 %v1030, %v958
  %v1032 = vadd.f32 %v1031, %v959
  %v1033 = vadd.f32 %v1032, %v960
  %v1034 = vsel %vm862, %v961, 0.0
  %v1035 = vadd.f32 %v1033, %v1034
  %1036 = vadd.xlane.f32.xlu0 %v1035
  %v1037 = vpop.xlane.xlu0 %1036
  %v1038 = vadd.f32 %v962, %v963
  %v1039 = vadd.f32 %v1038, %v964
  %v1040 = vadd.f32 %v1039, %v965
  %v1041 = vadd.f32 %v1040, %v966
  %v1042 = vadd.f32 %v1041, %v967
  %v1043 = vadd.f32 %v1042, %v968
  %v1044 = vadd.f32 %v1043, %v969
  %v1045 = vsel %vm862, %v970, 0.0
  %v1046 = vadd.f32 %v1044, %v1045
  %1047 = vadd.xlane.f32.xlu0 %v1046
  %v1048 = vpop.xlane.xlu0 %1047
  %v1049 = vadd.f32 %v971, %v972
  %v1050 = vadd.f32 %v1049, %v973
  %v1051 = vadd.f32 %v1050, %v974
  %v1052 = vadd.f32 %v1051, %v975
  %v1053 = vadd.f32 %v1052, %v976
  %v1054 = vadd.f32 %v1053, %v977
  %v1055 = vadd.f32 %v1054, %v978
  %v1056 = vsel %vm862, %v979, 0.0
  %v1057 = vadd.f32 %v1055, %v1056
  %1058 = vadd.xlane.f32.xlu0 %v1057
  %v1059 = vpop.xlane.xlu0 %1058
  %v1060 = vadd.f32 %v980, %v981
  %v1061 = vadd.f32 %v1060, %v982
  %v1062 = vadd.f32 %v1061, %v983
  %v1063 = vadd.f32 %v1062, %v984
  %v1064 = vadd.f32 %v1063, %v985
  %v1065 = vadd.f32 %v1064, %v986
  %v1066 = vadd.f32 %v1065, %v987
  %v1067 = vsel %vm862, %v988, 0.0
  %v1068 = vadd.f32 %v1066, %v1067
  %1069 = vadd.xlane.f32.xlu0 %v1068
  %v1070 = vpop.xlane.xlu0 %1069
  %v1071 = vadd.f32 %v989, %v990
  %v1072 = vadd.f32 %v1071, %v991
  %v1073 = vadd.f32 %v1072, %v992
  %v1074 = vadd.f32 %v1073, %v993
  %v1075 = vadd.f32 %v1074, %v994
  %v1076 = vadd.f32 %v1075, %v995
  %v1077 = vadd.f32 %v1076, %v996
  %v1078 = vsel %vm862, %v997, 0.0
  %v1079 = vadd.f32 %v1077, %v1078
  %1080 = vadd.xlane.f32.xlu0 %v1079
  %v1081 = vpop.xlane.xlu0 %1080
  %v1082 = vadd.f32 %v998, %v999
  %v1083 = vadd.f32 %v1082, %v1000
  %v1084 = vadd.f32 %v1083, %v1001
  %v1085 = vadd.f32 %v1084, %v1002
  %v1086 = vadd.f32 %v1085, %v1003
  %v1087 = vadd.f32 %v1086, %v1004
  %v1088 = vadd.f32 %v1087, %v1005
  %v1089 = vsel %vm862, %v1006, 0.0
  %v1090 = vadd.f32 %v1088, %v1089
  %1091 = vadd.xlane.f32.xlu0 %v1090
  %v1092 = vpop.xlane.xlu0 %1091
  %v1093 = vadd.f32 %v1007, %v1008
  %v1094 = vadd.f32 %v1093, %v1009
  %v1095 = vadd.f32 %v1094, %v1010
  %v1096 = vadd.f32 %v1095, %v1011
  %v1097 = vadd.f32 %v1096, %v1012
  %v1098 = vadd.f32 %v1097, %v1013
  %v1099 = vadd.f32 %v1098, %v1014
  %v1100 = vsel %vm862, %v1015, 0.0
  %v1101 = vadd.f32 %v1099, %v1100
  %1102 = vadd.xlane.f32.xlu0 %v1101
  %v1103 = vpop.xlane.xlu0 %1102
  %v1104 = vadd.f32 %v866, %v888
  %v1105 = vadd.f32 %v877, %v899
  %v1106 = vadd.f32 %v1104, %v910
  %v1107 = vadd.f32 %v1105, %v921
  %v1108 = vadd.f32 %v1106, %v932
  %v1109 = vadd.f32 %v1107, %v943
  %v1110 = vadd.f32 %v1026, %v1048
  %v1111 = vadd.f32 %v1037, %v1059
  %v1112 = vadd.f32 %v1110, %v1070
  %v1113 = vadd.f32 %v1111, %v1081
  %v1114 = vadd.f32 %v1112, %v1092
  %v1115 = vadd.f32 %v1113, %v1103
  %v1116 = vmul.f32 %v1108, 0.0002362949
  %v1117 = vmul.f32 %v1109, 0.0002362949
  %v1118 = vmul.f32 %v1114, 0.0002362949
  %v1119 = vmul.f32 %v1115, 0.0002362949
  %v1120 = vmul.f32 %v1116, %v1116
  %v1121 = vmul.f32 %v1117, %v1117
  %v1122 = vsub.f32 %v1118, %v1120
  %v1123 = vsub.f32 %v1119, %v1121
  %v1124 = vld [vmem:[%s2] sm:$0xff]
  %v1125 = vld [vmem:[%s2 + $0x8] sm:$0xff]
  %v1126 = vadd.f32 %v1122, 1e-05
  %v1127 = vadd.f32 %v1123, 1e-05
  %v1128 = vrsqrt.pop %v1126
  %v1129 = vrsqrt.pop %v1127
  %v1130 = vmul.f32 %v1124, %v1128
  %v1131 = vmul.f32 %v1125, %v1129
  %v1132 = vld [vmem:[%s3] sm:$0xff]
  %v1133 = vld [vmem:[%s3 + $0x8] sm:$0xff]
  %v1134 = vmul.f32 %v1116, %v1130
  %v1135 = vmul.f32 %v1117, %v1131
  %v1136 = vsub.f32 %v1132, %v1134
  %v1137 = vsub.f32 %v1133, %v1135
  %1139 = vset.pattern.permute.xlu0 0
  %1140 = vperm.xlu0 %1139, %v1130
  %v1141 = vpop.permute.xlu0 %1140
  %1144 = vset.pattern.permute.xlu0 0
  %1145 = vperm.xlu0 %1144, %v1131
  %v1146 = vpop.permute.xlu0 %1145
  %v1148 = vmul.f32 %v533, %v1141
  %v1149 = vmul.f32 %v535, %v1141
  %v1150 = vmul.f32 %v606, %v1141
  %v1151 = vmul.f32 %v608, %v1141
  %v1152 = vmul.f32 %v679, %v1141
  %v1153 = vmul.f32 %v681, %v1141
  %v1154 = vmul.f32 %v752, %v1141
  %v1155 = vmul.f32 %v754, %v1141
  %v1156 = vmul.f32 %v825, %v1141
  %v1157 = vmul.f32 %v537, %v1146
  %v1158 = vmul.f32 %v539, %v1146
  %v1159 = vmul.f32 %v610, %v1146
  %v1160 = vmul.f32 %v612, %v1146
  %v1161 = vmul.f32 %v683, %v1146
  %v1162 = vmul.f32 %v685, %v1146
  %v1163 = vmul.f32 %v756, %v1146
  %v1164 = vmul.f32 %v758, %v1146
  %v1165 = vmul.f32 %v828, %v1146
  %v1166 = vmul.f32 %v543, %v1141
  %v1167 = vmul.f32 %v545, %v1141
  %v1168 = vmul.f32 %v616, %v1141
  %v1169 = vmul.f32 %v618, %v1141
  %v1170 = vmul.f32 %v689, %v1141
  %v1171 = vmul.f32 %v691, %v1141
  %v1172 = vmul.f32 %v762, %v1141
  %v1173 = vmul.f32 %v764, %v1141
  %v1174 = vmul.f32 %v833, %v1141
  %v1175 = vmul.f32 %v547, %v1146
  %v1176 = vmul.f32 %v549, %v1146
  %v1177 = vmul.f32 %v620, %v1146
  %v1178 = vmul.f32 %v622, %v1146
  %v1179 = vmul.f32 %v693, %v1146
  %v1180 = vmul.f32 %v695, %v1146
  %v1181 = vmul.f32 %v766, %v1146
  %v1182 = vmul.f32 %v768, %v1146
  %v1183 = vmul.f32 %v836, %v1146
  %v1184 = vmul.f32 %v553, %v1141
  %v1185 = vmul.f32 %v555, %v1141
  %v1186 = vmul.f32 %v626, %v1141
  %v1187 = vmul.f32 %v628, %v1141
  %v1188 = vmul.f32 %v699, %v1141
  %v1189 = vmul.f32 %v701, %v1141
  %v1190 = vmul.f32 %v772, %v1141
  %v1191 = vmul.f32 %v774, %v1141
  %v1192 = vmul.f32 %v841, %v1141
  %v1193 = vmul.f32 %v557, %v1146
  %v1194 = vmul.f32 %v559, %v1146
  %v1195 = vmul.f32 %v630, %v1146
  %v1196 = vmul.f32 %v632, %v1146
  %v1197 = vmul.f32 %v703, %v1146
  %v1198 = vmul.f32 %v705, %v1146
  %v1199 = vmul.f32 %v776, %v1146
  %v1200 = vmul.f32 %v778, %v1146
  %v1201 = vmul.f32 %v844, %v1146
  %v1202 = vmul.f32 %v563, %v1141
  %v1203 = vmul.f32 %v565, %v1141
  %v1204 = vmul.f32 %v636, %v1141
  %v1205 = vmul.f32 %v638, %v1141
  %v1206 = vmul.f32 %v709, %v1141
  %v1207 = vmul.f32 %v711, %v1141
  %v1208 = vmul.f32 %v782, %v1141
  %v1209 = vmul.f32 %v784, %v1141
  %v1210 = vmul.f32 %v849, %v1141
  %v1211 = vmul.f32 %v567, %v1146
  %v1212 = vmul.f32 %v569, %v1146
  %v1213 = vmul.f32 %v640, %v1146
  %v1214 = vmul.f32 %v642, %v1146
  %v1215 = vmul.f32 %v713, %v1146
  %v1216 = vmul.f32 %v715, %v1146
  %v1217 = vmul.f32 %v786, %v1146
  %v1218 = vmul.f32 %v788, %v1146
  %v1219 = vmul.f32 %v852, %v1146
  %1221 = vset.pattern.permute.xlu0 0
  %1222 = vperm.xlu0 %1221, %v1136
  %v1223 = vpop.permute.xlu0 %1222
  %1226 = vset.pattern.permute.xlu0 0
  %1227 = vperm.xlu0 %1226, %v1137
  %v1228 = vpop.permute.xlu0 %1227
  %v1230 = vadd.f32 %v1148, %v1223
  %v1231 = vadd.f32 %v1149, %v1223
  %v1232 = vadd.f32 %v1150, %v1223
  %v1233 = vadd.f32 %v1151, %v1223
  %v1234 = vadd.f32 %v1152, %v1223
  %v1235 = vadd.f32 %v1153, %v1223
  %v1236 = vadd.f32 %v1154, %v1223
  %v1237 = vadd.f32 %v1155, %v1223
  %v1238 = vadd.f32 %v1156, %v1223
  %v1239 = vadd.f32 %v1157, %v1228
  %v1240 = vadd.f32 %v1158, %v1228
  %v1241 = vadd.f32 %v1159, %v1228
  %v1242 = vadd.f32 %v1160, %v1228
  %v1243 = vadd.f32 %v1161, %v1228
  %v1244 = vadd.f32 %v1162, %v1228
  %v1245 = vadd.f32 %v1163, %v1228
  %v1246 = vadd.f32 %v1164, %v1228
  %v1247 = vadd.f32 %v1165, %v1228
  %v1248 = vadd.f32 %v1166, %v1223
  %v1249 = vadd.f32 %v1167, %v1223
  %v1250 = vadd.f32 %v1168, %v1223
  %v1251 = vadd.f32 %v1169, %v1223
  %v1252 = vadd.f32 %v1170, %v1223
  %v1253 = vadd.f32 %v1171, %v1223
  %v1254 = vadd.f32 %v1172, %v1223
  %v1255 = vadd.f32 %v1173, %v1223
  %v1256 = vadd.f32 %v1174, %v1223
  %v1257 = vadd.f32 %v1175, %v1228
  %v1258 = vadd.f32 %v1176, %v1228
  %v1259 = vadd.f32 %v1177, %v1228
  %v1260 = vadd.f32 %v1178, %v1228
  %v1261 = vadd.f32 %v1179, %v1228
  %v1262 = vadd.f32 %v1180, %v1228
  %v1263 = vadd.f32 %v1181, %v1228
  %v1264 = vadd.f32 %v1182, %v1228
  %v1265 = vadd.f32 %v1183, %v1228
  %v1266 = vadd.f32 %v1184, %v1223
  %v1267 = vadd.f32 %v1185, %v1223
  %v1268 = vadd.f32 %v1186, %v1223
  %v1269 = vadd.f32 %v1187, %v1223
  %v1270 = vadd.f32 %v1188, %v1223
  %v1271 = vadd.f32 %v1189, %v1223
  %v1272 = vadd.f32 %v1190, %v1223
  %v1273 = vadd.f32 %v1191, %v1223
  %v1274 = vadd.f32 %v1192, %v1223
  %v1275 = vadd.f32 %v1193, %v1228
  %v1276 = vadd.f32 %v1194, %v1228
  %v1277 = vadd.f32 %v1195, %v1228
  %v1278 = vadd.f32 %v1196, %v1228
  %v1279 = vadd.f32 %v1197, %v1228
  %v1280 = vadd.f32 %v1198, %v1228
  %v1281 = vadd.f32 %v1199, %v1228
  %v1282 = vadd.f32 %v1200, %v1228
  %v1283 = vadd.f32 %v1201, %v1228
  %v1284 = vadd.f32 %v1202, %v1223
  %v1285 = vadd.f32 %v1203, %v1223
  %v1286 = vadd.f32 %v1204, %v1223
  %v1287 = vadd.f32 %v1205, %v1223
  %v1288 = vadd.f32 %v1206, %v1223
  %v1289 = vadd.f32 %v1207, %v1223
  %v1290 = vadd.f32 %v1208, %v1223
  %v1291 = vadd.f32 %v1209, %v1223
  %v1292 = vadd.f32 %v1210, %v1223
  %v1293 = vadd.f32 %v1211, %v1228
  %v1294 = vadd.f32 %v1212, %v1228
  %v1295 = vadd.f32 %v1213, %v1228
  %v1296 = vadd.f32 %v1214, %v1228
  %v1297 = vadd.f32 %v1215, %v1228
  %v1298 = vadd.f32 %v1216, %v1228
  %v1299 = vadd.f32 %v1217, %v1228
  %v1300 = vadd.f32 %v1218, %v1228
  %v1301 = vadd.f32 %v1219, %v1228
  %v1302 = vmax.f32 %v1230, 0.0
  %v1303 = vmax.f32 %v1231, 0.0
  %v1304 = vmax.f32 %v1232, 0.0
  %v1305 = vmax.f32 %v1233, 0.0
  %v1306 = vmax.f32 %v1234, 0.0
  %v1307 = vmax.f32 %v1235, 0.0
  %v1308 = vmax.f32 %v1236, 0.0
  %v1309 = vmax.f32 %v1237, 0.0
  %v1310 = vmax.f32 %v1238, 0.0
  %v1311 = vmax.f32 %v1239, 0.0
  %v1312 = vmax.f32 %v1240, 0.0
  %v1313 = vmax.f32 %v1241, 0.0
  %v1314 = vmax.f32 %v1242, 0.0
  %v1315 = vmax.f32 %v1243, 0.0
  %v1316 = vmax.f32 %v1244, 0.0
  %v1317 = vmax.f32 %v1245, 0.0
  %v1318 = vmax.f32 %v1246, 0.0
  %v1319 = vmax.f32 %v1247, 0.0
  %v1320 = vmax.f32 %v1248, 0.0
  %v1321 = vmax.f32 %v1249, 0.0
  %v1322 = vmax.f32 %v1250, 0.0
  %v1323 = vmax.f32 %v1251, 0.0
  %v1324 = vmax.f32 %v1252, 0.0
  %v1325 = vmax.f32 %v1253, 0.0
  %v1326 = vmax.f32 %v1254, 0.0
  %v1327 = vmax.f32 %v1255, 0.0
  %v1328 = vmax.f32 %v1256, 0.0
  %v1329 = vmax.f32 %v1257, 0.0
  %v1330 = vmax.f32 %v1258, 0.0
  %v1331 = vmax.f32 %v1259, 0.0
  %v1332 = vmax.f32 %v1260, 0.0
  %v1333 = vmax.f32 %v1261, 0.0
  %v1334 = vmax.f32 %v1262, 0.0
  %v1335 = vmax.f32 %v1263, 0.0
  %v1336 = vmax.f32 %v1264, 0.0
  %v1337 = vmax.f32 %v1265, 0.0
  %v1338 = vmax.f32 %v1266, 0.0
  %v1339 = vmax.f32 %v1267, 0.0
  %v1340 = vmax.f32 %v1268, 0.0
  %v1341 = vmax.f32 %v1269, 0.0
  %v1342 = vmax.f32 %v1270, 0.0
  %v1343 = vmax.f32 %v1271, 0.0
  %v1344 = vmax.f32 %v1272, 0.0
  %v1345 = vmax.f32 %v1273, 0.0
  %v1346 = vmax.f32 %v1274, 0.0
  %v1347 = vmax.f32 %v1275, 0.0
  %v1348 = vmax.f32 %v1276, 0.0
  %v1349 = vmax.f32 %v1277, 0.0
  %v1350 = vmax.f32 %v1278, 0.0
  %v1351 = vmax.f32 %v1279, 0.0
  %v1352 = vmax.f32 %v1280, 0.0
  %v1353 = vmax.f32 %v1281, 0.0
  %v1354 = vmax.f32 %v1282, 0.0
  %v1355 = vmax.f32 %v1283, 0.0
  %v1356 = vmax.f32 %v1284, 0.0
  %v1357 = vmax.f32 %v1285, 0.0
  %v1358 = vmax.f32 %v1286, 0.0
  %v1359 = vmax.f32 %v1287, 0.0
  %v1360 = vmax.f32 %v1288, 0.0
  %v1361 = vmax.f32 %v1289, 0.0
  %v1362 = vmax.f32 %v1290, 0.0
  %v1363 = vmax.f32 %v1291, 0.0
  %v1364 = vmax.f32 %v1292, 0.0
  %v1365 = vmax.f32 %v1293, 0.0
  %v1366 = vmax.f32 %v1294, 0.0
  %v1367 = vmax.f32 %v1295, 0.0
  %v1368 = vmax.f32 %v1296, 0.0
  %v1369 = vmax.f32 %v1297, 0.0
  %v1370 = vmax.f32 %v1298, 0.0
  %v1371 = vmax.f32 %v1299, 0.0
  %v1372 = vmax.f32 %v1300, 0.0
  %v1373 = vmax.f32 %v1301, 0.0
  %v1374 = vpack.c.bf16 %v1311, %v1302
  %v1375 = vpack.c.bf16 %v1312, %v1303
  %v1376 = vpack.c.bf16 %v1313, %v1304
  %v1377 = vpack.c.bf16 %v1314, %v1305
  %v1378 = vpack.c.bf16 %v1315, %v1306
  %v1379 = vpack.c.bf16 %v1316, %v1307
  %v1380 = vpack.c.bf16 %v1317, %v1308
  %v1381 = vpack.c.bf16 %v1318, %v1309
  %v1382 = vpack.c.bf16 %v1319, %v1310
  %v1383 = vpack.c.bf16 %v1329, %v1320
  %v1384 = vpack.c.bf16 %v1330, %v1321
  %v1385 = vpack.c.bf16 %v1331, %v1322
  %v1386 = vpack.c.bf16 %v1332, %v1323
  %v1387 = vpack.c.bf16 %v1333, %v1324
  %v1388 = vpack.c.bf16 %v1334, %v1325
  %v1389 = vpack.c.bf16 %v1335, %v1326
  %v1390 = vpack.c.bf16 %v1336, %v1327
  %v1391 = vpack.c.bf16 %v1337, %v1328
  %v1392 = vpack.c.bf16 %v1347, %v1338
  %v1393 = vpack.c.bf16 %v1348, %v1339
  %v1394 = vpack.c.bf16 %v1349, %v1340
  %v1395 = vpack.c.bf16 %v1350, %v1341
  %v1396 = vpack.c.bf16 %v1351, %v1342
  %v1397 = vpack.c.bf16 %v1352, %v1343
  %v1398 = vpack.c.bf16 %v1353, %v1344
  %v1399 = vpack.c.bf16 %v1354, %v1345
  %v1400 = vpack.c.bf16 %v1355, %v1346
  %v1401 = vpack.c.bf16 %v1365, %v1356
  %v1402 = vpack.c.bf16 %v1366, %v1357
  %v1403 = vpack.c.bf16 %v1367, %v1358
  %v1404 = vpack.c.bf16 %v1368, %v1359
  %v1405 = vpack.c.bf16 %v1369, %v1360
  %v1406 = vpack.c.bf16 %v1370, %v1361
  %v1407 = vpack.c.bf16 %v1371, %v1362
  %v1408 = vpack.c.bf16 %v1372, %v1363
  %v1409 = vpack.c.bf16 %v1373, %v1364
  %v1446 = vunpack.c.l.b16 %v1374
  %v1447 = vunpack.c.l.b16 %v1375
  %v1448 = vunpack.c.l.b16 %v1376
  %v1449 = vunpack.c.l.b16 %v1377
  %v1450 = vunpack.c.l.b16 %v1378
  %v1451 = vunpack.c.l.b16 %v1379
  %v1452 = vunpack.c.l.b16 %v1380
  %v1453 = vunpack.c.l.b16 %v1381
  %v1454 = vunpack.c.l.b16 %v1382
  %v1455 = vunpack.c.h.b16 %v1374
  %v1456 = vunpack.c.h.b16 %v1375
  %v1457 = vunpack.c.h.b16 %v1376
  %v1458 = vunpack.c.h.b16 %v1377
  %v1459 = vunpack.c.h.b16 %v1378
  %v1460 = vunpack.c.h.b16 %v1379
  %v1461 = vunpack.c.h.b16 %v1380
  %v1462 = vunpack.c.h.b16 %v1381
  %v1463 = vunpack.c.h.b16 %v1382
  %v1464 = vunpack.c.l.b16 %v1383
  %v1465 = vunpack.c.l.b16 %v1384
  %v1466 = vunpack.c.l.b16 %v1385
  %v1467 = vunpack.c.l.b16 %v1386
  %v1468 = vunpack.c.l.b16 %v1387
  %v1469 = vunpack.c.l.b16 %v1388
  %v1470 = vunpack.c.l.b16 %v1389
  %v1471 = vunpack.c.l.b16 %v1390
  %v1472 = vunpack.c.l.b16 %v1391
  %v1473 = vunpack.c.h.b16 %v1383
  %v1474 = vunpack.c.h.b16 %v1384
  %v1475 = vunpack.c.h.b16 %v1385
  %v1476 = vunpack.c.h.b16 %v1386
  %v1477 = vunpack.c.h.b16 %v1387
  %v1478 = vunpack.c.h.b16 %v1388
  %v1479 = vunpack.c.h.b16 %v1389
  %v1480 = vunpack.c.h.b16 %v1390
  %v1481 = vunpack.c.h.b16 %v1391
  %v1482 = vunpack.c.l.b16 %v1392
  %v1483 = vunpack.c.l.b16 %v1393
  %v1484 = vunpack.c.l.b16 %v1394
  %v1485 = vunpack.c.l.b16 %v1395
  %v1486 = vunpack.c.l.b16 %v1396
  %v1487 = vunpack.c.l.b16 %v1397
  %v1488 = vunpack.c.l.b16 %v1398
  %v1489 = vunpack.c.l.b16 %v1399
  %v1490 = vunpack.c.l.b16 %v1400
  %v1491 = vunpack.c.h.b16 %v1392
  %v1492 = vunpack.c.h.b16 %v1393
  %v1493 = vunpack.c.h.b16 %v1394
  %v1494 = vunpack.c.h.b16 %v1395
  %v1495 = vunpack.c.h.b16 %v1396
  %v1496 = vunpack.c.h.b16 %v1397
  %v1497 = vunpack.c.h.b16 %v1398
  %v1498 = vunpack.c.h.b16 %v1399
  %v1499 = vunpack.c.h.b16 %v1400
  %v1500 = vunpack.c.l.b16 %v1401
  %v1501 = vunpack.c.l.b16 %v1402
  %v1502 = vunpack.c.l.b16 %v1403
  %v1503 = vunpack.c.l.b16 %v1404
  %v1504 = vunpack.c.l.b16 %v1405
  %v1505 = vunpack.c.l.b16 %v1406
  %v1506 = vunpack.c.l.b16 %v1407
  %v1507 = vunpack.c.l.b16 %v1408
  %v1508 = vunpack.c.l.b16 %v1409
  %v1509 = vunpack.c.h.b16 %v1401
  %v1510 = vunpack.c.h.b16 %v1402
  %v1511 = vunpack.c.h.b16 %v1403
  %v1512 = vunpack.c.h.b16 %v1404
  %v1513 = vunpack.c.h.b16 %v1405
  %v1514 = vunpack.c.h.b16 %v1406
  %v1515 = vunpack.c.h.b16 %v1407
  %v1516 = vunpack.c.h.b16 %v1408
  %v1517 = vunpack.c.h.b16 %v1409
  %v1518 = vpack.c.b16 %v1447, %v1446
  %v1519 = vpack.c.b16 %v1449, %v1448
  %v1520 = vpack.c.b16 %v1451, %v1450
  %v1521 = vpack.c.b16 %v1453, %v1452
  %v1522 = vpack.c.b16 %v1454, %v1454
  %v1523 = vpack.c.b16 %v1456, %v1455
  %v1524 = vpack.c.b16 %v1458, %v1457
  %v1525 = vpack.c.b16 %v1460, %v1459
  %v1526 = vpack.c.b16 %v1462, %v1461
  %v1527 = vpack.c.b16 %v1463, %v1463
  %v1528 = vpack.c.b16 %v1465, %v1464
  %v1529 = vpack.c.b16 %v1467, %v1466
  %v1530 = vpack.c.b16 %v1469, %v1468
  %v1531 = vpack.c.b16 %v1471, %v1470
  %v1532 = vpack.c.b16 %v1472, %v1472
  %v1533 = vpack.c.b16 %v1474, %v1473
  %v1534 = vpack.c.b16 %v1476, %v1475
  %v1535 = vpack.c.b16 %v1478, %v1477
  %v1536 = vpack.c.b16 %v1480, %v1479
  %v1537 = vpack.c.b16 %v1481, %v1481
  %v1538 = vpack.c.b16 %v1483, %v1482
  %v1539 = vpack.c.b16 %v1485, %v1484
  %v1540 = vpack.c.b16 %v1487, %v1486
  %v1541 = vpack.c.b16 %v1489, %v1488
  %v1542 = vpack.c.b16 %v1490, %v1490
  %v1543 = vpack.c.b16 %v1492, %v1491
  %v1544 = vpack.c.b16 %v1494, %v1493
  %v1545 = vpack.c.b16 %v1496, %v1495
  %v1546 = vpack.c.b16 %v1498, %v1497
  %v1547 = vpack.c.b16 %v1499, %v1499
  %v1548 = vpack.c.b16 %v1501, %v1500
  %v1549 = vpack.c.b16 %v1503, %v1502
  %v1550 = vpack.c.b16 %v1505, %v1504
  %v1551 = vpack.c.b16 %v1507, %v1506
  %v1552 = vpack.c.b16 %v1508, %v1508
  %v1553 = vpack.c.b16 %v1510, %v1509
  %v1554 = vpack.c.b16 %v1512, %v1511
  %v1555 = vpack.c.b16 %v1514, %v1513
  %v1556 = vpack.c.b16 %v1516, %v1515
  %v1557 = vpack.c.b16 %v1517, %v1517
  %1598 = vst [vmem:[%s4] sm:$0xff] %v1518
  %1599 = vst [vmem:[%s4 + $0x8] sm:$0xff] %v1519
  %1600 = vst [vmem:[%s4 + $0x10] sm:$0xff] %v1520
  %1601 = vst [vmem:[%s4 + $0x18] sm:$0xff] %v1521
  %vm1602 = vcmask 273408
  %1603 = vst.msk [vmem:[%s4 + $0x20] sm:$0xf] %vm1602, %v1522
  %1604 = vst [vmem:[%s4 + $0x24] sm:$0xff] %v1523
  %1605 = vst [vmem:[%s4 + $0x2c] sm:$0xff] %v1524
  %1606 = vst [vmem:[%s4 + $0x34] sm:$0xff] %v1525
  %1607 = vst [vmem:[%s4 + $0x3c] sm:$0xff] %v1526
  %1608 = vst.msk [vmem:[%s4 + $0x44] sm:$0xf] %vm1602, %v1527
  %1609 = vst [vmem:[%s4 + $0x48] sm:$0xff] %v1528
  %1610 = vst [vmem:[%s4 + $0x50] sm:$0xff] %v1529
  %1611 = vst [vmem:[%s4 + $0x58] sm:$0xff] %v1530
  %1612 = vst [vmem:[%s4 + $0x60] sm:$0xff] %v1531
  %1613 = vst.msk [vmem:[%s4 + $0x68] sm:$0xf] %vm1602, %v1532
  %1614 = vst [vmem:[%s4 + $0x6c] sm:$0xff] %v1533
  %1615 = vst [vmem:[%s4 + $0x74] sm:$0xff] %v1534
  %1616 = vst [vmem:[%s4 + $0x7c] sm:$0xff] %v1535
  %1617 = vst [vmem:[%s4 + $0x84] sm:$0xff] %v1536
  %1618 = vst.msk [vmem:[%s4 + $0x8c] sm:$0xf] %vm1602, %v1537
  %1619 = vst [vmem:[%s4 + $0x90] sm:$0xff] %v1538
  %1620 = vst [vmem:[%s4 + $0x98] sm:$0xff] %v1539
  %1621 = vst [vmem:[%s4 + $0xa0] sm:$0xff] %v1540
  %1622 = vst [vmem:[%s4 + $0xa8] sm:$0xff] %v1541
  %1623 = vst.msk [vmem:[%s4 + $0xb0] sm:$0xf] %vm1602, %v1542
  %1624 = vst [vmem:[%s4 + $0xb4] sm:$0xff] %v1543
  %1625 = vst [vmem:[%s4 + $0xbc] sm:$0xff] %v1544
  %1626 = vst [vmem:[%s4 + $0xc4] sm:$0xff] %v1545
  %1627 = vst [vmem:[%s4 + $0xcc] sm:$0xff] %v1546
  %1628 = vst.msk [vmem:[%s4 + $0xd4] sm:$0xf] %vm1602, %v1547
  %1629 = vst [vmem:[%s4 + $0xd8] sm:$0xff] %v1548
  %1630 = vst [vmem:[%s4 + $0xe0] sm:$0xff] %v1549
  %1631 = vst [vmem:[%s4 + $0xe8] sm:$0xff] %v1550
  %1632 = vst [vmem:[%s4 + $0xf0] sm:$0xff] %v1551
  %1633 = vst.msk [vmem:[%s4 + $0xf8] sm:$0xf] %vm1602, %v1552
  %1634 = vst [vmem:[%s4 + $0xfc] sm:$0xff] %v1553
  %1635 = vst [vmem:[%s4 + $0x104] sm:$0xff] %v1554
  %1636 = vst [vmem:[%s4 + $0x10c] sm:$0xff] %v1555
  %1637 = vst [vmem:[%s4 + $0x114] sm:$0xff] %v1556
  %1638 = vst.msk [vmem:[%s4 + $0x11c] sm:$0xf] %vm1602, %v1557
  // Predicated region
  $region18: #{starter_generator_forward.8} parent=0 // pred_check
    _
  $region19: #{starter_generator_forward.8} parent=0 // pred_check_branch
    %1640 = sbr.rel (0) target = $region21
  $region20: #{starter_generator_forward.8} parent=0 // pred_region
    _
  $region21: #{starter_generator_forward.8} parent=0 // pred_fallthru
    _
  // Predicated region
  $region22: #{starter_generator_forward.8} parent=0 // pred_check
    _
  $region23: #{starter_generator_forward.8} parent=0 // pred_check_branch
    %1642 = sbr.rel (0) target = $region25
  $region24: #{starter_generator_forward.8} parent=0 // pred_region
    _
  $region25: #{starter_generator_forward.8} parent=0 // pred_fallthru
    _

// kernel: starter_generator_forward.9
$region0: #{starter_generator_forward.9}
  #allocation0 [shape = 'u32[]', space=smem, size = 0x4, offset = 0x4, fixed_abs, tag = 'smem constant byte address 0x4 - core index']
  #allocation1 [shape = 'u32[144,128]{1,0:T(1,128)}', space=vmem, size = 0x12000, scoped, tag = 'internal scratch']
  %s0 = inlined_call_operand.vmem [shape: bf16[64,4418], index: 0, kind: input, shape index: {}]
  %s1 = inlined_call_operand.vmem [shape: bf16[4,64], index: 1, kind: input, shape index: {}]
  %s2 = inlined_call_operand.vmem [shape: f32[4,1], index: 2, kind: input, shape index: {}]
  %s3 = inlined_call_operand.vmem [shape: f32[4,4418], index: 3, kind: output, shape index: {}]
  %s4 = sld [smem:[#allocation0]]
  $region22: #{starter_generator_forward.9} parent=0
    _
  %s6 = ssub.s32 1, %s4
  %s7 = scalar_select 0, %s6, %s4
  // Predicated region
  $region2: #{starter_generator_forward.9} parent=0 // pred_check
    _
  $region3: #{starter_generator_forward.9} parent=0 // pred_check_branch
    %9 = sbr.rel (0) target = $region5
  $region4: #{starter_generator_forward.9} parent=0 // pred_region
    _
  $region5: #{starter_generator_forward.9} parent=0 // pred_fallthru
    _
  // Predicated region
  $region6: #{starter_generator_forward.9} parent=0 // pred_check
    _
  $region7: #{starter_generator_forward.9} parent=0 // pred_check_branch
    %11 = sbr.rel (0) target = $region9
  $region8: #{starter_generator_forward.9} parent=0 // pred_region
    _
  $region9: #{starter_generator_forward.9} parent=0 // pred_fallthru
    _
  // Predicated region
  $region10: #{starter_generator_forward.9} parent=0 // pred_check
    _
  $region11: #{starter_generator_forward.9} parent=0 // pred_check_branch
    %13 = sbr.rel (0) target = $region13
  $region12: #{starter_generator_forward.9} parent=0 // pred_region
    _
  $region13: #{starter_generator_forward.9} parent=0 // pred_fallthru
    _
  %v15 = vld [vmem:[%s1] sm:$0x3]
  %v16 = vld [vmem:[%s0] sm:$0xff]
  %v17 = vld [vmem:[%s0 + $0x8] sm:$0xff]
  %v18 = vld [vmem:[%s0 + $0x10] sm:$0xff]
  %v19 = vld [vmem:[%s0 + $0x18] sm:$0xff]
  %v20 = vld [vmem:[%s0 + $0x20] sm:$0xff]
  %v21 = vld [vmem:[%s0 + $0x28] sm:$0xff]
  %v22 = vld [vmem:[%s0 + $0x30] sm:$0xff]
  %v23 = vld [vmem:[%s0 + $0x38] sm:$0xff]
  %v24 = vld [vmem:[%s0 + $0x40] sm:$0xff]
  %v25 = vld [vmem:[%s0 + $0x48] sm:$0xff]
  %v26 = vld [vmem:[%s0 + $0x50] sm:$0xff]
  %v27 = vld [vmem:[%s0 + $0x58] sm:$0xff]
  %v28 = vld [vmem:[%s0 + $0x60] sm:$0xff]
  %v29 = vld [vmem:[%s0 + $0x68] sm:$0xff]
  %v30 = vld [vmem:[%s0 + $0x70] sm:$0xff]
  %v31 = vld [vmem:[%s0 + $0x78] sm:$0xff]
  %v32 = vld [vmem:[%s0 + $0x80] sm:$0xff]
  %v33 = vld [vmem:[%s0 + $0x88] sm:$0xf]
  %v34 = vld [vmem:[%s0 + $0x8c] sm:$0xff]
  %v35 = vld [vmem:[%s0 + $0x94] sm:$0xff]
  %v36 = vld [vmem:[%s0 + $0x9c] sm:$0xff]
  %v37 = vld [vmem:[%s0 + $0xa4] sm:$0xff]
  %v38 = vld [vmem:[%s0 + $0xac] sm:$0xff]
  %v39 = vld [vmem:[%s0 + $0xb4] sm:$0xff]
  %v40 = vld [vmem:[%s0 + $0xbc] sm:$0xff]
  %v41 = vld [vmem:[%s0 + $0xc4] sm:$0xff]
  %v42 = vld [vmem:[%s0 + $0xcc] sm:$0xff]
  %v43 = vld [vmem:[%s0 + $0xd4] sm:$0xff]
  %v44 = vld [vmem:[%s0 + $0xdc] sm:$0xff]
  %v45 = vld [vmem:[%s0 + $0xe4] sm:$0xff]
  %v46 = vld [vmem:[%s0 + $0xec] sm:$0xff]
  %v47 = vld [vmem:[%s0 + $0xf4] sm:$0xff]
  %v48 = vld [vmem:[%s0 + $0xfc] sm:$0xff]
  %v49 = vld [vmem:[%s0 + $0x104] sm:$0xff]
  %v50 = vld [vmem:[%s0 + $0x10c] sm:$0xff]
  %v51 = vld [vmem:[%s0 + $0x114] sm:$0xf]
  %v52 = vld [vmem:[%s0 + $0x118] sm:$0xff]
  %v53 = vld [vmem:[%s0 + $0x120] sm:$0xff]
  %v54 = vld [vmem:[%s0 + $0x128] sm:$0xff]
  %v55 = vld [vmem:[%s0 + $0x130] sm:$0xff]
  %v56 = vld [vmem:[%s0 + $0x138] sm:$0xff]
  %v57 = vld [vmem:[%s0 + $0x140] sm:$0xff]
  %v58 = vld [vmem:[%s0 + $0x148] sm:$0xff]
  %v59 = vld [vmem:[%s0 + $0x150] sm:$0xff]
  %v60 = vld [vmem:[%s0 + $0x158] sm:$0xff]
  %v61 = vld [vmem:[%s0 + $0x160] sm:$0xff]
  %v62 = vld [vmem:[%s0 + $0x168] sm:$0xff]
  %v63 = vld [vmem:[%s0 + $0x170] sm:$0xff]
  %v64 = vld [vmem:[%s0 + $0x178] sm:$0xff]
  %v65 = vld [vmem:[%s0 + $0x180] sm:$0xff]
  %v66 = vld [vmem:[%s0 + $0x188] sm:$0xff]
  %v67 = vld [vmem:[%s0 + $0x190] sm:$0xff]
  %v68 = vld [vmem:[%s0 + $0x198] sm:$0xff]
  %v69 = vld [vmem:[%s0 + $0x1a0] sm:$0xf]
  %v70 = vld [vmem:[%s0 + $0x1a4] sm:$0xff]
  %v71 = vld [vmem:[%s0 + $0x1ac] sm:$0xff]
  %v72 = vld [vmem:[%s0 + $0x1b4] sm:$0xff]
  %v73 = vld [vmem:[%s0 + $0x1bc] sm:$0xff]
  %v74 = vld [vmem:[%s0 + $0x1c4] sm:$0xff]
  %v75 = vld [vmem:[%s0 + $0x1cc] sm:$0xff]
  %v76 = vld [vmem:[%s0 + $0x1d4] sm:$0xff]
  %v77 = vld [vmem:[%s0 + $0x1dc] sm:$0xff]
  %v78 = vld [vmem:[%s0 + $0x1e4] sm:$0xff]
  %v79 = vld [vmem:[%s0 + $0x1ec] sm:$0xff]
  %v80 = vld [vmem:[%s0 + $0x1f4] sm:$0xff]
  %v81 = vld [vmem:[%s0 + $0x1fc] sm:$0xff]
  %v82 = vld [vmem:[%s0 + $0x204] sm:$0xff]
  %v83 = vld [vmem:[%s0 + $0x20c] sm:$0xff]
  %v84 = vld [vmem:[%s0 + $0x214] sm:$0xff]
  %v85 = vld [vmem:[%s0 + $0x21c] sm:$0xff]
  %v86 = vld [vmem:[%s0 + $0x224] sm:$0xff]
  %v87 = vld [vmem:[%s0 + $0x22c] sm:$0xf]
  %v88 = vld [vmem:[%s0 + $0x230] sm:$0xff]
  %v89 = vld [vmem:[%s0 + $0x238] sm:$0xff]
  %v90 = vld [vmem:[%s0 + $0x240] sm:$0xff]
  %v91 = vld [vmem:[%s0 + $0x248] sm:$0xff]
  %v92 = vld [vmem:[%s0 + $0x250] sm:$0xff]
  %v93 = vld [vmem:[%s0 + $0x258] sm:$0xff]
  %v94 = vld [vmem:[%s0 + $0x260] sm:$0xff]
  %v95 = vld [vmem:[%s0 + $0x268] sm:$0xff]
  %v96 = vld [vmem:[%s0 + $0x270] sm:$0xff]
  %v97 = vld [vmem:[%s0 + $0x278] sm:$0xff]
  %v98 = vld [vmem:[%s0 + $0x280] sm:$0xff]
  %v99 = vld [vmem:[%s0 + $0x288] sm:$0xff]
  %v100 = vld [vmem:[%s0 + $0x290] sm:$0xff]
  %v101 = vld [vmem:[%s0 + $0x298] sm:$0xff]
  %v102 = vld [vmem:[%s0 + $0x2a0] sm:$0xff]
  %v103 = vld [vmem:[%s0 + $0x2a8] sm:$0xff]
  %v104 = vld [vmem:[%s0 + $0x2b0] sm:$0xff]
  %v105 = vld [vmem:[%s0 + $0x2b8] sm:$0xf]
  %v106 = vld [vmem:[%s0 + $0x2bc] sm:$0xff]
  %v107 = vld [vmem:[%s0 + $0x2c4] sm:$0xff]
  %v108 = vld [vmem:[%s0 + $0x2cc] sm:$0xff]
  %v109 = vld [vmem:[%s0 + $0x2d4] sm:$0xff]
  %v110 = vld [vmem:[%s0 + $0x2dc] sm:$0xff]
  %v111 = vld [vmem:[%s0 + $0x2e4] sm:$0xff]
  %v112 = vld [vmem:[%s0 + $0x2ec] sm:$0xff]
  %v113 = vld [vmem:[%s0 + $0x2f4] sm:$0xff]
  %v114 = vld [vmem:[%s0 + $0x2fc] sm:$0xff]
  %v115 = vld [vmem:[%s0 + $0x304] sm:$0xff]
  %v116 = vld [vmem:[%s0 + $0x30c] sm:$0xff]
  %v117 = vld [vmem:[%s0 + $0x314] sm:$0xff]
  %v118 = vld [vmem:[%s0 + $0x31c] sm:$0xff]
  %v119 = vld [vmem:[%s0 + $0x324] sm:$0xff]
  %v120 = vld [vmem:[%s0 + $0x32c] sm:$0xff]
  %v121 = vld [vmem:[%s0 + $0x334] sm:$0xff]
  %v122 = vld [vmem:[%s0 + $0x33c] sm:$0xff]
  %v123 = vld [vmem:[%s0 + $0x344] sm:$0xf]
  %v124 = vld [vmem:[%s0 + $0x348] sm:$0xff]
  %v125 = vld [vmem:[%s0 + $0x350] sm:$0xff]
  %v126 = vld [vmem:[%s0 + $0x358] sm:$0xff]
  %v127 = vld [vmem:[%s0 + $0x360] sm:$0xff]
  %v128 = vld [vmem:[%s0 + $0x368] sm:$0xff]
  %v129 = vld [vmem:[%s0 + $0x370] sm:$0xff]
  %v130 = vld [vmem:[%s0 + $0x378] sm:$0xff]
  %v131 = vld [vmem:[%s0 + $0x380] sm:$0xff]
  %v132 = vld [vmem:[%s0 + $0x388] sm:$0xff]
  %v133 = vld [vmem:[%s0 + $0x390] sm:$0xff]
  %v134 = vld [vmem:[%s0 + $0x398] sm:$0xff]
  %v135 = vld [vmem:[%s0 + $0x3a0] sm:$0xff]
  %v136 = vld [vmem:[%s0 + $0x3a8] sm:$0xff]
  %v137 = vld [vmem:[%s0 + $0x3b0] sm:$0xff]
  %v138 = vld [vmem:[%s0 + $0x3b8] sm:$0xff]
  %v139 = vld [vmem:[%s0 + $0x3c0] sm:$0xff]
  %v140 = vld [vmem:[%s0 + $0x3c8] sm:$0xff]
  %v141 = vld [vmem:[%s0 + $0x3d0] sm:$0xf]
  %v142 = vld [vmem:[%s0 + $0x3d4] sm:$0xff]
  %v143 = vld [vmem:[%s0 + $0x3dc] sm:$0xff]
  %v144 = vld [vmem:[%s0 + $0x3e4] sm:$0xff]
  %v145 = vld [vmem:[%s0 + $0x3ec] sm:$0xff]
  %v146 = vld [vmem:[%s0 + $0x3f4] sm:$0xff]
  %v147 = vld [vmem:[%s0 + $0x3fc] sm:$0xff]
  %v148 = vld [vmem:[%s0 + $0x404] sm:$0xff]
  %v149 = vld [vmem:[%s0 + $0x40c] sm:$0xff]
  %v150 = vld [vmem:[%s0 + $0x414] sm:$0xff]
  %v151 = vld [vmem:[%s0 + $0x41c] sm:$0xff]
  %v152 = vld [vmem:[%s0 + $0x424] sm:$0xff]
  %v153 = vld [vmem:[%s0 + $0x42c] sm:$0xff]
  %v154 = vld [vmem:[%s0 + $0x434] sm:$0xff]
  %v155 = vld [vmem:[%s0 + $0x43c] sm:$0xff]
  %v156 = vld [vmem:[%s0 + $0x444] sm:$0xff]
  %v157 = vld [vmem:[%s0 + $0x44c] sm:$0xff]
  %v158 = vld [vmem:[%s0 + $0x454] sm:$0xff]
  %v159 = vld [vmem:[%s0 + $0x45c] sm:$0xf]
  %v160 = vld [vmem:[%s2] sm:$0xf]
  %162 = vset.pattern.permute.xlu0 0
  %163 = vperm.xlu0 %162, %v160
  %v164 = vpop.permute.xlu0 %163
  %v310 = vunpack.c.l.b16 %v16
  %v311 = vunpack.c.h.b16 %v16
  %v312 = vunpack.c.l.b16 %v17
  %v313 = vunpack.c.h.b16 %v17
  %v314 = vunpack.c.l.b16 %v18
  %v315 = vunpack.c.h.b16 %v18
  %v316 = vunpack.c.l.b16 %v19
  %v317 = vunpack.c.h.b16 %v19
  %v318 = vunpack.c.l.b16 %v20
  %v319 = vunpack.c.h.b16 %v20
  %v320 = vunpack.c.l.b16 %v21
  %v321 = vunpack.c.h.b16 %v21
  %v322 = vunpack.c.l.b16 %v22
  %v323 = vunpack.c.h.b16 %v22
  %v324 = vunpack.c.l.b16 %v23
  %v325 = vunpack.c.h.b16 %v23
  %v326 = vunpack.c.l.b16 %v24
  %v327 = vunpack.c.h.b16 %v24
  %v328 = vunpack.c.l.b16 %v25
  %v329 = vunpack.c.h.b16 %v25
  %v330 = vunpack.c.l.b16 %v26
  %v331 = vunpack.c.h.b16 %v26
  %v332 = vunpack.c.l.b16 %v27
  %v333 = vunpack.c.h.b16 %v27
  %v334 = vunpack.c.l.b16 %v28
  %v335 = vunpack.c.h.b16 %v28
  %v336 = vunpack.c.l.b16 %v29
  %v337 = vunpack.c.h.b16 %v29
  %v338 = vunpack.c.l.b16 %v30
  %v339 = vunpack.c.h.b16 %v30
  %v340 = vunpack.c.l.b16 %v31
  %v341 = vunpack.c.h.b16 %v31
  %v342 = vunpack.c.l.b16 %v32
  %v343 = vunpack.c.h.b16 %v32
  %v344 = vunpack.c.l.b16 %v33
  %v345 = vunpack.c.l.b16 %v34
  %v346 = vunpack.c.h.b16 %v34
  %v347 = vunpack.c.l.b16 %v35
  %v348 = vunpack.c.h.b16 %v35
  %v349 = vunpack.c.l.b16 %v36
  %v350 = vunpack.c.h.b16 %v36
  %v351 = vunpack.c.l.b16 %v37
  %v352 = vunpack.c.h.b16 %v37
  %v353 = vunpack.c.l.b16 %v38
  %v354 = vunpack.c.h.b16 %v38
  %v355 = vunpack.c.l.b16 %v39
  %v356 = vunpack.c.h.b16 %v39
  %v357 = vunpack.c.l.b16 %v40
  %v358 = vunpack.c.h.b16 %v40
  %v359 = vunpack.c.l.b16 %v41
  %v360 = vunpack.c.h.b16 %v41
  %v361 = vunpack.c.l.b16 %v42
  %v362 = vunpack.c.h.b16 %v42
  %v363 = vunpack.c.l.b16 %v43
  %v364 = vunpack.c.h.b16 %v43
  %v365 = vunpack.c.l.b16 %v44
  %v366 = vunpack.c.h.b16 %v44
  %v367 = vunpack.c.l.b16 %v45
  %v368 = vunpack.c.h.b16 %v45
  %v369 = vunpack.c.l.b16 %v46
  %v370 = vunpack.c.h.b16 %v46
  %v371 = vunpack.c.l.b16 %v47
  %v372 = vunpack.c.h.b16 %v47
  %v373 = vunpack.c.l.b16 %v48
  %v374 = vunpack.c.h.b16 %v48
  %v375 = vunpack.c.l.b16 %v49
  %v376 = vunpack.c.h.b16 %v49
  %v377 = vunpack.c.l.b16 %v50
  %v378 = vunpack.c.h.b16 %v50
  %v379 = vunpack.c.l.b16 %v51
  %v380 = vunpack.c.l.b16 %v52
  %v381 = vunpack.c.h.b16 %v52
  %v382 = vunpack.c.l.b16 %v53
  %v383 = vunpack.c.h.b16 %v53
  %v384 = vunpack.c.l.b16 %v54
  %v385 = vunpack.c.h.b16 %v54
  %v386 = vunpack.c.l.b16 %v55
  %v387 = vunpack.c.h.b16 %v55
  %v388 = vunpack.c.l.b16 %v56
  %v389 = vunpack.c.h.b16 %v56
  %v390 = vunpack.c.l.b16 %v57
  %v391 = vunpack.c.h.b16 %v57
  %v392 = vunpack.c.l.b16 %v58
  %v393 = vunpack.c.h.b16 %v58
  %v394 = vunpack.c.l.b16 %v59
  %v395 = vunpack.c.h.b16 %v59
  %v396 = vunpack.c.l.b16 %v60
  %v397 = vunpack.c.h.b16 %v60
  %v398 = vunpack.c.l.b16 %v61
  %v399 = vunpack.c.h.b16 %v61
  %v400 = vunpack.c.l.b16 %v62
  %v401 = vunpack.c.h.b16 %v62
  %v402 = vunpack.c.l.b16 %v63
  %v403 = vunpack.c.h.b16 %v63
  %v404 = vunpack.c.l.b16 %v64
  %v405 = vunpack.c.h.b16 %v64
  %v406 = vunpack.c.l.b16 %v65
  %v407 = vunpack.c.h.b16 %v65
  %v408 = vunpack.c.l.b16 %v66
  %v409 = vunpack.c.h.b16 %v66
  %v410 = vunpack.c.l.b16 %v67
  %v411 = vunpack.c.h.b16 %v67
  %v412 = vunpack.c.l.b16 %v68
  %v413 = vunpack.c.h.b16 %v68
  %v414 = vunpack.c.l.b16 %v69
  %v415 = vunpack.c.l.b16 %v70
  %v416 = vunpack.c.h.b16 %v70
  %v417 = vunpack.c.l.b16 %v71
  %v418 = vunpack.c.h.b16 %v71
  %v419 = vunpack.c.l.b16 %v72
  %v420 = vunpack.c.h.b16 %v72
  %v421 = vunpack.c.l.b16 %v73
  %v422 = vunpack.c.h.b16 %v73
  %v423 = vunpack.c.l.b16 %v74
  %v424 = vunpack.c.h.b16 %v74
  %v425 = vunpack.c.l.b16 %v75
  %v426 = vunpack.c.h.b16 %v75
  %v427 = vunpack.c.l.b16 %v76
  %v428 = vunpack.c.h.b16 %v76
  %v429 = vunpack.c.l.b16 %v77
  %v430 = vunpack.c.h.b16 %v77
  %v431 = vunpack.c.l.b16 %v78
  %v432 = vunpack.c.h.b16 %v78
  %v433 = vunpack.c.l.b16 %v79
  %v434 = vunpack.c.h.b16 %v79
  %v435 = vunpack.c.l.b16 %v80
  %v436 = vunpack.c.h.b16 %v80
  %v437 = vunpack.c.l.b16 %v81
  %v438 = vunpack.c.h.b16 %v81
  %v439 = vunpack.c.l.b16 %v82
  %v440 = vunpack.c.h.b16 %v82
  %v441 = vunpack.c.l.b16 %v83
  %v442 = vunpack.c.h.b16 %v83
  %v443 = vunpack.c.l.b16 %v84
  %v444 = vunpack.c.h.b16 %v84
  %v445 = vunpack.c.l.b16 %v85
  %v446 = vunpack.c.h.b16 %v85
  %v447 = vunpack.c.l.b16 %v86
  %v448 = vunpack.c.h.b16 %v86
  %v449 = vunpack.c.l.b16 %v87
  %v450 = vunpack.c.l.b16 %v88
  %v451 = vunpack.c.h.b16 %v88
  %v452 = vunpack.c.l.b16 %v89
  %v453 = vunpack.c.h.b16 %v89
  %v454 = vunpack.c.l.b16 %v90
  %v455 = vunpack.c.h.b16 %v90
  %v456 = vunpack.c.l.b16 %v91
  %v457 = vunpack.c.h.b16 %v91
  %v458 = vunpack.c.l.b16 %v92
  %v459 = vunpack.c.h.b16 %v92
  %v460 = vunpack.c.l.b16 %v93
  %v461 = vunpack.c.h.b16 %v93
  %v462 = vunpack.c.l.b16 %v94
  %v463 = vunpack.c.h.b16 %v94
  %v464 = vunpack.c.l.b16 %v95
  %v465 = vunpack.c.h.b16 %v95
  %v466 = vunpack.c.l.b16 %v96
  %v467 = vunpack.c.h.b16 %v96
  %v468 = vunpack.c.l.b16 %v97
  %v469 = vunpack.c.h.b16 %v97
  %v470 = vunpack.c.l.b16 %v98
  %v471 = vunpack.c.h.b16 %v98
  %v472 = vunpack.c.l.b16 %v99
  %v473 = vunpack.c.h.b16 %v99
  %v474 = vunpack.c.l.b16 %v100
  %v475 = vunpack.c.h.b16 %v100
  %v476 = vunpack.c.l.b16 %v101
  %v477 = vunpack.c.h.b16 %v101
  %v478 = vunpack.c.l.b16 %v102
  %v479 = vunpack.c.h.b16 %v102
  %v480 = vunpack.c.l.b16 %v103
  %v481 = vunpack.c.h.b16 %v103
  %v482 = vunpack.c.l.b16 %v104
  %v483 = vunpack.c.h.b16 %v104
  %v484 = vunpack.c.l.b16 %v105
  %v485 = vunpack.c.l.b16 %v106
  %v486 = vunpack.c.h.b16 %v106
  %v487 = vunpack.c.l.b16 %v107
  %v488 = vunpack.c.h.b16 %v107
  %v489 = vunpack.c.l.b16 %v108
  %v490 = vunpack.c.h.b16 %v108
  %v491 = vunpack.c.l.b16 %v109
  %v492 = vunpack.c.h.b16 %v109
  %v493 = vunpack.c.l.b16 %v110
  %v494 = vunpack.c.h.b16 %v110
  %v495 = vunpack.c.l.b16 %v111
  %v496 = vunpack.c.h.b16 %v111
  %v497 = vunpack.c.l.b16 %v112
  %v498 = vunpack.c.h.b16 %v112
  %v499 = vunpack.c.l.b16 %v113
  %v500 = vunpack.c.h.b16 %v113
  %v501 = vunpack.c.l.b16 %v114
  %v502 = vunpack.c.h.b16 %v114
  %v503 = vunpack.c.l.b16 %v115
  %v504 = vunpack.c.h.b16 %v115
  %v505 = vunpack.c.l.b16 %v116
  %v506 = vunpack.c.h.b16 %v116
  %v507 = vunpack.c.l.b16 %v117
  %v508 = vunpack.c.h.b16 %v117
  %v509 = vunpack.c.l.b16 %v118
  %v510 = vunpack.c.h.b16 %v118
  %v511 = vunpack.c.l.b16 %v119
  %v512 = vunpack.c.h.b16 %v119
  %v513 = vunpack.c.l.b16 %v120
  %v514 = vunpack.c.h.b16 %v120
  %v515 = vunpack.c.l.b16 %v121
  %v516 = vunpack.c.h.b16 %v121
  %v517 = vunpack.c.l.b16 %v122
  %v518 = vunpack.c.h.b16 %v122
  %v519 = vunpack.c.l.b16 %v123
  %v520 = vunpack.c.l.b16 %v124
  %v521 = vunpack.c.h.b16 %v124
  %v522 = vunpack.c.l.b16 %v125
  %v523 = vunpack.c.h.b16 %v125
  %v524 = vunpack.c.l.b16 %v126
  %v525 = vunpack.c.h.b16 %v126
  %v526 = vunpack.c.l.b16 %v127
  %v527 = vunpack.c.h.b16 %v127
  %v528 = vunpack.c.l.b16 %v128
  %v529 = vunpack.c.h.b16 %v128
  %v530 = vunpack.c.l.b16 %v129
  %v531 = vunpack.c.h.b16 %v129
  %v532 = vunpack.c.l.b16 %v130
  %v533 = vunpack.c.h.b16 %v130
  %v534 = vunpack.c.l.b16 %v131
  %v535 = vunpack.c.h.b16 %v131
  %v536 = vunpack.c.l.b16 %v132
  %v537 = vunpack.c.h.b16 %v132
  %v538 = vunpack.c.l.b16 %v133
  %v539 = vunpack.c.h.b16 %v133
  %v540 = vunpack.c.l.b16 %v134
  %v541 = vunpack.c.h.b16 %v134
  %v542 = vunpack.c.l.b16 %v135
  %v543 = vunpack.c.h.b16 %v135
  %v544 = vunpack.c.l.b16 %v136
  %v545 = vunpack.c.h.b16 %v136
  %v546 = vunpack.c.l.b16 %v137
  %v547 = vunpack.c.h.b16 %v137
  %v548 = vunpack.c.l.b16 %v138
  %v549 = vunpack.c.h.b16 %v138
  %v550 = vunpack.c.l.b16 %v139
  %v551 = vunpack.c.h.b16 %v139
  %v552 = vunpack.c.l.b16 %v140
  %v553 = vunpack.c.h.b16 %v140
  %v554 = vunpack.c.l.b16 %v141
  %v555 = vunpack.c.l.b16 %v142
  %v556 = vunpack.c.h.b16 %v142
  %v557 = vunpack.c.l.b16 %v143
  %v558 = vunpack.c.h.b16 %v143
  %v559 = vunpack.c.l.b16 %v144
  %v560 = vunpack.c.h.b16 %v144
  %v561 = vunpack.c.l.b16 %v145
  %v562 = vunpack.c.h.b16 %v145
  %v563 = vunpack.c.l.b16 %v146
  %v564 = vunpack.c.h.b16 %v146
  %v565 = vunpack.c.l.b16 %v147
  %v566 = vunpack.c.h.b16 %v147
  %v567 = vunpack.c.l.b16 %v148
  %v568 = vunpack.c.h.b16 %v148
  %v569 = vunpack.c.l.b16 %v149
  %v570 = vunpack.c.h.b16 %v149
  %v571 = vunpack.c.l.b16 %v150
  %v572 = vunpack.c.h.b16 %v150
  %v573 = vunpack.c.l.b16 %v151
  %v574 = vunpack.c.h.b16 %v151
  %v575 = vunpack.c.l.b16 %v152
  %v576 = vunpack.c.h.b16 %v152
  %v577 = vunpack.c.l.b16 %v153
  %v578 = vunpack.c.h.b16 %v153
  %v579 = vunpack.c.l.b16 %v154
  %v580 = vunpack.c.h.b16 %v154
  %v581 = vunpack.c.l.b16 %v155
  %v582 = vunpack.c.h.b16 %v155
  %v583 = vunpack.c.l.b16 %v156
  %v584 = vunpack.c.h.b16 %v156
  %v585 = vunpack.c.l.b16 %v157
  %v586 = vunpack.c.h.b16 %v157
  %v587 = vunpack.c.l.b16 %v158
  %v588 = vunpack.c.h.b16 %v158
  %v589 = vunpack.c.l.b16 %v159
  %v590 = vpack.c.b16 %v345, %v310
  %v591 = vpack.c.b16 %v346, %v311
  %v592 = vpack.c.b16 %v347, %v312
  %v593 = vpack.c.b16 %v348, %v313
  %v594 = vpack.c.b16 %v349, %v314
  %v595 = vpack.c.b16 %v350, %v315
  %v596 = vpack.c.b16 %v351, %v316
  %v597 = vpack.c.b16 %v352, %v317
  %v598 = vpack.c.b16 %v353, %v318
  %v599 = vpack.c.b16 %v354, %v319
  %v600 = vpack.c.b16 %v355, %v320
  %v601 = vpack.c.b16 %v356, %v321
  %v602 = vpack.c.b16 %v357, %v322
  %v603 = vpack.c.b16 %v358, %v323
  %v604 = vpack.c.b16 %v359, %v324
  %v605 = vpack.c.b16 %v360, %v325
  %v606 = vpack.c.b16 %v361, %v326
  %v607 = vpack.c.b16 %v362, %v327
  %v608 = vpack.c.b16 %v363, %v328
  %v609 = vpack.c.b16 %v364, %v329
  %v610 = vpack.c.b16 %v365, %v330
  %v611 = vpack.c.b16 %v366, %v331
  %v612 = vpack.c.b16 %v367, %v332
  %v613 = vpack.c.b16 %v368, %v333
  %v614 = vpack.c.b16 %v369, %v334
  %v615 = vpack.c.b16 %v370, %v335
  %v616 = vpack.c.b16 %v371, %v336
  %v617 = vpack.c.b16 %v372, %v337
  %v618 = vpack.c.b16 %v373, %v338
  %v619 = vpack.c.b16 %v374, %v339
  %v620 = vpack.c.b16 %v375, %v340
  %v621 = vpack.c.b16 %v376, %v341
  %v622 = vpack.c.b16 %v377, %v342
  %v623 = vpack.c.b16 %v378, %v343
  %v624 = vpack.c.b16 %v379, %v344
  %v625 = vpack.c.b16 %v415, %v380
  %v626 = vpack.c.b16 %v416, %v381
  %v627 = vpack.c.b16 %v417, %v382
  %v628 = vpack.c.b16 %v418, %v383
  %v629 = vpack.c.b16 %v419, %v384
  %v630 = vpack.c.b16 %v420, %v385
  %v631 = vpack.c.b16 %v421, %v386
  %v632 = vpack.c.b16 %v422, %v387
  %v633 = vpack.c.b16 %v423, %v388
  %v634 = vpack.c.b16 %v424, %v389
  %v635 = vpack.c.b16 %v425, %v390
  %v636 = vpack.c.b16 %v426, %v391
  %v637 = vpack.c.b16 %v427, %v392
  %v638 = vpack.c.b16 %v428, %v393
  %v639 = vpack.c.b16 %v429, %v394
  %v640 = vpack.c.b16 %v430, %v395
  %v641 = vpack.c.b16 %v431, %v396
  %v642 = vpack.c.b16 %v432, %v397
  %v643 = vpack.c.b16 %v433, %v398
  %v644 = vpack.c.b16 %v434, %v399
  %v645 = vpack.c.b16 %v435, %v400
  %v646 = vpack.c.b16 %v436, %v401
  %v647 = vpack.c.b16 %v437, %v402
  %v648 = vpack.c.b16 %v438, %v403
  %v649 = vpack.c.b16 %v439, %v404
  %v650 = vpack.c.b16 %v440, %v405
  %v651 = vpack.c.b16 %v441, %v406
  %v652 = vpack.c.b16 %v442, %v407
  %v653 = vpack.c.b16 %v443, %v408
  %v654 = vpack.c.b16 %v444, %v409
  %v655 = vpack.c.b16 %v445, %v410
  %v656 = vpack.c.b16 %v446, %v411
  %v657 = vpack.c.b16 %v447, %v412
  %v658 = vpack.c.b16 %v448, %v413
  %v659 = vpack.c.b16 %v449, %v414
  %v660 = vpack.c.b16 %v485, %v450
  %v661 = vpack.c.b16 %v486, %v451
  %v662 = vpack.c.b16 %v487, %v452
  %v663 = vpack.c.b16 %v488, %v453
  %v664 = vpack.c.b16 %v489, %v454
  %v665 = vpack.c.b16 %v490, %v455
  %v666 = vpack.c.b16 %v491, %v456
  %v667 = vpack.c.b16 %v492, %v457
  %v668 = vpack.c.b16 %v493, %v458
  %v669 = vpack.c.b16 %v494, %v459
  %v670 = vpack.c.b16 %v495, %v460
  %v671 = vpack.c.b16 %v496, %v461
  %v672 = vpack.c.b16 %v497, %v462
  %v673 = vpack.c.b16 %v498, %v463
  %v674 = vpack.c.b16 %v499, %v464
  %v675 = vpack.c.b16 %v500, %v465
  %v676 = vpack.c.b16 %v501, %v466
  %v677 = vpack.c.b16 %v502, %v467
  %v678 = vpack.c.b16 %v503, %v468
  %v679 = vpack.c.b16 %v504, %v469
  %v680 = vpack.c.b16 %v505, %v470
  %v681 = vpack.c.b16 %v506, %v471
  %v682 = vpack.c.b16 %v507, %v472
  %v683 = vpack.c.b16 %v508, %v473
  %v684 = vpack.c.b16 %v509, %v474
  %v685 = vpack.c.b16 %v510, %v475
  %v686 = vpack.c.b16 %v511, %v476
  %v687 = vpack.c.b16 %v512, %v477
  %v688 = vpack.c.b16 %v513, %v478
  %v689 = vpack.c.b16 %v514, %v479
  %v690 = vpack.c.b16 %v515, %v480
  %v691 = vpack.c.b16 %v516, %v481
  %v692 = vpack.c.b16 %v517, %v482
  %v693 = vpack.c.b16 %v518, %v483
  %v694 = vpack.c.b16 %v519, %v484
  %v695 = vpack.c.b16 %v555, %v520
  %v696 = vpack.c.b16 %v556, %v521
  %v697 = vpack.c.b16 %v557, %v522
  %v698 = vpack.c.b16 %v558, %v523
  %v699 = vpack.c.b16 %v559, %v524
  %v700 = vpack.c.b16 %v560, %v525
  %v701 = vpack.c.b16 %v561, %v526
  %v702 = vpack.c.b16 %v562, %v527
  %v703 = vpack.c.b16 %v563, %v528
  %v704 = vpack.c.b16 %v564, %v529
  %v705 = vpack.c.b16 %v565, %v530
  %v706 = vpack.c.b16 %v566, %v531
  %v707 = vpack.c.b16 %v567, %v532
  %v708 = vpack.c.b16 %v568, %v533
  %v709 = vpack.c.b16 %v569, %v534
  %v710 = vpack.c.b16 %v570, %v535
  %v711 = vpack.c.b16 %v571, %v536
  %v712 = vpack.c.b16 %v572, %v537
  %v713 = vpack.c.b16 %v573, %v538
  %v714 = vpack.c.b16 %v574, %v539
  %v715 = vpack.c.b16 %v575, %v540
  %v716 = vpack.c.b16 %v576, %v541
  %v717 = vpack.c.b16 %v577, %v542
  %v718 = vpack.c.b16 %v578, %v543
  %v719 = vpack.c.b16 %v579, %v544
  %v720 = vpack.c.b16 %v580, %v545
  %v721 = vpack.c.b16 %v581, %v546
  %v722 = vpack.c.b16 %v582, %v547
  %v723 = vpack.c.b16 %v583, %v548
  %v724 = vpack.c.b16 %v584, %v549
  %v725 = vpack.c.b16 %v585, %v550
  %v726 = vpack.c.b16 %v586, %v551
  %v727 = vpack.c.b16 %v587, %v552
  %v728 = vpack.c.b16 %v588, %v553
  %v729 = vpack.c.b16 %v589, %v554
  %vm870 = vcmask 523264
  %v872 = vsel %vm870, %v15, 0
  %874 = vmatprep.subr.bf16.mxu0 %v591
  %875 = vmatpush1.bf16.msra.mxu0 %v590
  %876 = vmatprep.subr.bf16.mxu0 %v626
  %877 = vmatpush1.bf16.msra.mxu0 %v625
  %878 = vmatprep.subr.bf16.mxu0 %v661
  %879 = vmatpush1.bf16.msra.mxu0 %v660
  %880 = vmatprep.subr.bf16.mxu0 %v696
  %881 = vmatpush1.bf16.msra.mxu0 %v695
  %882 = vmatprep.subr.bf16.mxu0 0
  %883 = vmatpush1.bf16.msra.mxu0 0
  %884 = vmatprep.subr.bf16.mxu0 0
  %885 = vmatpush1.bf16.msra.mxu0 0
  %886 = vmatprep.subr.bf16.mxu0 0
  %887 = vmatpush1.bf16.msra.mxu0 0
  %888 = vmatprep.subr.bf16.mxu0 0
  %889 = vmatpush1.bf16.msra.mxu0 0
  %890 = vmatprep.subr.bf16.mxu0 0
  %891 = vmatpush1.bf16.msra.mxu0 0
  %892 = vmatprep.subr.bf16.mxu0 0
  %893 = vmatpush1.bf16.msra.mxu0 0
  %894 = vmatprep.subr.bf16.mxu0 0
  %895 = vmatpush1.bf16.msra.mxu0 0
  %896 = vmatprep.subr.bf16.mxu0 0
  %897 = vmatpush1.bf16.msra.mxu0 0
  %898 = vmatprep.subr.bf16.mxu0 0
  %899 = vmatpush1.bf16.msra.mxu0 0
  %900 = vmatprep.subr.bf16.mxu0 0
  %901 = vmatpush1.bf16.msra.mxu0 0
  %902 = vmatprep.subr.bf16.mxu0 0
  %903 = vmatpush1.bf16.msra.mxu0 0
  %904 = vmatprep.subr.bf16.mxu0 0
  %905 = vmatpush1.bf16.msra.mxu0 0
  %906 = vmatprep.mubr.bf16.mxu0 0
  %907 = vmatmul.mubr.bf16.gmra.mrb[0].mxu0 %v872
  %v908 = vpop.f32.mrb[0].mxu0
  %v909 = vadd.f32 %v164, %v908
  %v910 = vpop.f32.mrb[0].mxu0
  %v911 = vadd.f32 %v164, %v910
  %v912 = vpop.f32.mrb[0].mxu0
  %v913 = vpop.f32.mrb[0].mxu0
  %914 = vdwg.mxu0
  %915 = vmatprep.subr.bf16.mxu0 %v593
  %916 = vmatpush1.bf16.msra.mxu0 %v592
  %917 = vmatprep.subr.bf16.mxu0 %v628
  %918 = vmatpush1.bf16.msra.mxu0 %v627
  %919 = vmatprep.subr.bf16.mxu0 %v663
  %920 = vmatpush1.bf16.msra.mxu0 %v662
  %921 = vmatprep.subr.bf16.mxu0 %v698
  %922 = vmatpush1.bf16.msra.mxu0 %v697
  %923 = vmatprep.subr.bf16.mxu0 0
  %924 = vmatpush1.bf16.msra.mxu0 0
  %925 = vmatprep.subr.bf16.mxu0 0
  %926 = vmatpush1.bf16.msra.mxu0 0
  %927 = vmatprep.subr.bf16.mxu0 0
  %928 = vmatpush1.bf16.msra.mxu0 0
  %929 = vmatprep.subr.bf16.mxu0 0
  %930 = vmatpush1.bf16.msra.mxu0 0
  %931 = vmatprep.subr.bf16.mxu0 0
  %932 = vmatpush1.bf16.msra.mxu0 0
  %933 = vmatprep.subr.bf16.mxu0 0
  %934 = vmatpush1.bf16.msra.mxu0 0
  %935 = vmatprep.subr.bf16.mxu0 0
  %936 = vmatpush1.bf16.msra.mxu0 0
  %937 = vmatprep.subr.bf16.mxu0 0
  %938 = vmatpush1.bf16.msra.mxu0 0
  %939 = vmatprep.subr.bf16.mxu0 0
  %940 = vmatpush1.bf16.msra.mxu0 0
  %941 = vmatprep.subr.bf16.mxu0 0
  %942 = vmatpush1.bf16.msra.mxu0 0
  %943 = vmatprep.subr.bf16.mxu0 0
  %944 = vmatpush1.bf16.msra.mxu0 0
  %945 = vmatprep.subr.bf16.mxu0 0
  %946 = vmatpush1.bf16.msra.mxu0 0
  %947 = vmatprep.mubr.bf16.mxu0 0
  %948 = vmatmul.mubr.bf16.gmra.mrb[0].mxu0 %v872
  %v949 = vpop.f32.mrb[0].mxu0
  %v950 = vadd.f32 %v164, %v949
  %v951 = vpop.f32.mrb[0].mxu0
  %v952 = vadd.f32 %v164, %v951
  %v953 = vpop.f32.mrb[0].mxu0
  %v954 = vpop.f32.mrb[0].mxu0
  %955 = vdwg.mxu0
  %956 = vmatprep.subr.bf16.mxu0 %v595
  %957 = vmatpush1.bf16.msra.mxu0 %v594
  %958 = vmatprep.subr.bf16.mxu0 %v630
  %959 = vmatpush1.bf16.msra.mxu0 %v629
  %960 = vmatprep.subr.bf16.mxu0 %v665
  %961 = vmatpush1.bf16.msra.mxu0 %v664
  %962 = vmatprep.subr.bf16.mxu0 %v700
  %963 = vmatpush1.bf16.msra.mxu0 %v699
  %964 = vmatprep.subr.bf16.mxu0 0
  %965 = vmatpush1.bf16.msra.mxu0 0
  %966 = vmatprep.subr.bf16.mxu0 0
  %967 = vmatpush1.bf16.msra.mxu0 0
  %968 = vmatprep.subr.bf16.mxu0 0
  %969 = vmatpush1.bf16.msra.mxu0 0
  %970 = vmatprep.subr.bf16.mxu0 0
  %971 = vmatpush1.bf16.msra.mxu0 0
  %972 = vmatprep.subr.bf16.mxu0 0
  %973 = vmatpush1.bf16.msra.mxu0 0
  %974 = vmatprep.subr.bf16.mxu0 0
  %975 = vmatpush1.bf16.msra.mxu0 0
  %976 = vmatprep.subr.bf16.mxu0 0
  %977 = vmatpush1.bf16.msra.mxu0 0
  %978 = vmatprep.subr.bf16.mxu0 0
  %979 = vmatpush1.bf16.msra.mxu0 0
  %980 = vmatprep.subr.bf16.mxu0 0
  %981 = vmatpush1.bf16.msra.mxu0 0
  %982 = vmatprep.subr.bf16.mxu0 0
  %983 = vmatpush1.bf16.msra.mxu0 0
  %984 = vmatprep.subr.bf16.mxu0 0
  %985 = vmatpush1.bf16.msra.mxu0 0
  %986 = vmatprep.subr.bf16.mxu0 0
  %987 = vmatpush1.bf16.msra.mxu0 0
  %988 = vmatprep.mubr.bf16.mxu0 0
  %989 = vmatmul.mubr.bf16.gmra.mrb[0].mxu0 %v872
  %v990 = vpop.f32.mrb[0].mxu0
  %v991 = vadd.f32 %v164, %v990
  %v992 = vpop.f32.mrb[0].mxu0
  %v993 = vadd.f32 %v164, %v992
  %v994 = vpop.f32.mrb[0].mxu0
  %v995 = vpop.f32.mrb[0].mxu0
  %996 = vdwg.mxu0
  %997 = vmatprep.subr.bf16.mxu0 %v597
  %998 = vmatpush1.bf16.msra.mxu0 %v596
  %999 = vmatprep.subr.bf16.mxu0 %v632
  %1000 = vmatpush1.bf16.msra.mxu0 %v631
  %1001 = vmatprep.subr.bf16.mxu0 %v667
  %1002 = vmatpush1.bf16.msra.mxu0 %v666
  %1003 = vmatprep.subr.bf16.mxu0 %v702
  %1004 = vmatpush1.bf16.msra.mxu0 %v701
  %1005 = vmatprep.subr.bf16.mxu0 0
  %1006 = vmatpush1.bf16.msra.mxu0 0
  %1007 = vmatprep.subr.bf16.mxu0 0
  %1008 = vmatpush1.bf16.msra.mxu0 0
  %1009 = vmatprep.subr.bf16.mxu0 0
  %1010 = vmatpush1.bf16.msra.mxu0 0
  %1011 = vmatprep.subr.bf16.mxu0 0
  %1012 = vmatpush1.bf16.msra.mxu0 0
  %1013 = vmatprep.subr.bf16.mxu0 0
  %1014 = vmatpush1.bf16.msra.mxu0 0
  %1015 = vmatprep.subr.bf16.mxu0 0
  %1016 = vmatpush1.bf16.msra.mxu0 0
  %1017 = vmatprep.subr.bf16.mxu0 0
  %1018 = vmatpush1.bf16.msra.mxu0 0
  %1019 = vmatprep.subr.bf16.mxu0 0
  %1020 = vmatpush1.bf16.msra.mxu0 0
  %1021 = vmatprep.subr.bf16.mxu0 0
  %1022 = vmatpush1.bf16.msra.mxu0 0
  %1023 = vmatprep.subr.bf16.mxu0 0
  %1024 = vmatpush1.bf16.msra.mxu0 0
  %1025 = vmatprep.subr.bf16.mxu0 0
  %1026 = vmatpush1.bf16.msra.mxu0 0
  %1027 = vmatprep.subr.bf16.mxu0 0
  %1028 = vmatpush1.bf16.msra.mxu0 0
  %1029 = vmatprep.mubr.bf16.mxu0 0
  %1030 = vmatmul.mubr.bf16.gmra.mrb[0].mxu0 %v872
  %v1031 = vpop.f32.mrb[0].mxu0
  %v1032 = vadd.f32 %v164, %v1031
  %v1033 = vpop.f32.mrb[0].mxu0
  %v1034 = vadd.f32 %v164, %v1033
  %v1035 = vpop.f32.mrb[0].mxu0
  %v1036 = vpop.f32.mrb[0].mxu0
  %1037 = vdwg.mxu0
  %1038 = vmatprep.subr.bf16.mxu0 %v599
  %1039 = vmatpush1.bf16.msra.mxu0 %v598
  %1040 = vmatprep.subr.bf16.mxu0 %v634
  %1041 = vmatpush1.bf16.msra.mxu0 %v633
  %1042 = vmatprep.subr.bf16.mxu0 %v669
  %1043 = vmatpush1.bf16.msra.mxu0 %v668
  %1044 = vmatprep.subr.bf16.mxu0 %v704
  %1045 = vmatpush1.bf16.msra.mxu0 %v703
  %1046 = vmatprep.subr.bf16.mxu0 0
  %1047 = vmatpush1.bf16.msra.mxu0 0
  %1048 = vmatprep.subr.bf16.mxu0 0
  %1049 = vmatpush1.bf16.msra.mxu0 0
  %1050 = vmatprep.subr.bf16.mxu0 0
  %1051 = vmatpush1.bf16.msra.mxu0 0
  %1052 = vmatprep.subr.bf16.mxu0 0
  %1053 = vmatpush1.bf16.msra.mxu0 0
  %1054 = vmatprep.subr.bf16.mxu0 0
  %1055 = vmatpush1.bf16.msra.mxu0 0
  %1056 = vmatprep.subr.bf16.mxu0 0
  %1057 = vmatpush1.bf16.msra.mxu0 0
  %1058 = vmatprep.subr.bf16.mxu0 0
  %1059 = vmatpush1.bf16.msra.mxu0 0
  %1060 = vmatprep.subr.bf16.mxu0 0
  %1061 = vmatpush1.bf16.msra.mxu0 0
  %1062 = vmatprep.subr.bf16.mxu0 0
  %1063 = vmatpush1.bf16.msra.mxu0 0
  %1064 = vmatprep.subr.bf16.mxu0 0
  %1065 = vmatpush1.bf16.msra.mxu0 0
  %1066 = vmatprep.subr.bf16.mxu0 0
  %1067 = vmatpush1.bf16.msra.mxu0 0
  %1068 = vmatprep.subr.bf16.mxu0 0
  %1069 = vmatpush1.bf16.msra.mxu0 0
  %1070 = vmatprep.mubr.bf16.mxu0 0
  %1071 = vmatmul.mubr.bf16.gmra.mrb[0].mxu0 %v872
  %v1072 = vpop.f32.mrb[0].mxu0
  %v1073 = vadd.f32 %v164, %v1072
  %v1074 = vpop.f32.mrb[0].mxu0
  %v1075 = vadd.f32 %v164, %v1074
  %v1076 = vpop.f32.mrb[0].mxu0
  %v1077 = vpop.f32.mrb[0].mxu0
  %1078 = vdwg.mxu0
  %1079 = vmatprep.subr.bf16.mxu0 %v601
  %1080 = vmatpush1.bf16.msra.mxu0 %v600
  %1081 = vmatprep.subr.bf16.mxu0 %v636
  %1082 = vmatpush1.bf16.msra.mxu0 %v635
  %1083 = vmatprep.subr.bf16.mxu0 %v671
  %1084 = vmatpush1.bf16.msra.mxu0 %v670
  %1085 = vmatprep.subr.bf16.mxu0 %v706
  %1086 = vmatpush1.bf16.msra.mxu0 %v705
  %1087 = vmatprep.subr.bf16.mxu0 0
  %1088 = vmatpush1.bf16.msra.mxu0 0
  %1089 = vmatprep.subr.bf16.mxu0 0
  %1090 = vmatpush1.bf16.msra.mxu0 0
  %1091 = vmatprep.subr.bf16.mxu0 0
  %1092 = vmatpush1.bf16.msra.mxu0 0
  %1093 = vmatprep.subr.bf16.mxu0 0
  %1094 = vmatpush1.bf16.msra.mxu0 0
  %1095 = vmatprep.subr.bf16.mxu0 0
  %1096 = vmatpush1.bf16.msra.mxu0 0
  %1097 = vmatprep.subr.bf16.mxu0 0
  %1098 = vmatpush1.bf16.msra.mxu0 0
  %1099 = vmatprep.subr.bf16.mxu0 0
  %1100 = vmatpush1.bf16.msra.mxu0 0
  %1101 = vmatprep.subr.bf16.mxu0 0
  %1102 = vmatpush1.bf16.msra.mxu0 0
  %1103 = vmatprep.subr.bf16.mxu0 0
  %1104 = vmatpush1.bf16.msra.mxu0 0
  %1105 = vmatprep.subr.bf16.mxu0 0
  %1106 = vmatpush1.bf16.msra.mxu0 0
  %1107 = vmatprep.subr.bf16.mxu0 0
  %1108 = vmatpush1.bf16.msra.mxu0 0
  %1109 = vmatprep.subr.bf16.mxu0 0
  %1110 = vmatpush1.bf16.msra.mxu0 0
  %1111 = vmatprep.mubr.bf16.mxu0 0
  %1112 = vmatmul.mubr.bf16.gmra.mrb[0].mxu0 %v872
  %v1113 = vpop.f32.mrb[0].mxu0
  %v1114 = vadd.f32 %v164, %v1113
  %v1115 = vpop.f32.mrb[0].mxu0
  %v1116 = vadd.f32 %v164, %v1115
  %v1117 = vpop.f32.mrb[0].mxu0
  %v1118 = vpop.f32.mrb[0].mxu0
  %1119 = vdwg.mxu0
  %1120 = vmatprep.subr.bf16.mxu0 %v603
  %1121 = vmatpush1.bf16.msra.mxu0 %v602
  %1122 = vmatprep.subr.bf16.mxu0 %v638
  %1123 = vmatpush1.bf16.msra.mxu0 %v637
  %1124 = vmatprep.subr.bf16.mxu0 %v673
  %1125 = vmatpush1.bf16.msra.mxu0 %v672
  %1126 = vmatprep.subr.bf16.mxu0 %v708
  %1127 = vmatpush1.bf16.msra.mxu0 %v707
  %1128 = vmatprep.subr.bf16.mxu0 0
  %1129 = vmatpush1.bf16.msra.mxu0 0
  %1130 = vmatprep.subr.bf16.mxu0 0
  %1131 = vmatpush1.bf16.msra.mxu0 0
  %1132 = vmatprep.subr.bf16.mxu0 0
  %1133 = vmatpush1.bf16.msra.mxu0 0
  %1134 = vmatprep.subr.bf16.mxu0 0
  %1135 = vmatpush1.bf16.msra.mxu0 0
  %1136 = vmatprep.subr.bf16.mxu0 0
  %1137 = vmatpush1.bf16.msra.mxu0 0
  %1138 = vmatprep.subr.bf16.mxu0 0
  %1139 = vmatpush1.bf16.msra.mxu0 0
  %1140 = vmatprep.subr.bf16.mxu0 0
  %1141 = vmatpush1.bf16.msra.mxu0 0
  %1142 = vmatprep.subr.bf16.mxu0 0
  %1143 = vmatpush1.bf16.msra.mxu0 0
  %1144 = vmatprep.subr.bf16.mxu0 0
  %1145 = vmatpush1.bf16.msra.mxu0 0
  %1146 = vmatprep.subr.bf16.mxu0 0
  %1147 = vmatpush1.bf16.msra.mxu0 0
  %1148 = vmatprep.subr.bf16.mxu0 0
  %1149 = vmatpush1.bf16.msra.mxu0 0
  %1150 = vmatprep.subr.bf16.mxu0 0
  %1151 = vmatpush1.bf16.msra.mxu0 0
  %1152 = vmatprep.mubr.bf16.mxu0 0
  %1153 = vmatmul.mubr.bf16.gmra.mrb[0].mxu0 %v872
  %v1154 = vpop.f32.mrb[0].mxu0
  %v1155 = vadd.f32 %v164, %v1154
  %v1156 = vpop.f32.mrb[0].mxu0
  %v1157 = vadd.f32 %v164, %v1156
  %v1158 = vpop.f32.mrb[0].mxu0
  %v1159 = vpop.f32.mrb[0].mxu0
  %1160 = vdwg.mxu0
  %1161 = vmatprep.subr.bf16.mxu0 %v605
  %1162 = vmatpush1.bf16.msra.mxu0 %v604
  %1163 = vmatprep.subr.bf16.mxu0 %v640
  %1164 = vmatpush1.bf16.msra.mxu0 %v639
  %1165 = vmatprep.subr.bf16.mxu0 %v675
  %1166 = vmatpush1.bf16.msra.mxu0 %v674
  %1167 = vmatprep.subr.bf16.mxu0 %v710
  %1168 = vmatpush1.bf16.msra.mxu0 %v709
  %1169 = vmatprep.subr.bf16.mxu0 0
  %1170 = vmatpush1.bf16.msra.mxu0 0
  %1171 = vmatprep.subr.bf16.mxu0 0
  %1172 = vmatpush1.bf16.msra.mxu0 0
  %1173 = vmatprep.subr.bf16.mxu0 0
  %1174 = vmatpush1.bf16.msra.mxu0 0
  %1175 = vmatprep.subr.bf16.mxu0 0
  %1176 = vmatpush1.bf16.msra.mxu0 0
  %1177 = vmatprep.subr.bf16.mxu0 0
  %1178 = vmatpush1.bf16.msra.mxu0 0
  %1179 = vmatprep.subr.bf16.mxu0 0
  %1180 = vmatpush1.bf16.msra.mxu0 0
  %1181 = vmatprep.subr.bf16.mxu0 0
  %1182 = vmatpush1.bf16.msra.mxu0 0
  %1183 = vmatprep.subr.bf16.mxu0 0
  %1184 = vmatpush1.bf16.msra.mxu0 0
  %1185 = vmatprep.subr.bf16.mxu0 0
  %1186 = vmatpush1.bf16.msra.mxu0 0
  %1187 = vmatprep.subr.bf16.mxu0 0
  %1188 = vmatpush1.bf16.msra.mxu0 0
  %1189 = vmatprep.subr.bf16.mxu0 0
  %1190 = vmatpush1.bf16.msra.mxu0 0
  %1191 = vmatprep.subr.bf16.mxu0 0
  %1192 = vmatpush1.bf16.msra.mxu0 0
  %1193 = vmatprep.mubr.bf16.mxu0 0
  %1194 = vmatmul.mubr.bf16.gmra.mrb[0].mxu0 %v872
  %v1195 = vpop.f32.mrb[0].mxu0
  %v1196 = vadd.f32 %v164, %v1195
  %v1197 = vpop.f32.mrb[0].mxu0
  %v1198 = vadd.f32 %v164, %v1197
  %v1199 = vpop.f32.mrb[0].mxu0
  %v1200 = vpop.f32.mrb[0].mxu0
  %1201 = vdwg.mxu0
  %1202 = vmatprep.subr.bf16.mxu0 %v607
  %1203 = vmatpush1.bf16.msra.mxu0 %v606
  %1204 = vmatprep.subr.bf16.mxu0 %v642
  %1205 = vmatpush1.bf16.msra.mxu0 %v641
  %1206 = vmatprep.subr.bf16.mxu0 %v677
  %1207 = vmatpush1.bf16.msra.mxu0 %v676
  %1208 = vmatprep.subr.bf16.mxu0 %v712
  %1209 = vmatpush1.bf16.msra.mxu0 %v711
  %1210 = vmatprep.subr.bf16.mxu0 0
  %1211 = vmatpush1.bf16.msra.mxu0 0
  %1212 = vmatprep.subr.bf16.mxu0 0
  %1213 = vmatpush1.bf16.msra.mxu0 0
  %1214 = vmatprep.subr.bf16.mxu0 0
  %1215 = vmatpush1.bf16.msra.mxu0 0
  %1216 = vmatprep.subr.bf16.mxu0 0
  %1217 = vmatpush1.bf16.msra.mxu0 0
  %1218 = vmatprep.subr.bf16.mxu0 0
  %1219 = vmatpush1.bf16.msra.mxu0 0
  %1220 = vmatprep.subr.bf16.mxu0 0
  %1221 = vmatpush1.bf16.msra.mxu0 0
  %1222 = vmatprep.subr.bf16.mxu0 0
  %1223 = vmatpush1.bf16.msra.mxu0 0
  %1224 = vmatprep.subr.bf16.mxu0 0
  %1225 = vmatpush1.bf16.msra.mxu0 0
  %1226 = vmatprep.subr.bf16.mxu0 0
  %1227 = vmatpush1.bf16.msra.mxu0 0
  %1228 = vmatprep.subr.bf16.mxu0 0
  %1229 = vmatpush1.bf16.msra.mxu0 0
  %1230 = vmatprep.subr.bf16.mxu0 0
  %1231 = vmatpush1.bf16.msra.mxu0 0
  %1232 = vmatprep.subr.bf16.mxu0 0
  %1233 = vmatpush1.bf16.msra.mxu0 0
  %1234 = vmatprep.mubr.bf16.mxu0 0
  %1235 = vmatmul.mubr.bf16.gmra.mrb[0].mxu0 %v872
  %v1236 = vpop.f32.mrb[0].mxu0
  %v1237 = vadd.f32 %v164, %v1236
  %v1238 = vpop.f32.mrb[0].mxu0
  %v1239 = vadd.f32 %v164, %v1238
  %v1240 = vpop.f32.mrb[0].mxu0
  %v1241 = vpop.f32.mrb[0].mxu0
  %1242 = vdwg.mxu0
  %1243 = vmatprep.subr.bf16.mxu0 %v609
  %1244 = vmatpush1.bf16.msra.mxu0 %v608
  %1245 = vmatprep.subr.bf16.mxu0 %v644
  %1246 = vmatpush1.bf16.msra.mxu0 %v643
  %1247 = vmatprep.subr.bf16.mxu0 %v679
  %1248 = vmatpush1.bf16.msra.mxu0 %v678
  %1249 = vmatprep.subr.bf16.mxu0 %v714
  %1250 = vmatpush1.bf16.msra.mxu0 %v713
  %1251 = vmatprep.subr.bf16.mxu0 0
  %1252 = vmatpush1.bf16.msra.mxu0 0
  %1253 = vmatprep.subr.bf16.mxu0 0
  %1254 = vmatpush1.bf16.msra.mxu0 0
  %1255 = vmatprep.subr.bf16.mxu0 0
  %1256 = vmatpush1.bf16.msra.mxu0 0
  %1257 = vmatprep.subr.bf16.mxu0 0
  %1258 = vmatpush1.bf16.msra.mxu0 0
  %1259 = vmatprep.subr.bf16.mxu0 0
  %1260 = vmatpush1.bf16.msra.mxu0 0
  %1261 = vmatprep.subr.bf16.mxu0 0
  %1262 = vmatpush1.bf16.msra.mxu0 0
  %1263 = vmatprep.subr.bf16.mxu0 0
  %1264 = vmatpush1.bf16.msra.mxu0 0
  %1265 = vmatprep.subr.bf16.mxu0 0
  %1266 = vmatpush1.bf16.msra.mxu0 0
  %1267 = vmatprep.subr.bf16.mxu0 0
  %1268 = vmatpush1.bf16.msra.mxu0 0
  %1269 = vmatprep.subr.bf16.mxu0 0
  %1270 = vmatpush1.bf16.msra.mxu0 0
  %1271 = vmatprep.subr.bf16.mxu0 0
  %1272 = vmatpush1.bf16.msra.mxu0 0
  %1273 = vmatprep.subr.bf16.mxu0 0
  %1274 = vmatpush1.bf16.msra.mxu0 0
  %1275 = vmatprep.mubr.bf16.mxu0 0
  %1276 = vmatmul.mubr.bf16.gmra.mrb[0].mxu0 %v872
  %v1277 = vpop.f32.mrb[0].mxu0
  %v1278 = vadd.f32 %v164, %v1277
  %v1279 = vpop.f32.mrb[0].mxu0
  %v1280 = vadd.f32 %v164, %v1279
  %v1281 = vpop.f32.mrb[0].mxu0
  %v1282 = vpop.f32.mrb[0].mxu0
  %1283 = vdwg.mxu0
  %1284 = vmatprep.subr.bf16.mxu0 %v611
  %1285 = vmatpush1.bf16.msra.mxu0 %v610
  %1286 = vmatprep.subr.bf16.mxu0 %v646
  %1287 = vmatpush1.bf16.msra.mxu0 %v645
  %1288 = vmatprep.subr.bf16.mxu0 %v681
  %1289 = vmatpush1.bf16.msra.mxu0 %v680
  %1290 = vmatprep.subr.bf16.mxu0 %v716
  %1291 = vmatpush1.bf16.msra.mxu0 %v715
  %1292 = vmatprep.subr.bf16.mxu0 0
  %1293 = vmatpush1.bf16.msra.mxu0 0
  %1294 = vmatprep.subr.bf16.mxu0 0
  %1295 = vmatpush1.bf16.msra.mxu0 0
  %1296 = vmatprep.subr.bf16.mxu0 0
  %1297 = vmatpush1.bf16.msra.mxu0 0
  %1298 = vmatprep.subr.bf16.mxu0 0
  %1299 = vmatpush1.bf16.msra.mxu0 0
  %1300 = vmatprep.subr.bf16.mxu0 0
  %1301 = vmatpush1.bf16.msra.mxu0 0
  %1302 = vmatprep.subr.bf16.mxu0 0
  %1303 = vmatpush1.bf16.msra.mxu0 0
  %1304 = vmatprep.subr.bf16.mxu0 0
  %1305 = vmatpush1.bf16.msra.mxu0 0
  %1306 = vmatprep.subr.bf16.mxu0 0
  %1307 = vmatpush1.bf16.msra.mxu0 0
  %1308 = vmatprep.subr.bf16.mxu0 0
  %1309 = vmatpush1.bf16.msra.mxu0 0
  %1310 = vmatprep.subr.bf16.mxu0 0
  %1311 = vmatpush1.bf16.msra.mxu0 0
  %1312 = vmatprep.subr.bf16.mxu0 0
  %1313 = vmatpush1.bf16.msra.mxu0 0
  %1314 = vmatprep.subr.bf16.mxu0 0
  %1315 = vmatpush1.bf16.msra.mxu0 0
  %1316 = vmatprep.mubr.bf16.mxu0 0
  %1317 = vmatmul.mubr.bf16.gmra.mrb[0].mxu0 %v872
  %v1318 = vpop.f32.mrb[0].mxu0
  %v1319 = vadd.f32 %v164, %v1318
  %v1320 = vpop.f32.mrb[0].mxu0
  %v1321 = vadd.f32 %v164, %v1320
  %v1322 = vpop.f32.mrb[0].mxu0
  %v1323 = vpop.f32.mrb[0].mxu0
  %1324 = vdwg.mxu0
  %1325 = vmatprep.subr.bf16.mxu0 %v613
  %1326 = vmatpush1.bf16.msra.mxu0 %v612
  %1327 = vmatprep.subr.bf16.mxu0 %v648
  %1328 = vmatpush1.bf16.msra.mxu0 %v647
  %1329 = vmatprep.subr.bf16.mxu0 %v683
  %1330 = vmatpush1.bf16.msra.mxu0 %v682
  %1331 = vmatprep.subr.bf16.mxu0 %v718
  %1332 = vmatpush1.bf16.msra.mxu0 %v717
  %1333 = vmatprep.subr.bf16.mxu0 0
  %1334 = vmatpush1.bf16.msra.mxu0 0
  %1335 = vmatprep.subr.bf16.mxu0 0
  %1336 = vmatpush1.bf16.msra.mxu0 0
  %1337 = vmatprep.subr.bf16.mxu0 0
  %1338 = vmatpush1.bf16.msra.mxu0 0
  %1339 = vmatprep.subr.bf16.mxu0 0
  %1340 = vmatpush1.bf16.msra.mxu0 0
  %1341 = vmatprep.subr.bf16.mxu0 0
  %1342 = vmatpush1.bf16.msra.mxu0 0
  %1343 = vmatprep.subr.bf16.mxu0 0
  %1344 = vmatpush1.bf16.msra.mxu0 0
  %1345 = vmatprep.subr.bf16.mxu0 0
  %1346 = vmatpush1.bf16.msra.mxu0 0
  %1347 = vmatprep.subr.bf16.mxu0 0
  %1348 = vmatpush1.bf16.msra.mxu0 0
  %1349 = vmatprep.subr.bf16.mxu0 0
  %1350 = vmatpush1.bf16.msra.mxu0 0
  %1351 = vmatprep.subr.bf16.mxu0 0
  %1352 = vmatpush1.bf16.msra.mxu0 0
  %1353 = vmatprep.subr.bf16.mxu0 0
  %1354 = vmatpush1.bf16.msra.mxu0 0
  %1355 = vmatprep.subr.bf16.mxu0 0
  %1356 = vmatpush1.bf16.msra.mxu0 0
  %1357 = vmatprep.mubr.bf16.mxu0 0
  %1358 = vmatmul.mubr.bf16.gmra.mrb[0].mxu0 %v872
  %v1359 = vpop.f32.mrb[0].mxu0
  %v1360 = vadd.f32 %v164, %v1359
  %v1361 = vpop.f32.mrb[0].mxu0
  %v1362 = vadd.f32 %v164, %v1361
  %v1363 = vpop.f32.mrb[0].mxu0
  %v1364 = vpop.f32.mrb[0].mxu0
  %1365 = vdwg.mxu0
  %1366 = vmatprep.subr.bf16.mxu0 %v615
  %1367 = vmatpush1.bf16.msra.mxu0 %v614
  %1368 = vmatprep.subr.bf16.mxu0 %v650
  %1369 = vmatpush1.bf16.msra.mxu0 %v649
  %1370 = vmatprep.subr.bf16.mxu0 %v685
  %1371 = vmatpush1.bf16.msra.mxu0 %v684
  %1372 = vmatprep.subr.bf16.mxu0 %v720
  %1373 = vmatpush1.bf16.msra.mxu0 %v719
  %1374 = vmatprep.subr.bf16.mxu0 0
  %1375 = vmatpush1.bf16.msra.mxu0 0
  %1376 = vmatprep.subr.bf16.mxu0 0
  %1377 = vmatpush1.bf16.msra.mxu0 0
  %1378 = vmatprep.subr.bf16.mxu0 0
  %1379 = vmatpush1.bf16.msra.mxu0 0
  %1380 = vmatprep.subr.bf16.mxu0 0
  %1381 = vmatpush1.bf16.msra.mxu0 0
  %1382 = vmatprep.subr.bf16.mxu0 0
  %1383 = vmatpush1.bf16.msra.mxu0 0
  %1384 = vmatprep.subr.bf16.mxu0 0
  %1385 = vmatpush1.bf16.msra.mxu0 0
  %1386 = vmatprep.subr.bf16.mxu0 0
  %1387 = vmatpush1.bf16.msra.mxu0 0
  %1388 = vmatprep.subr.bf16.mxu0 0
  %1389 = vmatpush1.bf16.msra.mxu0 0
  %1390 = vmatprep.subr.bf16.mxu0 0
  %1391 = vmatpush1.bf16.msra.mxu0 0
  %1392 = vmatprep.subr.bf16.mxu0 0
  %1393 = vmatpush1.bf16.msra.mxu0 0
  %1394 = vmatprep.subr.bf16.mxu0 0
  %1395 = vmatpush1.bf16.msra.mxu0 0
  %1396 = vmatprep.subr.bf16.mxu0 0
  %1397 = vmatpush1.bf16.msra.mxu0 0
  %1398 = vmatprep.mubr.bf16.mxu0 0
  %1399 = vmatmul.mubr.bf16.gmra.mrb[0].mxu0 %v872
  %v1400 = vpop.f32.mrb[0].mxu0
  %v1401 = vadd.f32 %v164, %v1400
  %v1402 = vpop.f32.mrb[0].mxu0
  %v1403 = vadd.f32 %v164, %v1402
  %v1404 = vpop.f32.mrb[0].mxu0
  %v1405 = vpop.f32.mrb[0].mxu0
  %1406 = vdwg.mxu0
  %1407 = vmatprep.subr.bf16.mxu0 %v617
  %1408 = vmatpush1.bf16.msra.mxu0 %v616
  %1409 = vmatprep.subr.bf16.mxu0 %v652
  %1410 = vmatpush1.bf16.msra.mxu0 %v651
  %1411 = vmatprep.subr.bf16.mxu0 %v687
  %1412 = vmatpush1.bf16.msra.mxu0 %v686
  %1413 = vmatprep.subr.bf16.mxu0 %v722
  %1414 = vmatpush1.bf16.msra.mxu0 %v721
  %1415 = vmatprep.subr.bf16.mxu0 0
  %1416 = vmatpush1.bf16.msra.mxu0 0
  %1417 = vmatprep.subr.bf16.mxu0 0
  %1418 = vmatpush1.bf16.msra.mxu0 0
  %1419 = vmatprep.subr.bf16.mxu0 0
  %1420 = vmatpush1.bf16.msra.mxu0 0
  %1421 = vmatprep.subr.bf16.mxu0 0
  %1422 = vmatpush1.bf16.msra.mxu0 0
  %1423 = vmatprep.subr.bf16.mxu0 0
  %1424 = vmatpush1.bf16.msra.mxu0 0
  %1425 = vmatprep.subr.bf16.mxu0 0
  %1426 = vmatpush1.bf16.msra.mxu0 0
  %1427 = vmatprep.subr.bf16.mxu0 0
  %1428 = vmatpush1.bf16.msra.mxu0 0
  %1429 = vmatprep.subr.bf16.mxu0 0
  %1430 = vmatpush1.bf16.msra.mxu0 0
  %1431 = vmatprep.subr.bf16.mxu0 0
  %1432 = vmatpush1.bf16.msra.mxu0 0
  %1433 = vmatprep.subr.bf16.mxu0 0
  %1434 = vmatpush1.bf16.msra.mxu0 0
  %1435 = vmatprep.subr.bf16.mxu0 0
  %1436 = vmatpush1.bf16.msra.mxu0 0
  %1437 = vmatprep.subr.bf16.mxu0 0
  %1438 = vmatpush1.bf16.msra.mxu0 0
  %1439 = vmatprep.mubr.bf16.mxu0 0
  %1440 = vmatmul.mubr.bf16.gmra.mrb[0].mxu0 %v872
  %v1441 = vpop.f32.mrb[0].mxu0
  %v1442 = vadd.f32 %v164, %v1441
  %v1443 = vpop.f32.mrb[0].mxu0
  %v1444 = vadd.f32 %v164, %v1443
  %v1445 = vpop.f32.mrb[0].mxu0
  %v1446 = vpop.f32.mrb[0].mxu0
  %1447 = vdwg.mxu0
  %1448 = vmatprep.subr.bf16.mxu0 %v619
  %1449 = vmatpush1.bf16.msra.mxu0 %v618
  %1450 = vmatprep.subr.bf16.mxu0 %v654
  %1451 = vmatpush1.bf16.msra.mxu0 %v653
  %1452 = vmatprep.subr.bf16.mxu0 %v689
  %1453 = vmatpush1.bf16.msra.mxu0 %v688
  %1454 = vmatprep.subr.bf16.mxu0 %v724
  %1455 = vmatpush1.bf16.msra.mxu0 %v723
  %1456 = vmatprep.subr.bf16.mxu0 0
  %1457 = vmatpush1.bf16.msra.mxu0 0
  %1458 = vmatprep.subr.bf16.mxu0 0
  %1459 = vmatpush1.bf16.msra.mxu0 0
  %1460 = vmatprep.subr.bf16.mxu0 0
  %1461 = vmatpush1.bf16.msra.mxu0 0
  %1462 = vmatprep.subr.bf16.mxu0 0
  %1463 = vmatpush1.bf16.msra.mxu0 0
  %1464 = vmatprep.subr.bf16.mxu0 0
  %1465 = vmatpush1.bf16.msra.mxu0 0
  %1466 = vmatprep.subr.bf16.mxu0 0
  %1467 = vmatpush1.bf16.msra.mxu0 0
  %1468 = vmatprep.subr.bf16.mxu0 0
  %1469 = vmatpush1.bf16.msra.mxu0 0
  %1470 = vmatprep.subr.bf16.mxu0 0
  %1471 = vmatpush1.bf16.msra.mxu0 0
  %1472 = vmatprep.subr.bf16.mxu0 0
  %1473 = vmatpush1.bf16.msra.mxu0 0
  %1474 = vmatprep.subr.bf16.mxu0 0
  %1475 = vmatpush1.bf16.msra.mxu0 0
  %1476 = vmatprep.subr.bf16.mxu0 0
  %1477 = vmatpush1.bf16.msra.mxu0 0
  %1478 = vmatprep.subr.bf16.mxu0 0
  %1479 = vmatpush1.bf16.msra.mxu0 0
  %1480 = vmatprep.mubr.bf16.mxu0 0
  %1481 = vmatmul.mubr.bf16.gmra.mrb[0].mxu0 %v872
  %v1482 = vpop.f32.mrb[0].mxu0
  %v1483 = vadd.f32 %v164, %v1482
  %v1484 = vpop.f32.mrb[0].mxu0
  %v1485 = vadd.f32 %v164, %v1484
  %v1486 = vpop.f32.mrb[0].mxu0
  %v1487 = vpop.f32.mrb[0].mxu0
  %1488 = vdwg.mxu0
  %1489 = vmatprep.subr.bf16.mxu0 %v621
  %1490 = vmatpush1.bf16.msra.mxu0 %v620
  %1491 = vmatprep.subr.bf16.mxu0 %v656
  %1492 = vmatpush1.bf16.msra.mxu0 %v655
  %1493 = vmatprep.subr.bf16.mxu0 %v691
  %1494 = vmatpush1.bf16.msra.mxu0 %v690
  %1495 = vmatprep.subr.bf16.mxu0 %v726
  %1496 = vmatpush1.bf16.msra.mxu0 %v725
  %1497 = vmatprep.subr.bf16.mxu0 0
  %1498 = vmatpush1.bf16.msra.mxu0 0
  %1499 = vmatprep.subr.bf16.mxu0 0
  %1500 = vmatpush1.bf16.msra.mxu0 0
  %1501 = vmatprep.subr.bf16.mxu0 0
  %1502 = vmatpush1.bf16.msra.mxu0 0
  %1503 = vmatprep.subr.bf16.mxu0 0
  %1504 = vmatpush1.bf16.msra.mxu0 0
  %1505 = vmatprep.subr.bf16.mxu0 0
  %1506 = vmatpush1.bf16.msra.mxu0 0
  %1507 = vmatprep.subr.bf16.mxu0 0
  %1508 = vmatpush1.bf16.msra.mxu0 0
  %1509 = vmatprep.subr.bf16.mxu0 0
  %1510 = vmatpush1.bf16.msra.mxu0 0
  %1511 = vmatprep.subr.bf16.mxu0 0
  %1512 = vmatpush1.bf16.msra.mxu0 0
  %1513 = vmatprep.subr.bf16.mxu0 0
  %1514 = vmatpush1.bf16.msra.mxu0 0
  %1515 = vmatprep.subr.bf16.mxu0 0
  %1516 = vmatpush1.bf16.msra.mxu0 0
  %1517 = vmatprep.subr.bf16.mxu0 0
  %1518 = vmatpush1.bf16.msra.mxu0 0
  %1519 = vmatprep.subr.bf16.mxu0 0
  %1520 = vmatpush1.bf16.msra.mxu0 0
  %1521 = vmatprep.mubr.bf16.mxu0 0
  %1522 = vmatmul.mubr.bf16.gmra.mrb[0].mxu0 %v872
  %v1523 = vpop.f32.mrb[0].mxu0
  %v1524 = vadd.f32 %v164, %v1523
  %v1525 = vpop.f32.mrb[0].mxu0
  %v1526 = vadd.f32 %v164, %v1525
  %v1527 = vpop.f32.mrb[0].mxu0
  %v1528 = vpop.f32.mrb[0].mxu0
  %1529 = vdwg.mxu0
  %1530 = vmatprep.subr.bf16.mxu0 %v623
  %1531 = vmatpush1.bf16.msra.mxu0 %v622
  %1532 = vmatprep.subr.bf16.mxu0 %v658
  %1533 = vmatpush1.bf16.msra.mxu0 %v657
  %1534 = vmatprep.subr.bf16.mxu0 %v693
  %1535 = vmatpush1.bf16.msra.mxu0 %v692
  %1536 = vmatprep.subr.bf16.mxu0 %v728
  %1537 = vmatpush1.bf16.msra.mxu0 %v727
  %1538 = vmatprep.subr.bf16.mxu0 0
  %1539 = vmatpush1.bf16.msra.mxu0 0
  %1540 = vmatprep.subr.bf16.mxu0 0
  %1541 = vmatpush1.bf16.msra.mxu0 0
  %1542 = vmatprep.subr.bf16.mxu0 0
  %1543 = vmatpush1.bf16.msra.mxu0 0
  %1544 = vmatprep.subr.bf16.mxu0 0
  %1545 = vmatpush1.bf16.msra.mxu0 0
  %1546 = vmatprep.subr.bf16.mxu0 0
  %1547 = vmatpush1.bf16.msra.mxu0 0
  %1548 = vmatprep.subr.bf16.mxu0 0
  %1549 = vmatpush1.bf16.msra.mxu0 0
  %1550 = vmatprep.subr.bf16.mxu0 0
  %1551 = vmatpush1.bf16.msra.mxu0 0
  %1552 = vmatprep.subr.bf16.mxu0 0
  %1553 = vmatpush1.bf16.msra.mxu0 0
  %1554 = vmatprep.subr.bf16.mxu0 0
  %1555 = vmatpush1.bf16.msra.mxu0 0
  %1556 = vmatprep.subr.bf16.mxu0 0
  %1557 = vmatpush1.bf16.msra.mxu0 0
  %1558 = vmatprep.subr.bf16.mxu0 0
  %1559 = vmatpush1.bf16.msra.mxu0 0
  %1560 = vmatprep.subr.bf16.mxu0 0
  %1561 = vmatpush1.bf16.msra.mxu0 0
  %1562 = vmatprep.mubr.bf16.mxu0 0
  %1563 = vmatmul.mubr.bf16.gmra.mrb[0].mxu0 %v872
  %v1564 = vpop.f32.mrb[0].mxu0
  %v1565 = vadd.f32 %v164, %v1564
  %v1566 = vpop.f32.mrb[0].mxu0
  %v1567 = vadd.f32 %v164, %v1566
  %v1568 = vpop.f32.mrb[0].mxu0
  %v1569 = vpop.f32.mrb[0].mxu0
  %1570 = vdwg.mxu0
  %1571 = vmatprep.subr.bf16.mxu0 0
  %1572 = vmatpush1.bf16.msra.mxu0 %v624
  %1573 = vmatprep.subr.bf16.mxu0 0
  %1574 = vmatpush1.bf16.msra.mxu0 %v659
  %1575 = vmatprep.subr.bf16.mxu0 0
  %1576 = vmatpush1.bf16.msra.mxu0 %v694
  %1577 = vmatprep.subr.bf16.mxu0 0
  %1578 = vmatpush1.bf16.msra.mxu0 %v729
  %1579 = vmatprep.subr.bf16.mxu0 0
  %1580 = vmatpush1.bf16.msra.mxu0 0
  %1581 = vmatprep.subr.bf16.mxu0 0
  %1582 = vmatpush1.bf16.msra.mxu0 0
  %1583 = vmatprep.subr.bf16.mxu0 0
  %1584 = vmatpush1.bf16.msra.mxu0 0
  %1585 = vmatprep.subr.bf16.mxu0 0
  %1586 = vmatpush1.bf16.msra.mxu0 0
  %1587 = vmatprep.subr.bf16.mxu0 0
  %1588 = vmatpush1.bf16.msra.mxu0 0
  %1589 = vmatprep.subr.bf16.mxu0 0
  %1590 = vmatpush1.bf16.msra.mxu0 0
  %1591 = vmatprep.subr.bf16.mxu0 0
  %1592 = vmatpush1.bf16.msra.mxu0 0
  %1593 = vmatprep.subr.bf16.mxu0 0
  %1594 = vmatpush1.bf16.msra.mxu0 0
  %1595 = vmatprep.subr.bf16.mxu0 0
  %1596 = vmatpush1.bf16.msra.mxu0 0
  %1597 = vmatprep.subr.bf16.mxu0 0
  %1598 = vmatpush1.bf16.msra.mxu0 0
  %1599 = vmatprep.subr.bf16.mxu0 0
  %1600 = vmatpush1.bf16.msra.mxu0 0
  %1601 = vmatprep.subr.bf16.mxu0 0
  %1602 = vmatpush1.bf16.msra.mxu0 0
  %1603 = vmatprep.mubr.bf16.mxu0 0
  %1604 = vmatmul.mubr.bf16.gmra.mrb[0].mxu0 %v872
  %v1605 = vpop.f32.mrb[0].mxu0
  %v1606 = vadd.f32 %v164, %v1605
  %v1607 = vpop.f32.mrb[0].mxu0
  %v1608 = vpop.f32.mrb[0].mxu0
  %v1609 = vpop.f32.mrb[0].mxu0
  %1610 = vdwg.mxu0
  %v1611 = vtanh.pop %v909
  %v1612 = vtanh.pop %v911
  %v1613 = vtanh.pop %v950
  %v1614 = vtanh.pop %v952
  %v1615 = vtanh.pop %v991
  %v1616 = vtanh.pop %v993
  %v1617 = vtanh.pop %v1032
  %v1618 = vtanh.pop %v1034
  %v1619 = vtanh.pop %v1073
  %v1620 = vtanh.pop %v1075
  %v1621 = vtanh.pop %v1114
  %v1622 = vtanh.pop %v1116
  %v1623 = vtanh.pop %v1155
  %v1624 = vtanh.pop %v1157
  %v1625 = vtanh.pop %v1196
  %v1626 = vtanh.pop %v1198
  %v1627 = vtanh.pop %v1237
  %v1628 = vtanh.pop %v1239
  %v1629 = vtanh.pop %v1278
  %v1630 = vtanh.pop %v1280
  %v1631 = vtanh.pop %v1319
  %v1632 = vtanh.pop %v1321
  %v1633 = vtanh.pop %v1360
  %v1634 = vtanh.pop %v1362
  %v1635 = vtanh.pop %v1401
  %v1636 = vtanh.pop %v1403
  %v1637 = vtanh.pop %v1442
  %v1638 = vtanh.pop %v1444
  %v1639 = vtanh.pop %v1483
  %v1640 = vtanh.pop %v1485
  %v1641 = vtanh.pop %v1524
  %v1642 = vtanh.pop %v1526
  %v1643 = vtanh.pop %v1565
  %v1644 = vtanh.pop %v1567
  %v1645 = vtanh.pop %v1606
  %v1680 = vcombine.low %v1611, %v1612
  %v1681 = vcombine.low %v1613, %v1614
  %v1682 = vcombine.low %v1615, %v1616
  %v1683 = vcombine.low %v1617, %v1618
  %v1684 = vcombine.low %v1619, %v1620
  %v1685 = vcombine.low %v1621, %v1622
  %v1686 = vcombine.low %v1623, %v1624
  %v1687 = vcombine.low %v1625, %v1626
  %v1688 = vcombine.low %v1627, %v1628
  %v1689 = vcombine.low %v1629, %v1630
  %v1690 = vcombine.low %v1631, %v1632
  %v1691 = vcombine.low %v1633, %v1634
  %v1692 = vcombine.low %v1635, %v1636
  %v1693 = vcombine.low %v1637, %v1638
  %v1694 = vcombine.low %v1639, %v1640
  %v1695 = vcombine.low %v1641, %v1642
  %v1696 = vcombine.low %v1643, %v1644
  %1714 = vst [vmem:[%s3] sm:$0xff] %v1680
  %1715 = vst [vmem:[%s3 + $0x8] sm:$0xff] %v1681
  %1716 = vst [vmem:[%s3 + $0x10] sm:$0xff] %v1682
  %1717 = vst [vmem:[%s3 + $0x18] sm:$0xff] %v1683
  %1718 = vst [vmem:[%s3 + $0x20] sm:$0xff] %v1684
  %1719 = vst [vmem:[%s3 + $0x28] sm:$0xff] %v1685
  %1720 = vst [vmem:[%s3 + $0x30] sm:$0xff] %v1686
  %1721 = vst [vmem:[%s3 + $0x38] sm:$0xff] %v1687
  %1722 = vst [vmem:[%s3 + $0x40] sm:$0xff] %v1688
  %1723 = vst [vmem:[%s3 + $0x48] sm:$0xff] %v1689
  %1724 = vst [vmem:[%s3 + $0x50] sm:$0xff] %v1690
  %1725 = vst [vmem:[%s3 + $0x58] sm:$0xff] %v1691
  %1726 = vst [vmem:[%s3 + $0x60] sm:$0xff] %v1692
  %1727 = vst [vmem:[%s3 + $0x68] sm:$0xff] %v1693
  %1728 = vst [vmem:[%s3 + $0x70] sm:$0xff] %v1694
  %1729 = vst [vmem:[%s3 + $0x78] sm:$0xff] %v1695
  %1730 = vst [vmem:[%s3 + $0x80] sm:$0xff] %v1696
  %vm1731 = vcmask 535552
  %1732 = vst.msk [vmem:[%s3 + $0x88] sm:$0xf] %vm1731, %v1645
  // Predicated region
  $region14: #{starter_generator_forward.9} parent=0 // pred_check
    _
  $region15: #{starter_generator_forward.9} parent=0 // pred_check_branch
    %1734 = sbr.rel (0) target = $region17
  $region16: #{starter_generator_forward.9} parent=0 // pred_region
    _
  $region17: #{starter_generator_forward.9} parent=0 // pred_fallthru
    _
  // Predicated region
  $region18: #{starter_generator_forward.9} parent=0 // pred_check
    _
  $region19: #{starter_generator_forward.9} parent=0 // pred_check_branch
    %1736 = sbr.rel (0) target = $region21
  $region20: #{starter_generator_forward.9} parent=0 // pred_region
    _
  $region21: #{starter_generator_forward.9} parent=0 // pred_fallthru
    _

</llo_original>
